<compile_context>
chip_gen: v7x
topology: tpu7x:2x2x1
jax: 0.10.0
libtpu: 0.0.40
codegen_flags: <defaults>
</compile_context>

<pallas_src>
import math

import jax
import jax.numpy as jnp
from jax import lax
from jax.experimental import pallas as pl
from jax.experimental.pallas import tpu as pltpu

VMEM = pltpu.MemorySpace.VMEM
EPS_GEN = 1e-7      # GENConv message epsilon
EPS_LN = 1e-5       # LayerNorm epsilon
MASK_BIAS = -1e9    # additive attention-mask bias


def _mm(a, b):
    """2-D MXU matmul: bf16 operands, f32 accumulation.  astype is a no-op for
    operands already in bf16 (e.g. the host-built one-hot operators)."""
    return jnp.dot(a.astype(jnp.bfloat16), b.astype(jnp.bfloat16),
                   preferred_element_type=jnp.float32)


def gcm_forward(params, x_s, ei_s, ea_s, batch_s, x_t, ei_t, ea_t, batch_t,
                *, num_graphs, num_heads):
    f32, i32, bf16 = jnp.float32, jnp.int32, jnp.bfloat16
    Ns, D = x_s.shape
    Nt = x_t.shape[0]
    Ntot = Ns + Nt
    Es, Et = ea_s.shape[0], ea_t.shape[0]
    Etot = Es + Et
    L = params["gnn_w1"].shape[0]
    H = num_heads
    hd = D // H
    G = num_graphs
    scale = 1.0 / math.sqrt(hd)

    # --- host-side glue: block-diagonal one-hot operators, bf16, DMA'd once ---
    src_all = jnp.concatenate([ei_s[0], ei_t[0] + Ns])
    dst_all = jnp.concatenate([ei_s[1], ei_t[1] + Ns])
    S_all = jax.nn.one_hot(src_all, Ntot, dtype=bf16)          # [Etot, Ntot] gather
    M_all = jax.nn.one_hot(dst_all, Ntot, dtype=bf16).T        # [Ntot, Etot] scatter
    batch_all = jnp.concatenate([batch_s.astype(i32), batch_t.astype(i32) + G])
    B_all = jax.nn.one_hot(batch_all, 2 * G, dtype=bf16).T     # [2G, Ntot] pooling
    x_all = jnp.concatenate([x_s, x_t], axis=0)                # [Ntot, D]
    ea_all = jnp.concatenate([ea_s, ea_t], axis=0)             # [Etot, D]

    bs_col = batch_s.astype(i32).reshape(Ns, 1)
    bs_row = batch_s.astype(i32).reshape(1, Ns)
    bt_col = batch_t.astype(i32).reshape(Nt, 1)
    bt_row = batch_t.astype(i32).reshape(1, Nt)

    def kernel(x_ref, ea_ref, S_ref, M_ref, B_ref,
               bsc_ref, bsr_ref, btc_ref, btr_ref,
               w1_ref, b1_ref, w2_ref, b2_ref,
               wqkv_ref, bqkv_ref, wo_ref, bo_ref, lng_ref, lnb_ref,
               gw_ref, gb_ref, cws_ref, cwt_ref, cb_ref,
               out_ref):

        def attend(q2, k2, v2, bias):
            # Scores / PV inherently contract over hd per head; keep them as
            # small 2-D MXU matmuls (no broadcast copies of activations).
            outs = []
            for h in range(H):
                lo, hi = h * hd, (h + 1) * hd
                s = _mm(q2[:, lo:hi], k2[:, lo:hi].T) * scale + bias
                s = s - jnp.max(s, axis=-1, keepdims=True)
                p = jnp.exp(s)
                p = p * pl.reciprocal(jnp.sum(p, axis=-1, keepdims=True),
                                      approx=True)
                outs.append(_mm(p, v2[:, lo:hi]))
            return jnp.concatenate(outs, axis=-1)                # [Nq, D]

        def layer_fn(l, x):
            # ---- GENConv on BOTH graphs at once (block-diag S / M) ----
            xj = _mm(S_ref[...], x)                              # [Etot, D]
            msg = jnp.maximum(xj + ea_ref[...], 0.0) + EPS_GEN   # > 0
            # Per-destination per-channel softmax aggregation.  Shift by the
            # global per-channel max over edges (shift-invariant per dst);
            # no [N, E, D] materialization.
            p = jnp.exp(msg - jnp.max(msg, axis=0, keepdims=True))
            # fused num/den scatter: one MXU pass -> [Ntot, 2D]
            agg2 = _mm(M_ref[...], jnp.concatenate([p * msg, p], axis=-1))
            den = jnp.maximum(agg2[:, D:], 1e-9)   # zero in-degree -> agg = 0
            agg = agg2[:, :D] * pl.reciprocal(den, approx=True)
            h = agg + x                                          # residual
            h1 = jnp.maximum(_mm(h, w1_ref[l]) + b1_ref[l], 0.0)
            h2 = _mm(h1, w2_ref[l]) + b2_ref[l]                  # [Ntot, D]

            # ---- bidirectional cross attention: fused QKV / output proj ----
            qkv = _mm(h2, wqkv_ref[l]) + bqkv_ref[l]             # [Ntot, 3D]
            q, k, v = qkv[:, :D], qkv[:, D:2 * D], qkv[:, 2 * D:]
            bias_st = jnp.where(bsc_ref[...] != btr_ref[...], MASK_BIAS, 0.0)
            bias_ts = jnp.where(btc_ref[...] != bsr_ref[...], MASK_BIAS, 0.0)
            o_s = attend(q[:Ns], k[Ns:], v[Ns:], bias_st)   # src attends to tgt
            o_t = attend(q[Ns:], k[:Ns], v[:Ns], bias_ts)   # tgt attends to src
            o = _mm(jnp.concatenate([o_s, o_t], axis=0), wo_ref[l]) + bo_ref[l]
            # LayerNorm over the feature (lane) dimension, stacked rows
            mu = jnp.mean(o, axis=-1, keepdims=True)
            var = jnp.mean((o - mu) ** 2, axis=-1, keepdims=True)
            return (o - mu) * lax.rsqrt(var + EPS_LN) * lng_ref[l] + lnb_ref[l]

        # Rolled layer loop: bounds vreg live ranges; stacked [L, ...] weight
        # refs are dynamically indexed along their leading axis.
        x = lax.fori_loop(0, L, layer_fn, x_ref[...])

        # ---- GlobalAttention pooling for both sides at once (block-diag B) ----
        z = _mm(x, gw_ref[...]) + gb_ref[...]                    # [Ntot, 1]
        gate = pl.reciprocal(1.0 + jnp.exp(-z), approx=True)     # Sigmoid gate_nn
        e = jnp.exp(gate)              # gate bounded in (0,1), no max shift needed
        num = _mm(B_ref[...], e * x)                             # [2G, D]
        den = jnp.maximum(_mm(B_ref[...], e), 1e-9)              # [2G, 1]
        pooled = num * pl.reciprocal(den, approx=True)

        # classifier on [pooled_source | pooled_target] + exact softmax
        logits = (_mm(pooled[:G], cws_ref[...]) + _mm(pooled[G:], cwt_ref[...])
                  + cb_ref[...])
        logits = logits - jnp.max(logits, axis=-1, keepdims=True)
        ez = jnp.exp(logits)
        out_ref[...] = ez / jnp.sum(ez, axis=-1, keepdims=True)

    inputs = (
        x_all, ea_all, S_all, M_all, B_all,
        bs_col, bs_row, bt_col, bt_row,
        params["gnn_w1"], params["gnn_b1"], params["gnn_w2"], params["gnn_b2"],
        params["wqkv"], params["bqkv"], params["wo"], params["bo"],
        params["ln_g"], params["ln_b"],
        params["gate_w"], params["gate_b"],
        params["cls_w_s"], params["cls_w_t"], params["cls_b"],
    )

    # Advisory cost estimate for the XLA scheduler.
    flops = L * (2 * Etot * Ntot * D          # gather  S @ x
                 + 2 * Ntot * Etot * 2 * D    # fused num/den scatter
                 + 2 * 2 * Ntot * D * 2 * D   # GENConv MLP
                 + 2 * Ntot * D * 3 * D       # fused QKV projection
                 + 2 * (2 * 2 * Ns * Nt * D)  # scores + PV, both directions
                 + 2 * Ntot * D * D)          # output projection
    flops += 2 * Ntot * D + 2 * (2 * G) * Ntot * D + 2 * 2 * G * D * 2
    trans = L * (Etot * D + 2 * H * Ns * Nt) + 2 * Ntot + 2 * G
    in_bytes = sum(int(a.size) * a.dtype.itemsize for a in inputs)
    bytes_accessed = in_bytes + G * 2 * 4
    # Size-derived VMEM limit (+headroom), capped below v7x's 64 MiB physical.
    vmem_limit = int(min(48 << 20, max(16 << 20, 2 * in_bytes + (8 << 20))))

    return pl.pallas_call(
        kernel,
        out_shape=jax.ShapeDtypeStruct((G, 2), f32),
        in_specs=[pl.BlockSpec(memory_space=VMEM) for _ in inputs],
        out_specs=pl.BlockSpec(memory_space=VMEM),
        compiler_params=pltpu.CompilerParams(vmem_limit_bytes=vmem_limit),
        cost_estimate=pl.CostEstimate(flops=int(flops),
                                      transcendentals=int(trans),
                                      bytes_accessed=int(bytes_accessed)),
    )(*inputs)


# ------------------------------- Param init ----------------------------------
def init_params(key, hidden, num_layers, num_heads):
    del num_heads  # head split happens via lane slicing; weights stay fused

    def lin(k, fan_in, shape):
        return jax.random.normal(k, shape, jnp.float32) / math.sqrt(fan_in)

    keys = jax.random.split(key, 6)
    p = {
        "gnn_w1": lin(keys[0], hidden, (num_layers, hidden, 2 * hidden)),
        "gnn_b1": jnp.zeros((num_layers, 1, 2 * hidden), jnp.float32),
        "gnn_w2": lin(keys[1], 2 * hidden, (num_layers, 2 * hidden, hidden)),
        "gnn_b2": jnp.zeros((num_layers, 1, hidden), jnp.float32),
        # Fused attention projections: wqkv columns are [Wq^T | Wk^T | Wv^T],
        # wo is the (transposed) output projection.
        "wqkv": lin(keys[2], hidden, (num_layers, hidden, 3 * hidden)),
        "bqkv": jnp.zeros((num_layers, 1, 3 * hidden), jnp.float32),
        "wo": lin(keys[3], hidden, (num_layers, hidden, hidden)),
        "bo": jnp.zeros((num_layers, 1, hidden), jnp.float32),
        "ln_g": jnp.ones((num_layers, 1, hidden), jnp.float32),
        "ln_b": jnp.zeros((num_layers, 1, hidden), jnp.float32),
        "gate_w": lin(keys[4], hidden, (hidden, 1)),
        "gate_b": jnp.zeros((1, 1), jnp.float32),
    }
    cls_w = lin(keys[5], 2 * hidden, (2 * hidden, 2))
    p["cls_w_s"] = cls_w[:hidden]
    p["cls_w_t"] = cls_w[hidden:]
    p["cls_b"] = jnp.zeros((1, 2), jnp.float32)
    return p


# --------------------------------- Main ---------------------------------------
if __name__ == "__main__":
    hidden = 128        # module defaults: in_dim = hidden_dim = 128 (lane-dense)
    num_layers = 4
    num_heads = 4
    num_graphs = 2
    Ns, Nt = 16, 16     # nodes in the flattened source / target batches
    Eg = 16             # edges per graph -> 32 edges per side

    key = jax.random.PRNGKey(0)
    (key, kp, kxs, kxt, keas, keat,
     ke1, ke2, ke3, ke4, ke5, ke6, ke7, ke8) = jax.random.split(key, 14)

    params = init_params(kp, hidden, num_layers, num_heads)

    x_source = jax.random.normal(kxs, (Ns, hidden), jnp.float32)
    x_target = jax.random.normal(kxt, (Nt, hidden), jnp.float32)
    edge_attr_source = jax.random.normal(keas, (2 * Eg, hidden), jnp.float32)
    edge_attr_target = jax.random.normal(keat, (2 * Eg, hidden), jnp.float32)

    # edges kept within each graph; graph 0 = first half of nodes, graph 1 = rest
    def make_edges(ka, kb, kc, kd, n0, n1):
        s0 = jax.random.randint(ka, (Eg,), 0, n0)
        d0 = jax.random.randint(kb, (Eg,), 0, n0)
        s1 = jax.random.randint(kc, (Eg,), 0, n1) + n0
        d1 = jax.random.randint(kd, (Eg,), 0, n1) + n0
        return jnp.stack([jnp.concatenate([s0, s1]), jnp.concatenate([d0, d1])])

    edge_index_source = make_edges(ke1, ke2, ke3, ke4, Ns // 2, Ns - Ns // 2)
    edge_index_target = make_edges(ke5, ke6, ke7, ke8, Nt // 2, Nt - Nt // 2)

    batch_source = jnp.concatenate(
        [jnp.zeros(Ns // 2, jnp.int32), jnp.ones(Ns - Ns // 2, jnp.int32)])
    batch_target = jnp.concatenate(
        [jnp.zeros(Nt // 2, jnp.int32), jnp.ones(Nt - Nt // 2, jnp.int32)])

    out = gcm_forward(params,
                      x_source, edge_index_source, edge_attr_source, batch_source,
                      x_target, edge_index_target, edge_attr_target, batch_target,
                      num_graphs=num_graphs, num_heads=num_heads)
    out = jax.block_until_ready(out)

    assert out.shape == (num_graphs, 2)
    assert bool(jnp.all(jnp.isfinite(out)))
    assert bool(jnp.allclose(jnp.sum(out, axis=-1), 1.0, atol=1e-5))
    print("KERNEL_OK")
</pallas_src>

<mosaic_0001>
module attributes {stable_mosaic.version = 11 : i64} {
  func.func @kernel(%arg0: memref<32x128xf32, #tpu.memory_space<vmem>>, %arg1: memref<64x128xf32, #tpu.memory_space<vmem>>, %arg2: memref<64x32xbf16, #tpu.memory_space<vmem>>, %arg3: memref<32x64xbf16, #tpu.memory_space<vmem>>, %arg4: memref<4x32xbf16, #tpu.memory_space<vmem>>, %arg5: memref<16x1xi32, #tpu.memory_space<vmem>>, %arg6: memref<1x16xi32, #tpu.memory_space<vmem>>, %arg7: memref<16x1xi32, #tpu.memory_space<vmem>>, %arg8: memref<1x16xi32, #tpu.memory_space<vmem>>, %arg9: memref<4x128x256xf32, #tpu.memory_space<vmem>>, %arg10: memref<4x1x256xf32, #tpu.memory_space<vmem>>, %arg11: memref<4x256x128xf32, #tpu.memory_space<vmem>>, %arg12: memref<4x1x128xf32, #tpu.memory_space<vmem>>, %arg13: memref<4x128x384xf32, #tpu.memory_space<vmem>>, %arg14: memref<4x1x384xf32, #tpu.memory_space<vmem>>, %arg15: memref<4x128x128xf32, #tpu.memory_space<vmem>>, %arg16: memref<4x1x128xf32, #tpu.memory_space<vmem>>, %arg17: memref<4x1x128xf32, #tpu.memory_space<vmem>>, %arg18: memref<4x1x128xf32, #tpu.memory_space<vmem>>, %arg19: memref<128x1xf32, #tpu.memory_space<vmem>>, %arg20: memref<1x1xf32, #tpu.memory_space<vmem>>, %arg21: memref<128x2xf32, #tpu.memory_space<vmem>>, %arg22: memref<128x2xf32, #tpu.memory_space<vmem>>, %arg23: memref<1x2xf32, #tpu.memory_space<vmem>>, %arg24: memref<2x2xf32, #tpu.memory_space<vmem>>) attributes {dimension_semantics = [], scalar_prefetch = 0 : i64, scratch_operands = 0 : i64, tpu.core_type = #tpu.core_type<tc>} {
    %c0 = arith.constant 0 : index
    %c0_0 = arith.constant 0 : index
    %0 = vector.load %arg0[%c0, %c0_0] : memref<32x128xf32, #tpu.memory_space<vmem>>, vector<32x128xf32>
    %c0_i32 = arith.constant 0 : i32
    %c4_i32 = arith.constant 4 : i32
    %1 = arith.addi %c0_i32, %c4_i32 : i32
    %c1_i32 = arith.constant 1 : i32
    %2 = scf.for %arg25 = %c0_i32 to %1 step %c1_i32 iter_args(%arg26 = %0) -> (vector<32x128xf32>)  : i32 {
      %c0_27 = arith.constant 0 : index
      %c0_28 = arith.constant 0 : index
      %54 = vector.load %arg2[%c0_27, %c0_28] : memref<64x32xbf16, #tpu.memory_space<vmem>>, vector<64x32xbf16>
      %55 = arith.truncf %arg26 : vector<32x128xf32> to vector<32x128xbf16>
      %cst_29 = arith.constant dense<0.000000e+00> : vector<64x128xf32>
      %56 = tpu.matmul %54, %55, %cst_29 {dimension_numbers = #tpu.dot_dimension_numbers<[1], [0], [0], [1], [0, 0, 1, 1], [], []>} : vector<64x32xbf16>, vector<32x128xbf16>, vector<64x128xf32> -> vector<64x128xf32>
      %c0_30 = arith.constant 0 : index
      %c0_31 = arith.constant 0 : index
      %57 = vector.load %arg1[%c0_30, %c0_31] : memref<64x128xf32, #tpu.memory_space<vmem>>, vector<64x128xf32>
      %58 = arith.addf %56, %57 : vector<64x128xf32>
      %cst_32 = arith.constant 0.000000e+00 : f32
      %59 = vector.broadcast %cst_32 : f32 to vector<64x128xf32>
      %60 = arith.maximumf %58, %59 : vector<64x128xf32>
      %cst_33 = arith.constant 1.000000e-07 : f32
      %61 = vector.broadcast %cst_33 : f32 to vector<64x128xf32>
      %62 = arith.addf %60, %61 : vector<64x128xf32>
      %cst_34 = arith.constant dense<0xFF800000> : vector<128xf32>
      %63 = vector.multi_reduction <maximumf>, %62, %cst_34 [0] : vector<64x128xf32> to vector<128xf32>
      %64 = vector.shape_cast %63 : vector<128xf32> to vector<1x128xf32>
      %65 = vector.broadcast %64 : vector<1x128xf32> to vector<64x128xf32>
      %66 = arith.subf %62, %65 : vector<64x128xf32>
      %67 = math.exp %66 : vector<64x128xf32>
      %c0_35 = arith.constant 0 : index
      %c0_36 = arith.constant 0 : index
      %68 = vector.load %arg3[%c0_35, %c0_36] : memref<32x64xbf16, #tpu.memory_space<vmem>>, vector<32x64xbf16>
      %69 = arith.mulf %67, %62 : vector<64x128xf32>
      %70 = tpu.concatenate %69, %67 in 1 : vector<64x128xf32>, vector<64x128xf32> -> vector<64x256xf32>
      %71 = arith.truncf %70 : vector<64x256xf32> to vector<64x256xbf16>
      %cst_37 = arith.constant dense<0.000000e+00> : vector<32x256xf32>
      %72 = tpu.matmul %68, %71, %cst_37 {dimension_numbers = #tpu.dot_dimension_numbers<[1], [0], [0], [1], [0, 0, 1, 1], [], []>} : vector<32x64xbf16>, vector<64x256xbf16>, vector<32x256xf32> -> vector<32x256xf32>
      %73 = vector.extract_strided_slice %72 {offsets = [0, 128], sizes = [32, 128], strides = [1, 1]} : vector<32x256xf32> to vector<32x128xf32>
      %cst_38 = arith.constant 9.99999971E-10 : f32
      %74 = vector.broadcast %cst_38 : f32 to vector<32x128xf32>
      %75 = arith.maximumf %73, %74 : vector<32x128xf32>
      %76 = vector.extract_strided_slice %72 {offsets = [0, 0], sizes = [32, 128], strides = [1, 1]} : vector<32x256xf32> to vector<32x128xf32>
      %77 = tpu.reciprocal %75 {approx = true} : vector<32x128xf32> -> vector<32x128xf32>
      %78 = arith.mulf %76, %77 : vector<32x128xf32>
      %79 = arith.addf %78, %arg26 : vector<32x128xf32>
      %80 = arith.index_cast %arg25 : i32 to index
      %c0_39 = arith.constant 0 : index
      %c0_40 = arith.constant 0 : index
      %81 = vector.load %arg9[%80, %c0_39, %c0_40] : memref<4x128x256xf32, #tpu.memory_space<vmem>>, vector<1x128x256xf32>
      %82 = vector.shape_cast %81 : vector<1x128x256xf32> to vector<128x256xf32>
      %83 = arith.truncf %79 : vector<32x128xf32> to vector<32x128xbf16>
      %84 = arith.truncf %82 : vector<128x256xf32> to vector<128x256xbf16>
      %cst_41 = arith.constant dense<0.000000e+00> : vector<32x256xf32>
      %85 = tpu.matmul %83, %84, %cst_41 {dimension_numbers = #tpu.dot_dimension_numbers<[1], [0], [0], [1], [0, 0, 1, 1], [], []>} : vector<32x128xbf16>, vector<128x256xbf16>, vector<32x256xf32> -> vector<32x256xf32>
      %86 = arith.index_cast %arg25 : i32 to index
      %c0_42 = arith.constant 0 : index
      %c0_43 = arith.constant 0 : index
      %87 = vector.load %arg10[%86, %c0_42, %c0_43] : memref<4x1x256xf32, #tpu.memory_space<vmem>>, vector<1x1x256xf32>
      %88 = vector.shape_cast %87 : vector<1x1x256xf32> to vector<1x256xf32>
      %89 = vector.broadcast %88 : vector<1x256xf32> to vector<32x256xf32>
      %90 = arith.addf %85, %89 : vector<32x256xf32>
      %cst_44 = arith.constant 0.000000e+00 : f32
      %91 = vector.broadcast %cst_44 : f32 to vector<32x256xf32>
      %92 = arith.maximumf %90, %91 : vector<32x256xf32>
      %93 = arith.index_cast %arg25 : i32 to index
      %c0_45 = arith.constant 0 : index
      %c0_46 = arith.constant 0 : index
      %94 = vector.load %arg11[%93, %c0_45, %c0_46] : memref<4x256x128xf32, #tpu.memory_space<vmem>>, vector<1x256x128xf32>
      %95 = vector.shape_cast %94 : vector<1x256x128xf32> to vector<256x128xf32>
      %96 = arith.truncf %92 : vector<32x256xf32> to vector<32x256xbf16>
      %97 = arith.truncf %95 : vector<256x128xf32> to vector<256x128xbf16>
      %cst_47 = arith.constant dense<0.000000e+00> : vector<32x128xf32>
      %98 = tpu.matmul %96, %97, %cst_47 {dimension_numbers = #tpu.dot_dimension_numbers<[1], [0], [0], [1], [0, 0, 1, 1], [], []>} : vector<32x256xbf16>, vector<256x128xbf16>, vector<32x128xf32> -> vector<32x128xf32>
      %99 = arith.index_cast %arg25 : i32 to index
      %c0_48 = arith.constant 0 : index
      %c0_49 = arith.constant 0 : index
      %100 = vector.load %arg12[%99, %c0_48, %c0_49] : memref<4x1x128xf32, #tpu.memory_space<vmem>>, vector<1x1x128xf32>
      %101 = vector.shape_cast %100 : vector<1x1x128xf32> to vector<1x128xf32>
      %102 = vector.broadcast %101 : vector<1x128xf32> to vector<32x128xf32>
      %103 = arith.addf %98, %102 : vector<32x128xf32>
      %104 = arith.index_cast %arg25 : i32 to index
      %c0_50 = arith.constant 0 : index
      %c0_51 = arith.constant 0 : index
      %105 = vector.load %arg13[%104, %c0_50, %c0_51] : memref<4x128x384xf32, #tpu.memory_space<vmem>>, vector<1x128x384xf32>
      %106 = vector.shape_cast %105 : vector<1x128x384xf32> to vector<128x384xf32>
      %107 = arith.truncf %103 : vector<32x128xf32> to vector<32x128xbf16>
      %108 = arith.truncf %106 : vector<128x384xf32> to vector<128x384xbf16>
      %cst_52 = arith.constant dense<0.000000e+00> : vector<32x384xf32>
      %109 = tpu.matmul %107, %108, %cst_52 {dimension_numbers = #tpu.dot_dimension_numbers<[1], [0], [0], [1], [0, 0, 1, 1], [], []>} : vector<32x128xbf16>, vector<128x384xbf16>, vector<32x384xf32> -> vector<32x384xf32>
      %110 = arith.index_cast %arg25 : i32 to index
      %c0_53 = arith.constant 0 : index
      %c0_54 = arith.constant 0 : index
      %111 = vector.load %arg14[%110, %c0_53, %c0_54] : memref<4x1x384xf32, #tpu.memory_space<vmem>>, vector<1x1x384xf32>
      %112 = vector.shape_cast %111 : vector<1x1x384xf32> to vector<1x384xf32>
      %113 = vector.broadcast %112 : vector<1x384xf32> to vector<32x384xf32>
      %114 = arith.addf %109, %113 : vector<32x384xf32>
      %115 = vector.extract_strided_slice %114 {offsets = [0, 0], sizes = [32, 128], strides = [1, 1]} : vector<32x384xf32> to vector<32x128xf32>
      %116 = vector.extract_strided_slice %114 {offsets = [0, 128], sizes = [32, 128], strides = [1, 1]} : vector<32x384xf32> to vector<32x128xf32>
      %117 = vector.extract_strided_slice %114 {offsets = [0, 256], sizes = [32, 128], strides = [1, 1]} : vector<32x384xf32> to vector<32x128xf32>
      %c0_55 = arith.constant 0 : index
      %c0_56 = arith.constant 0 : index
      %118 = vector.load %arg5[%c0_55, %c0_56] : memref<16x1xi32, #tpu.memory_space<vmem>>, vector<16x1xi32>
      %c0_57 = arith.constant 0 : index
      %c0_58 = arith.constant 0 : index
      %119 = vector.load %arg8[%c0_57, %c0_58] : memref<1x16xi32, #tpu.memory_space<vmem>>, vector<1x16xi32>
      %120 = vector.broadcast %118 : vector<16x1xi32> to vector<16x16xi32>
      %121 = vector.broadcast %119 : vector<1x16xi32> to vector<16x16xi32>
      %122 = arith.cmpi ne, %120, %121 : vector<16x16xi32>
      %cst_59 = arith.constant -1.000000e+09 : f32
      %cst_60 = arith.constant 0.000000e+00 : f32
      %123 = vector.broadcast %cst_59 : f32 to vector<16x16xf32>
      %124 = vector.broadcast %cst_60 : f32 to vector<16x16xf32>
      %125 = arith.select %122, %123, %124 : vector<16x16xi1>, vector<16x16xf32>
      %c0_61 = arith.constant 0 : index
      %c0_62 = arith.constant 0 : index
      %126 = vector.load %arg7[%c0_61, %c0_62] : memref<16x1xi32, #tpu.memory_space<vmem>>, vector<16x1xi32>
      %c0_63 = arith.constant 0 : index
      %c0_64 = arith.constant 0 : index
      %127 = vector.load %arg6[%c0_63, %c0_64] : memref<1x16xi32, #tpu.memory_space<vmem>>, vector<1x16xi32>
      %128 = vector.broadcast %126 : vector<16x1xi32> to vector<16x16xi32>
      %129 = vector.broadcast %127 : vector<1x16xi32> to vector<16x16xi32>
      %130 = arith.cmpi ne, %128, %129 : vector<16x16xi32>
      %cst_65 = arith.constant -1.000000e+09 : f32
      %cst_66 = arith.constant 0.000000e+00 : f32
      %131 = vector.broadcast %cst_65 : f32 to vector<16x16xf32>
      %132 = vector.broadcast %cst_66 : f32 to vector<16x16xf32>
      %133 = arith.select %130, %131, %132 : vector<16x16xi1>, vector<16x16xf32>
      %134 = vector.extract_strided_slice %115 {offsets = [0, 0], sizes = [16, 128], strides = [1, 1]} : vector<32x128xf32> to vector<16x128xf32>
      %135 = vector.extract_strided_slice %116 {offsets = [16, 0], sizes = [16, 128], strides = [1, 1]} : vector<32x128xf32> to vector<16x128xf32>
      %136 = vector.extract_strided_slice %117 {offsets = [16, 0], sizes = [16, 128], strides = [1, 1]} : vector<32x128xf32> to vector<16x128xf32>
      %137 = vector.extract_strided_slice %134 {offsets = [0, 0], sizes = [16, 32], strides = [1, 1]} : vector<16x128xf32> to vector<16x32xf32>
      %138 = vector.extract_strided_slice %135 {offsets = [0, 0], sizes = [16, 32], strides = [1, 1]} : vector<16x128xf32> to vector<16x32xf32>
      %139 = tpu.transpose %138, [1, 0] : vector<16x32xf32> -> vector<32x16xf32>
      %140 = arith.truncf %137 : vector<16x32xf32> to vector<16x32xbf16>
      %141 = arith.truncf %139 : vector<32x16xf32> to vector<32x16xbf16>
      %cst_67 = arith.constant dense<0.000000e+00> : vector<16x16xf32>
      %142 = tpu.matmul %140, %141, %cst_67 {dimension_numbers = #tpu.dot_dimension_numbers<[1], [0], [0], [1], [0, 0, 1, 1], [], []>} : vector<16x32xbf16>, vector<32x16xbf16>, vector<16x16xf32> -> vector<16x16xf32>
      %cst_68 = arith.constant 0.176776692 : f32
      %143 = vector.broadcast %cst_68 : f32 to vector<16x16xf32>
      %144 = arith.mulf %142, %143 : vector<16x16xf32>
      %145 = arith.addf %144, %125 : vector<16x16xf32>
      %cst_69 = arith.constant dense<0xFF800000> : vector<16xf32>
      %146 = vector.multi_reduction <maximumf>, %145, %cst_69 [1] : vector<16x16xf32> to vector<16xf32>
      %147 = vector.shape_cast %146 : vector<16xf32> to vector<16x1xf32>
      %148 = vector.broadcast %147 : vector<16x1xf32> to vector<16x16xf32>
      %149 = arith.subf %145, %148 : vector<16x16xf32>
      %150 = math.exp %149 : vector<16x16xf32>
      %cst_70 = arith.constant dense<0.000000e+00> : vector<16xf32>
      %151 = vector.multi_reduction <add>, %150, %cst_70 [1] : vector<16x16xf32> to vector<16xf32>
      %152 = vector.shape_cast %151 : vector<16xf32> to vector<16x1xf32>
      %153 = tpu.reciprocal %152 {approx = true} : vector<16x1xf32> -> vector<16x1xf32>
      %154 = vector.broadcast %153 : vector<16x1xf32> to vector<16x16xf32>
      %155 = arith.mulf %150, %154 : vector<16x16xf32>
      %156 = vector.extract_strided_slice %136 {offsets = [0, 0], sizes = [16, 32], strides = [1, 1]} : vector<16x128xf32> to vector<16x32xf32>
      %157 = arith.truncf %155 : vector<16x16xf32> to vector<16x16xbf16>
      %158 = arith.truncf %156 : vector<16x32xf32> to vector<16x32xbf16>
      %cst_71 = arith.constant dense<0.000000e+00> : vector<16x32xf32>
      %159 = tpu.matmul %157, %158, %cst_71 {dimension_numbers = #tpu.dot_dimension_numbers<[1], [0], [0], [1], [0, 0, 1, 1], [], []>} : vector<16x16xbf16>, vector<16x32xbf16>, vector<16x32xf32> -> vector<16x32xf32>
      %160 = vector.extract_strided_slice %134 {offsets = [0, 32], sizes = [16, 32], strides = [1, 1]} : vector<16x128xf32> to vector<16x32xf32>
      %161 = vector.extract_strided_slice %135 {offsets = [0, 32], sizes = [16, 32], strides = [1, 1]} : vector<16x128xf32> to vector<16x32xf32>
      %162 = tpu.transpose %161, [1, 0] : vector<16x32xf32> -> vector<32x16xf32>
      %163 = arith.truncf %160 : vector<16x32xf32> to vector<16x32xbf16>
      %164 = arith.truncf %162 : vector<32x16xf32> to vector<32x16xbf16>
      %cst_72 = arith.constant dense<0.000000e+00> : vector<16x16xf32>
      %165 = tpu.matmul %163, %164, %cst_72 {dimension_numbers = #tpu.dot_dimension_numbers<[1], [0], [0], [1], [0, 0, 1, 1], [], []>} : vector<16x32xbf16>, vector<32x16xbf16>, vector<16x16xf32> -> vector<16x16xf32>
      %cst_73 = arith.constant 0.176776692 : f32
      %166 = vector.broadcast %cst_73 : f32 to vector<16x16xf32>
      %167 = arith.mulf %165, %166 : vector<16x16xf32>
      %168 = arith.addf %167, %125 : vector<16x16xf32>
      %cst_74 = arith.constant dense<0xFF800000> : vector<16xf32>
      %169 = vector.multi_reduction <maximumf>, %168, %cst_74 [1] : vector<16x16xf32> to vector<16xf32>
      %170 = vector.shape_cast %169 : vector<16xf32> to vector<16x1xf32>
      %171 = vector.broadcast %170 : vector<16x1xf32> to vector<16x16xf32>
      %172 = arith.subf %168, %171 : vector<16x16xf32>
      %173 = math.exp %172 : vector<16x16xf32>
      %cst_75 = arith.constant dense<0.000000e+00> : vector<16xf32>
      %174 = vector.multi_reduction <add>, %173, %cst_75 [1] : vector<16x16xf32> to vector<16xf32>
      %175 = vector.shape_cast %174 : vector<16xf32> to vector<16x1xf32>
      %176 = tpu.reciprocal %175 {approx = true} : vector<16x1xf32> -> vector<16x1xf32>
      %177 = vector.broadcast %176 : vector<16x1xf32> to vector<16x16xf32>
      %178 = arith.mulf %173, %177 : vector<16x16xf32>
      %179 = vector.extract_strided_slice %136 {offsets = [0, 32], sizes = [16, 32], strides = [1, 1]} : vector<16x128xf32> to vector<16x32xf32>
      %180 = arith.truncf %178 : vector<16x16xf32> to vector<16x16xbf16>
      %181 = arith.truncf %179 : vector<16x32xf32> to vector<16x32xbf16>
      %cst_76 = arith.constant dense<0.000000e+00> : vector<16x32xf32>
      %182 = tpu.matmul %180, %181, %cst_76 {dimension_numbers = #tpu.dot_dimension_numbers<[1], [0], [0], [1], [0, 0, 1, 1], [], []>} : vector<16x16xbf16>, vector<16x32xbf16>, vector<16x32xf32> -> vector<16x32xf32>
      %183 = vector.extract_strided_slice %134 {offsets = [0, 64], sizes = [16, 32], strides = [1, 1]} : vector<16x128xf32> to vector<16x32xf32>
      %184 = vector.extract_strided_slice %135 {offsets = [0, 64], sizes = [16, 32], strides = [1, 1]} : vector<16x128xf32> to vector<16x32xf32>
      %185 = tpu.transpose %184, [1, 0] : vector<16x32xf32> -> vector<32x16xf32>
      %186 = arith.truncf %183 : vector<16x32xf32> to vector<16x32xbf16>
      %187 = arith.truncf %185 : vector<32x16xf32> to vector<32x16xbf16>
      %cst_77 = arith.constant dense<0.000000e+00> : vector<16x16xf32>
      %188 = tpu.matmul %186, %187, %cst_77 {dimension_numbers = #tpu.dot_dimension_numbers<[1], [0], [0], [1], [0, 0, 1, 1], [], []>} : vector<16x32xbf16>, vector<32x16xbf16>, vector<16x16xf32> -> vector<16x16xf32>
      %cst_78 = arith.constant 0.176776692 : f32
      %189 = vector.broadcast %cst_78 : f32 to vector<16x16xf32>
      %190 = arith.mulf %188, %189 : vector<16x16xf32>
      %191 = arith.addf %190, %125 : vector<16x16xf32>
      %cst_79 = arith.constant dense<0xFF800000> : vector<16xf32>
      %192 = vector.multi_reduction <maximumf>, %191, %cst_79 [1] : vector<16x16xf32> to vector<16xf32>
      %193 = vector.shape_cast %192 : vector<16xf32> to vector<16x1xf32>
      %194 = vector.broadcast %193 : vector<16x1xf32> to vector<16x16xf32>
      %195 = arith.subf %191, %194 : vector<16x16xf32>
      %196 = math.exp %195 : vector<16x16xf32>
      %cst_80 = arith.constant dense<0.000000e+00> : vector<16xf32>
      %197 = vector.multi_reduction <add>, %196, %cst_80 [1] : vector<16x16xf32> to vector<16xf32>
      %198 = vector.shape_cast %197 : vector<16xf32> to vector<16x1xf32>
      %199 = tpu.reciprocal %198 {approx = true} : vector<16x1xf32> -> vector<16x1xf32>
      %200 = vector.broadcast %199 : vector<16x1xf32> to vector<16x16xf32>
      %201 = arith.mulf %196, %200 : vector<16x16xf32>
      %202 = vector.extract_strided_slice %136 {offsets = [0, 64], sizes = [16, 32], strides = [1, 1]} : vector<16x128xf32> to vector<16x32xf32>
      %203 = arith.truncf %201 : vector<16x16xf32> to vector<16x16xbf16>
      %204 = arith.truncf %202 : vector<16x32xf32> to vector<16x32xbf16>
      %cst_81 = arith.constant dense<0.000000e+00> : vector<16x32xf32>
      %205 = tpu.matmul %203, %204, %cst_81 {dimension_numbers = #tpu.dot_dimension_numbers<[1], [0], [0], [1], [0, 0, 1, 1], [], []>} : vector<16x16xbf16>, vector<16x32xbf16>, vector<16x32xf32> -> vector<16x32xf32>
      %206 = vector.extract_strided_slice %134 {offsets = [0, 96], sizes = [16, 32], strides = [1, 1]} : vector<16x128xf32> to vector<16x32xf32>
      %207 = vector.extract_strided_slice %135 {offsets = [0, 96], sizes = [16, 32], strides = [1, 1]} : vector<16x128xf32> to vector<16x32xf32>
      %208 = tpu.transpose %207, [1, 0] : vector<16x32xf32> -> vector<32x16xf32>
      %209 = arith.truncf %206 : vector<16x32xf32> to vector<16x32xbf16>
      %210 = arith.truncf %208 : vector<32x16xf32> to vector<32x16xbf16>
      %cst_82 = arith.constant dense<0.000000e+00> : vector<16x16xf32>
      %211 = tpu.matmul %209, %210, %cst_82 {dimension_numbers = #tpu.dot_dimension_numbers<[1], [0], [0], [1], [0, 0, 1, 1], [], []>} : vector<16x32xbf16>, vector<32x16xbf16>, vector<16x16xf32> -> vector<16x16xf32>
      %cst_83 = arith.constant 0.176776692 : f32
      %212 = vector.broadcast %cst_83 : f32 to vector<16x16xf32>
      %213 = arith.mulf %211, %212 : vector<16x16xf32>
      %214 = arith.addf %213, %125 : vector<16x16xf32>
      %cst_84 = arith.constant dense<0xFF800000> : vector<16xf32>
      %215 = vector.multi_reduction <maximumf>, %214, %cst_84 [1] : vector<16x16xf32> to vector<16xf32>
      %216 = vector.shape_cast %215 : vector<16xf32> to vector<16x1xf32>
      %217 = vector.broadcast %216 : vector<16x1xf32> to vector<16x16xf32>
      %218 = arith.subf %214, %217 : vector<16x16xf32>
      %219 = math.exp %218 : vector<16x16xf32>
      %cst_85 = arith.constant dense<0.000000e+00> : vector<16xf32>
      %220 = vector.multi_reduction <add>, %219, %cst_85 [1] : vector<16x16xf32> to vector<16xf32>
      %221 = vector.shape_cast %220 : vector<16xf32> to vector<16x1xf32>
      %222 = tpu.reciprocal %221 {approx = true} : vector<16x1xf32> -> vector<16x1xf32>
      %223 = vector.broadcast %222 : vector<16x1xf32> to vector<16x16xf32>
      %224 = arith.mulf %219, %223 : vector<16x16xf32>
      %225 = vector.extract_strided_slice %136 {offsets = [0, 96], sizes = [16, 32], strides = [1, 1]} : vector<16x128xf32> to vector<16x32xf32>
      %226 = arith.truncf %224 : vector<16x16xf32> to vector<16x16xbf16>
      %227 = arith.truncf %225 : vector<16x32xf32> to vector<16x32xbf16>
      %cst_86 = arith.constant dense<0.000000e+00> : vector<16x32xf32>
      %228 = tpu.matmul %226, %227, %cst_86 {dimension_numbers = #tpu.dot_dimension_numbers<[1], [0], [0], [1], [0, 0, 1, 1], [], []>} : vector<16x16xbf16>, vector<16x32xbf16>, vector<16x32xf32> -> vector<16x32xf32>
      %229 = tpu.concatenate %159, %182, %205, %228 in 1 : vector<16x32xf32>, vector<16x32xf32>, vector<16x32xf32>, vector<16x32xf32> -> vector<16x128xf32>
      %230 = vector.extract_strided_slice %115 {offsets = [16, 0], sizes = [16, 128], strides = [1, 1]} : vector<32x128xf32> to vector<16x128xf32>
      %231 = vector.extract_strided_slice %116 {offsets = [0, 0], sizes = [16, 128], strides = [1, 1]} : vector<32x128xf32> to vector<16x128xf32>
      %232 = vector.extract_strided_slice %117 {offsets = [0, 0], sizes = [16, 128], strides = [1, 1]} : vector<32x128xf32> to vector<16x128xf32>
      %233 = vector.extract_strided_slice %230 {offsets = [0, 0], sizes = [16, 32], strides = [1, 1]} : vector<16x128xf32> to vector<16x32xf32>
      %234 = vector.extract_strided_slice %231 {offsets = [0, 0], sizes = [16, 32], strides = [1, 1]} : vector<16x128xf32> to vector<16x32xf32>
      %235 = tpu.transpose %234, [1, 0] : vector<16x32xf32> -> vector<32x16xf32>
      %236 = arith.truncf %233 : vector<16x32xf32> to vector<16x32xbf16>
      %237 = arith.truncf %235 : vector<32x16xf32> to vector<32x16xbf16>
      %cst_87 = arith.constant dense<0.000000e+00> : vector<16x16xf32>
      %238 = tpu.matmul %236, %237, %cst_87 {dimension_numbers = #tpu.dot_dimension_numbers<[1], [0], [0], [1], [0, 0, 1, 1], [], []>} : vector<16x32xbf16>, vector<32x16xbf16>, vector<16x16xf32> -> vector<16x16xf32>
      %cst_88 = arith.constant 0.176776692 : f32
      %239 = vector.broadcast %cst_88 : f32 to vector<16x16xf32>
      %240 = arith.mulf %238, %239 : vector<16x16xf32>
      %241 = arith.addf %240, %133 : vector<16x16xf32>
      %cst_89 = arith.constant dense<0xFF800000> : vector<16xf32>
      %242 = vector.multi_reduction <maximumf>, %241, %cst_89 [1] : vector<16x16xf32> to vector<16xf32>
      %243 = vector.shape_cast %242 : vector<16xf32> to vector<16x1xf32>
      %244 = vector.broadcast %243 : vector<16x1xf32> to vector<16x16xf32>
      %245 = arith.subf %241, %244 : vector<16x16xf32>
      %246 = math.exp %245 : vector<16x16xf32>
      %cst_90 = arith.constant dense<0.000000e+00> : vector<16xf32>
      %247 = vector.multi_reduction <add>, %246, %cst_90 [1] : vector<16x16xf32> to vector<16xf32>
      %248 = vector.shape_cast %247 : vector<16xf32> to vector<16x1xf32>
      %249 = tpu.reciprocal %248 {approx = true} : vector<16x1xf32> -> vector<16x1xf32>
      %250 = vector.broadcast %249 : vector<16x1xf32> to vector<16x16xf32>
      %251 = arith.mulf %246, %250 : vector<16x16xf32>
      %252 = vector.extract_strided_slice %232 {offsets = [0, 0], sizes = [16, 32], strides = [1, 1]} : vector<16x128xf32> to vector<16x32xf32>
      %253 = arith.truncf %251 : vector<16x16xf32> to vector<16x16xbf16>
      %254 = arith.truncf %252 : vector<16x32xf32> to vector<16x32xbf16>
      %cst_91 = arith.constant dense<0.000000e+00> : vector<16x32xf32>
      %255 = tpu.matmul %253, %254, %cst_91 {dimension_numbers = #tpu.dot_dimension_numbers<[1], [0], [0], [1], [0, 0, 1, 1], [], []>} : vector<16x16xbf16>, vector<16x32xbf16>, vector<16x32xf32> -> vector<16x32xf32>
      %256 = vector.extract_strided_slice %230 {offsets = [0, 32], sizes = [16, 32], strides = [1, 1]} : vector<16x128xf32> to vector<16x32xf32>
      %257 = vector.extract_strided_slice %231 {offsets = [0, 32], sizes = [16, 32], strides = [1, 1]} : vector<16x128xf32> to vector<16x32xf32>
      %258 = tpu.transpose %257, [1, 0] : vector<16x32xf32> -> vector<32x16xf32>
      %259 = arith.truncf %256 : vector<16x32xf32> to vector<16x32xbf16>
      %260 = arith.truncf %258 : vector<32x16xf32> to vector<32x16xbf16>
      %cst_92 = arith.constant dense<0.000000e+00> : vector<16x16xf32>
      %261 = tpu.matmul %259, %260, %cst_92 {dimension_numbers = #tpu.dot_dimension_numbers<[1], [0], [0], [1], [0, 0, 1, 1], [], []>} : vector<16x32xbf16>, vector<32x16xbf16>, vector<16x16xf32> -> vector<16x16xf32>
      %cst_93 = arith.constant 0.176776692 : f32
      %262 = vector.broadcast %cst_93 : f32 to vector<16x16xf32>
      %263 = arith.mulf %261, %262 : vector<16x16xf32>
      %264 = arith.addf %263, %133 : vector<16x16xf32>
      %cst_94 = arith.constant dense<0xFF800000> : vector<16xf32>
      %265 = vector.multi_reduction <maximumf>, %264, %cst_94 [1] : vector<16x16xf32> to vector<16xf32>
      %266 = vector.shape_cast %265 : vector<16xf32> to vector<16x1xf32>
      %267 = vector.broadcast %266 : vector<16x1xf32> to vector<16x16xf32>
      %268 = arith.subf %264, %267 : vector<16x16xf32>
      %269 = math.exp %268 : vector<16x16xf32>
      %cst_95 = arith.constant dense<0.000000e+00> : vector<16xf32>
      %270 = vector.multi_reduction <add>, %269, %cst_95 [1] : vector<16x16xf32> to vector<16xf32>
      %271 = vector.shape_cast %270 : vector<16xf32> to vector<16x1xf32>
      %272 = tpu.reciprocal %271 {approx = true} : vector<16x1xf32> -> vector<16x1xf32>
      %273 = vector.broadcast %272 : vector<16x1xf32> to vector<16x16xf32>
      %274 = arith.mulf %269, %273 : vector<16x16xf32>
      %275 = vector.extract_strided_slice %232 {offsets = [0, 32], sizes = [16, 32], strides = [1, 1]} : vector<16x128xf32> to vector<16x32xf32>
      %276 = arith.truncf %274 : vector<16x16xf32> to vector<16x16xbf16>
      %277 = arith.truncf %275 : vector<16x32xf32> to vector<16x32xbf16>
      %cst_96 = arith.constant dense<0.000000e+00> : vector<16x32xf32>
      %278 = tpu.matmul %276, %277, %cst_96 {dimension_numbers = #tpu.dot_dimension_numbers<[1], [0], [0], [1], [0, 0, 1, 1], [], []>} : vector<16x16xbf16>, vector<16x32xbf16>, vector<16x32xf32> -> vector<16x32xf32>
      %279 = vector.extract_strided_slice %230 {offsets = [0, 64], sizes = [16, 32], strides = [1, 1]} : vector<16x128xf32> to vector<16x32xf32>
      %280 = vector.extract_strided_slice %231 {offsets = [0, 64], sizes = [16, 32], strides = [1, 1]} : vector<16x128xf32> to vector<16x32xf32>
      %281 = tpu.transpose %280, [1, 0] : vector<16x32xf32> -> vector<32x16xf32>
      %282 = arith.truncf %279 : vector<16x32xf32> to vector<16x32xbf16>
      %283 = arith.truncf %281 : vector<32x16xf32> to vector<32x16xbf16>
      %cst_97 = arith.constant dense<0.000000e+00> : vector<16x16xf32>
      %284 = tpu.matmul %282, %283, %cst_97 {dimension_numbers = #tpu.dot_dimension_numbers<[1], [0], [0], [1], [0, 0, 1, 1], [], []>} : vector<16x32xbf16>, vector<32x16xbf16>, vector<16x16xf32> -> vector<16x16xf32>
      %cst_98 = arith.constant 0.176776692 : f32
      %285 = vector.broadcast %cst_98 : f32 to vector<16x16xf32>
      %286 = arith.mulf %284, %285 : vector<16x16xf32>
      %287 = arith.addf %286, %133 : vector<16x16xf32>
      %cst_99 = arith.constant dense<0xFF800000> : vector<16xf32>
      %288 = vector.multi_reduction <maximumf>, %287, %cst_99 [1] : vector<16x16xf32> to vector<16xf32>
      %289 = vector.shape_cast %288 : vector<16xf32> to vector<16x1xf32>
      %290 = vector.broadcast %289 : vector<16x1xf32> to vector<16x16xf32>
      %291 = arith.subf %287, %290 : vector<16x16xf32>
      %292 = math.exp %291 : vector<16x16xf32>
      %cst_100 = arith.constant dense<0.000000e+00> : vector<16xf32>
      %293 = vector.multi_reduction <add>, %292, %cst_100 [1] : vector<16x16xf32> to vector<16xf32>
      %294 = vector.shape_cast %293 : vector<16xf32> to vector<16x1xf32>
      %295 = tpu.reciprocal %294 {approx = true} : vector<16x1xf32> -> vector<16x1xf32>
      %296 = vector.broadcast %295 : vector<16x1xf32> to vector<16x16xf32>
      %297 = arith.mulf %292, %296 : vector<16x16xf32>
      %298 = vector.extract_strided_slice %232 {offsets = [0, 64], sizes = [16, 32], strides = [1, 1]} : vector<16x128xf32> to vector<16x32xf32>
      %299 = arith.truncf %297 : vector<16x16xf32> to vector<16x16xbf16>
      %300 = arith.truncf %298 : vector<16x32xf32> to vector<16x32xbf16>
      %cst_101 = arith.constant dense<0.000000e+00> : vector<16x32xf32>
      %301 = tpu.matmul %299, %300, %cst_101 {dimension_numbers = #tpu.dot_dimension_numbers<[1], [0], [0], [1], [0, 0, 1, 1], [], []>} : vector<16x16xbf16>, vector<16x32xbf16>, vector<16x32xf32> -> vector<16x32xf32>
      %302 = vector.extract_strided_slice %230 {offsets = [0, 96], sizes = [16, 32], strides = [1, 1]} : vector<16x128xf32> to vector<16x32xf32>
      %303 = vector.extract_strided_slice %231 {offsets = [0, 96], sizes = [16, 32], strides = [1, 1]} : vector<16x128xf32> to vector<16x32xf32>
      %304 = tpu.transpose %303, [1, 0] : vector<16x32xf32> -> vector<32x16xf32>
      %305 = arith.truncf %302 : vector<16x32xf32> to vector<16x32xbf16>
      %306 = arith.truncf %304 : vector<32x16xf32> to vector<32x16xbf16>
      %cst_102 = arith.constant dense<0.000000e+00> : vector<16x16xf32>
      %307 = tpu.matmul %305, %306, %cst_102 {dimension_numbers = #tpu.dot_dimension_numbers<[1], [0], [0], [1], [0, 0, 1, 1], [], []>} : vector<16x32xbf16>, vector<32x16xbf16>, vector<16x16xf32> -> vector<16x16xf32>
      %cst_103 = arith.constant 0.176776692 : f32
      %308 = vector.broadcast %cst_103 : f32 to vector<16x16xf32>
      %309 = arith.mulf %307, %308 : vector<16x16xf32>
      %310 = arith.addf %309, %133 : vector<16x16xf32>
      %cst_104 = arith.constant dense<0xFF800000> : vector<16xf32>
      %311 = vector.multi_reduction <maximumf>, %310, %cst_104 [1] : vector<16x16xf32> to vector<16xf32>
      %312 = vector.shape_cast %311 : vector<16xf32> to vector<16x1xf32>
      %313 = vector.broadcast %312 : vector<16x1xf32> to vector<16x16xf32>
      %314 = arith.subf %310, %313 : vector<16x16xf32>
      %315 = math.exp %314 : vector<16x16xf32>
      %cst_105 = arith.constant dense<0.000000e+00> : vector<16xf32>
      %316 = vector.multi_reduction <add>, %315, %cst_105 [1] : vector<16x16xf32> to vector<16xf32>
      %317 = vector.shape_cast %316 : vector<16xf32> to vector<16x1xf32>
      %318 = tpu.reciprocal %317 {approx = true} : vector<16x1xf32> -> vector<16x1xf32>
      %319 = vector.broadcast %318 : vector<16x1xf32> to vector<16x16xf32>
      %320 = arith.mulf %315, %319 : vector<16x16xf32>
      %321 = vector.extract_strided_slice %232 {offsets = [0, 96], sizes = [16, 32], strides = [1, 1]} : vector<16x128xf32> to vector<16x32xf32>
      %322 = arith.truncf %320 : vector<16x16xf32> to vector<16x16xbf16>
      %323 = arith.truncf %321 : vector<16x32xf32> to vector<16x32xbf16>
      %cst_106 = arith.constant dense<0.000000e+00> : vector<16x32xf32>
      %324 = tpu.matmul %322, %323, %cst_106 {dimension_numbers = #tpu.dot_dimension_numbers<[1], [0], [0], [1], [0, 0, 1, 1], [], []>} : vector<16x16xbf16>, vector<16x32xbf16>, vector<16x32xf32> -> vector<16x32xf32>
      %325 = tpu.concatenate %255, %278, %301, %324 in 1 : vector<16x32xf32>, vector<16x32xf32>, vector<16x32xf32>, vector<16x32xf32> -> vector<16x128xf32>
      %326 = tpu.concatenate %229, %325 in 0 : vector<16x128xf32>, vector<16x128xf32> -> vector<32x128xf32>
      %327 = arith.index_cast %arg25 : i32 to index
      %c0_107 = arith.constant 0 : index
      %c0_108 = arith.constant 0 : index
      %328 = vector.load %arg15[%327, %c0_107, %c0_108] : memref<4x128x128xf32, #tpu.memory_space<vmem>>, vector<1x128x128xf32>
      %329 = vector.shape_cast %328 : vector<1x128x128xf32> to vector<128x128xf32>
      %330 = arith.truncf %326 : vector<32x128xf32> to vector<32x128xbf16>
      %331 = arith.truncf %329 : vector<128x128xf32> to vector<128x128xbf16>
      %cst_109 = arith.constant dense<0.000000e+00> : vector<32x128xf32>
      %332 = tpu.matmul %330, %331, %cst_109 {dimension_numbers = #tpu.dot_dimension_numbers<[1], [0], [0], [1], [0, 0, 1, 1], [], []>} : vector<32x128xbf16>, vector<128x128xbf16>, vector<32x128xf32> -> vector<32x128xf32>
      %333 = arith.index_cast %arg25 : i32 to index
      %c0_110 = arith.constant 0 : index
      %c0_111 = arith.constant 0 : index
      %334 = vector.load %arg16[%333, %c0_110, %c0_111] : memref<4x1x128xf32, #tpu.memory_space<vmem>>, vector<1x1x128xf32>
      %335 = vector.shape_cast %334 : vector<1x1x128xf32> to vector<1x128xf32>
      %336 = vector.broadcast %335 : vector<1x128xf32> to vector<32x128xf32>
      %337 = arith.addf %332, %336 : vector<32x128xf32>
      %cst_112 = arith.constant dense<0.000000e+00> : vector<32xf32>
      %338 = vector.multi_reduction <add>, %337, %cst_112 [1] : vector<32x128xf32> to vector<32xf32>
      %339 = vector.shape_cast %338 : vector<32xf32> to vector<32x1xf32>
      %cst_113 = arith.constant 1.280000e+02 : f32
      %340 = vector.broadcast %cst_113 : f32 to vector<32x1xf32>
      %341 = arith.divf %339, %340 : vector<32x1xf32>
      %342 = vector.broadcast %341 : vector<32x1xf32> to vector<32x128xf32>
      %343 = arith.subf %337, %342 : vector<32x128xf32>
      %344 = arith.mulf %343, %343 : vector<32x128xf32>
      %cst_114 = arith.constant dense<0.000000e+00> : vector<32xf32>
      %345 = vector.multi_reduction <add>, %344, %cst_114 [1] : vector<32x128xf32> to vector<32xf32>
      %346 = vector.shape_cast %345 : vector<32xf32> to vector<32x1xf32>
      %cst_115 = arith.constant 1.280000e+02 : f32
      %347 = vector.broadcast %cst_115 : f32 to vector<32x1xf32>
      %348 = arith.divf %346, %347 : vector<32x1xf32>
      %349 = vector.broadcast %341 : vector<32x1xf32> to vector<32x128xf32>
      %350 = arith.subf %337, %349 : vector<32x128xf32>
      %cst_116 = arith.constant 9.99999974E-6 : f32
      %351 = vector.broadcast %cst_116 : f32 to vector<32x1xf32>
      %352 = arith.addf %348, %351 : vector<32x1xf32>
      %353 = math.rsqrt %352 : vector<32x1xf32>
      %354 = vector.broadcast %353 : vector<32x1xf32> to vector<32x128xf32>
      %355 = arith.mulf %350, %354 : vector<32x128xf32>
      %356 = arith.index_cast %arg25 : i32 to index
      %c0_117 = arith.constant 0 : index
      %c0_118 = arith.constant 0 : index
      %357 = vector.load %arg17[%356, %c0_117, %c0_118] : memref<4x1x128xf32, #tpu.memory_space<vmem>>, vector<1x1x128xf32>
      %358 = vector.shape_cast %357 : vector<1x1x128xf32> to vector<1x128xf32>
      %359 = vector.broadcast %358 : vector<1x128xf32> to vector<32x128xf32>
      %360 = arith.mulf %355, %359 : vector<32x128xf32>
      %361 = arith.index_cast %arg25 : i32 to index
      %c0_119 = arith.constant 0 : index
      %c0_120 = arith.constant 0 : index
      %362 = vector.load %arg18[%361, %c0_119, %c0_120] : memref<4x1x128xf32, #tpu.memory_space<vmem>>, vector<1x1x128xf32>
      %363 = vector.shape_cast %362 : vector<1x1x128xf32> to vector<1x128xf32>
      %364 = vector.broadcast %363 : vector<1x128xf32> to vector<32x128xf32>
      %365 = arith.addf %360, %364 : vector<32x128xf32>
      scf.yield %365 : vector<32x128xf32>
    }
    %c4_i32_1 = arith.constant 4 : i32
    %c0_2 = arith.constant 0 : index
    %c0_3 = arith.constant 0 : index
    %3 = vector.load %arg19[%c0_2, %c0_3] : memref<128x1xf32, #tpu.memory_space<vmem>>, vector<128x1xf32>
    %4 = arith.truncf %2 : vector<32x128xf32> to vector<32x128xbf16>
    %5 = arith.truncf %3 : vector<128x1xf32> to vector<128x1xbf16>
    %cst = arith.constant dense<0.000000e+00> : vector<32x1xf32>
    %6 = tpu.matmul %4, %5, %cst {dimension_numbers = #tpu.dot_dimension_numbers<[1], [0], [0], [1], [0, 0, 1, 1], [], []>} : vector<32x128xbf16>, vector<128x1xbf16>, vector<32x1xf32> -> vector<32x1xf32>
    %c0_4 = arith.constant 0 : index
    %c0_5 = arith.constant 0 : index
    %7 = vector.load %arg20[%c0_4, %c0_5] : memref<1x1xf32, #tpu.memory_space<vmem>>, vector<1x1xf32>
    %8 = vector.broadcast %7 : vector<1x1xf32> to vector<32x1xf32>
    %9 = arith.addf %6, %8 : vector<32x1xf32>
    %cst_6 = arith.constant 0.000000e+00 : f32
    %10 = vector.broadcast %cst_6 : f32 to vector<32x1xf32>
    %11 = arith.subf %10, %9 : vector<32x1xf32>
    %12 = math.exp %11 : vector<32x1xf32>
    %cst_7 = arith.constant 1.000000e+00 : f32
    %13 = vector.broadcast %cst_7 : f32 to vector<32x1xf32>
    %14 = arith.addf %13, %12 : vector<32x1xf32>
    %15 = tpu.reciprocal %14 {approx = true} : vector<32x1xf32> -> vector<32x1xf32>
    %16 = math.exp %15 : vector<32x1xf32>
    %c0_8 = arith.constant 0 : index
    %c0_9 = arith.constant 0 : index
    %17 = vector.load %arg4[%c0_8, %c0_9] : memref<4x32xbf16, #tpu.memory_space<vmem>>, vector<4x32xbf16>
    %18 = vector.broadcast %16 : vector<32x1xf32> to vector<32x128xf32>
    %19 = arith.mulf %18, %2 : vector<32x128xf32>
    %20 = arith.truncf %19 : vector<32x128xf32> to vector<32x128xbf16>
    %cst_10 = arith.constant dense<0.000000e+00> : vector<4x128xf32>
    %21 = tpu.matmul %17, %20, %cst_10 {dimension_numbers = #tpu.dot_dimension_numbers<[1], [0], [0], [1], [0, 0, 1, 1], [], []>} : vector<4x32xbf16>, vector<32x128xbf16>, vector<4x128xf32> -> vector<4x128xf32>
    %c0_11 = arith.constant 0 : index
    %c0_12 = arith.constant 0 : index
    %22 = vector.load %arg4[%c0_11, %c0_12] : memref<4x32xbf16, #tpu.memory_space<vmem>>, vector<4x32xbf16>
    %23 = arith.truncf %16 : vector<32x1xf32> to vector<32x1xbf16>
    %cst_13 = arith.constant dense<0.000000e+00> : vector<4x1xf32>
    %24 = tpu.matmul %22, %23, %cst_13 {dimension_numbers = #tpu.dot_dimension_numbers<[1], [0], [0], [1], [0, 0, 1, 1], [], []>} : vector<4x32xbf16>, vector<32x1xbf16>, vector<4x1xf32> -> vector<4x1xf32>
    %cst_14 = arith.constant 9.99999971E-10 : f32
    %25 = vector.broadcast %cst_14 : f32 to vector<4x1xf32>
    %26 = arith.maximumf %24, %25 : vector<4x1xf32>
    %27 = tpu.reciprocal %26 {approx = true} : vector<4x1xf32> -> vector<4x1xf32>
    %28 = vector.broadcast %27 : vector<4x1xf32> to vector<4x128xf32>
    %29 = arith.mulf %21, %28 : vector<4x128xf32>
    %30 = vector.extract_strided_slice %29 {offsets = [0, 0], sizes = [2, 128], strides = [1, 1]} : vector<4x128xf32> to vector<2x128xf32>
    %c0_15 = arith.constant 0 : index
    %c0_16 = arith.constant 0 : index
    %31 = vector.load %arg21[%c0_15, %c0_16] : memref<128x2xf32, #tpu.memory_space<vmem>>, vector<128x2xf32>
    %32 = arith.truncf %30 : vector<2x128xf32> to vector<2x128xbf16>
    %33 = arith.truncf %31 : vector<128x2xf32> to vector<128x2xbf16>
    %cst_17 = arith.constant dense<0.000000e+00> : vector<2x2xf32>
    %34 = tpu.matmul %32, %33, %cst_17 {dimension_numbers = #tpu.dot_dimension_numbers<[1], [0], [0], [1], [0, 0, 1, 1], [], []>} : vector<2x128xbf16>, vector<128x2xbf16>, vector<2x2xf32> -> vector<2x2xf32>
    %35 = vector.extract_strided_slice %29 {offsets = [2, 0], sizes = [2, 128], strides = [1, 1]} : vector<4x128xf32> to vector<2x128xf32>
    %c0_18 = arith.constant 0 : index
    %c0_19 = arith.constant 0 : index
    %36 = vector.load %arg22[%c0_18, %c0_19] : memref<128x2xf32, #tpu.memory_space<vmem>>, vector<128x2xf32>
    %37 = arith.truncf %35 : vector<2x128xf32> to vector<2x128xbf16>
    %38 = arith.truncf %36 : vector<128x2xf32> to vector<128x2xbf16>
    %cst_20 = arith.constant dense<0.000000e+00> : vector<2x2xf32>
    %39 = tpu.matmul %37, %38, %cst_20 {dimension_numbers = #tpu.dot_dimension_numbers<[1], [0], [0], [1], [0, 0, 1, 1], [], []>} : vector<2x128xbf16>, vector<128x2xbf16>, vector<2x2xf32> -> vector<2x2xf32>
    %40 = arith.addf %34, %39 : vector<2x2xf32>
    %c0_21 = arith.constant 0 : index
    %c0_22 = arith.constant 0 : index
    %41 = vector.load %arg23[%c0_21, %c0_22] : memref<1x2xf32, #tpu.memory_space<vmem>>, vector<1x2xf32>
    %42 = vector.broadcast %41 : vector<1x2xf32> to vector<2x2xf32>
    %43 = arith.addf %40, %42 : vector<2x2xf32>
    %cst_23 = arith.constant dense<0xFF800000> : vector<2xf32>
    %44 = vector.multi_reduction <maximumf>, %43, %cst_23 [1] : vector<2x2xf32> to vector<2xf32>
    %45 = vector.shape_cast %44 : vector<2xf32> to vector<2x1xf32>
    %46 = vector.broadcast %45 : vector<2x1xf32> to vector<2x2xf32>
    %47 = arith.subf %43, %46 : vector<2x2xf32>
    %48 = math.exp %47 : vector<2x2xf32>
    %cst_24 = arith.constant dense<0.000000e+00> : vector<2xf32>
    %49 = vector.multi_reduction <add>, %48, %cst_24 [1] : vector<2x2xf32> to vector<2xf32>
    %50 = vector.shape_cast %49 : vector<2xf32> to vector<2x1xf32>
    %51 = vector.broadcast %50 : vector<2x1xf32> to vector<2x2xf32>
    %52 = arith.divf %48, %51 : vector<2x2xf32>
    %c0_25 = arith.constant 0 : index
    %c0_26 = arith.constant 0 : index
    %53 = vector.load %arg24[%c0_25, %c0_26] : memref<2x2xf32, #tpu.memory_space<vmem>>, vector<2x2xf32>
    tpu.vector_store %arg24[%c0_25, %c0_26], %52 {strides = array<i32>} : memref<2x2xf32, #tpu.memory_space<vmem>>, vector<2x2xf32>,
    return
  }
}

</mosaic_0001>

<llo_original>
// kernel: tpu_custom_call.1
$region0: #{tpu_custom_call.1}
  #allocation0 [shape = 'u32[]', space=smem, size = 0x4, offset = 0x4, fixed_abs, tag = 'smem constant byte address 0x4 - core index']
  #allocation1 [shape = 'u32[144,128]{1,0:T(1,128)}', space=vmem, size = 0x12000, scoped, tag = 'internal scratch']
  #allocation2 [shape = 'f32[1,1]{1,0:T(1,128)S(1)}', space=vmem, size = 0x200, scoped, tag = 'scoped memory for tpu_custom_call.1']
  %s0 = inlined_call_operand.hbm [shape: f32[32,128], index: 0, kind: input, shape index: {}]
  %s1 = inlined_call_operand.hbm [shape: f32[64,128], index: 1, kind: input, shape index: {}]
  %s2 = inlined_call_operand.vmem [shape: bf16[64,32], index: 2, kind: input, shape index: {}]
  %s3 = inlined_call_operand.vmem [shape: bf16[32,64], index: 3, kind: input, shape index: {}]
  %s4 = inlined_call_operand.hbm [shape: bf16[4,32], index: 4, kind: input, shape index: {}]
  %s5 = inlined_call_operand.vmem [shape: s32[16,1], index: 5, kind: input, shape index: {}]
  %s6 = inlined_call_operand.hbm [shape: s32[1,16], index: 6, kind: input, shape index: {}]
  %s7 = inlined_call_operand.vmem [shape: s32[16,1], index: 7, kind: input, shape index: {}]
  %s8 = inlined_call_operand.hbm [shape: s32[1,16], index: 8, kind: input, shape index: {}]
  %s9 = inlined_call_operand.hbm [shape: f32[4,128,256], index: 9, kind: input, shape index: {}]
  %s10 = inlined_call_operand.hbm [shape: f32[4,1,256], index: 10, kind: input, shape index: {}]
  %s11 = inlined_call_operand.hbm [shape: f32[4,256,128], index: 11, kind: input, shape index: {}]
  %s12 = inlined_call_operand.hbm [shape: f32[4,1,128], index: 12, kind: input, shape index: {}]
  %s13 = inlined_call_operand.hbm [shape: f32[4,128,384], index: 13, kind: input, shape index: {}]
  %s14 = inlined_call_operand.hbm [shape: f32[4,1,384], index: 14, kind: input, shape index: {}]
  %s15 = inlined_call_operand.vmem [shape: f32[4,128,128], index: 15, kind: input, shape index: {}]
  %s16 = inlined_call_operand.hbm [shape: f32[4,1,128], index: 16, kind: input, shape index: {}]
  %s17 = inlined_call_operand.vmem [shape: f32[4,1,128], index: 17, kind: input, shape index: {}]
  %s18 = inlined_call_operand.vmem [shape: f32[4,1,128], index: 18, kind: input, shape index: {}]
  %s19 = inlined_call_operand.vmem [shape: f32[128,1], index: 19, kind: input, shape index: {}]
  %s20 = inlined_call_operand.<no memory space> [shape: f32[1,1], index: 20, kind: input, shape index: {}]
  %s21 = inlined_call_operand.vmem [shape: f32[128,2], index: 21, kind: input, shape index: {}]
  %s22 = inlined_call_operand.vmem [shape: f32[128,2], index: 22, kind: input, shape index: {}]
  %s23 = inlined_call_operand.vmem [shape: f32[1,2], index: 23, kind: input, shape index: {}]
  %s24 = inlined_call_operand.hbm [shape: f32[2,2], index: 24, kind: output, shape index: {}]
  %s25 = sld [smem:[#allocation0]]
  $region161: #{tpu_custom_call.1} parent=0
    _
  %s27 = ssub.s32 1, %s25
  %s28 = scalar_select 0, %s27, %s25
  %v29 = vstv %s20
  %30 = vst [vmem:[#allocation2] sm:$0x1] %v29
  $region1: #{tpu_custom_call.1} parent=0
    #allocation3 [shape = 'u8[16384]{0}', space=vmem, size = 0x4000, scoped, tag = 'input window, operand 0, single buffered']
    #allocation4 [shape = 's32[1]{0}', space=sflag, size = 0x4, scoped, tag = 'scoped memory for tpu_custom_call.1']
    #allocation5 [shape = 's32[1]{0}', space=sflag, size = 0x4, scoped, tag = 'scoped memory for tpu_custom_call.1']
    #allocation6 [shape = 'u8[32768]{0}', space=vmem, size = 0x8000, scoped, tag = 'input window, operand 1, single buffered']
    #allocation7 [shape = 's32[1]{0}', space=sflag, size = 0x4, scoped, tag = 'scoped memory for tpu_custom_call.1']
    #allocation8 [shape = 'u8[1024]{0}', space=vmem, size = 0x400, scoped, tag = 'input window, operand 4, single buffered']
    #allocation9 [shape = 'u8[512]{0}', space=vmem, size = 0x400, scoped, tag = 'input window, operand 6, single buffered']
    #allocation10 [shape = 's32[1]{0}', space=sflag, size = 0x4, scoped, tag = 'scoped memory for tpu_custom_call.1']
    #allocation11 [shape = 'u8[512]{0}', space=vmem, size = 0x400, scoped, tag = 'input window, operand 8, single buffered']
    #allocation12 [shape = 'u8[524288]{0}', space=vmem, size = 0x80000, scoped, tag = 'input window, operand 9, single buffered']
    #allocation13 [shape = 's32[1]{0}', space=sflag, size = 0x4, scoped, tag = 'scoped memory for tpu_custom_call.1']
    #allocation14 [shape = 'u8[4096]{0}', space=vmem, size = 0x1000, scoped, tag = 'input window, operand 10, single buffered']
    #allocation15 [shape = 'u8[524288]{0}', space=vmem, size = 0x80000, scoped, tag = 'input window, operand 11, single buffered']
    #allocation16 [shape = 's32[1]{0}', space=sflag, size = 0x4, scoped, tag = 'scoped memory for tpu_custom_call.1']
    #allocation17 [shape = 'u8[2048]{0}', space=vmem, size = 0x800, scoped, tag = 'input window, operand 12, single buffered']
    #allocation18 [shape = 'u8[786432]{0}', space=vmem, size = 0xc0000, scoped, tag = 'input window, operand 13, single buffered']
    #allocation19 [shape = 's32[1]{0}', space=sflag, size = 0x4, scoped, tag = 'scoped memory for tpu_custom_call.1']
    #allocation20 [shape = 'u8[6144]{0}', space=vmem, size = 0x1800, scoped, tag = 'input window, operand 14, single buffered']
    #allocation21 [shape = 'u8[2048]{0}', space=vmem, size = 0x800, scoped, tag = 'input window, operand 16, single buffered']
    #allocation22 [shape = 's32[1]{0}', space=sflag, size = 0x4, scoped, tag = 'scoped memory for tpu_custom_call.1']
    #allocation23 [shape = 'u8[1024]{0}', space=vmem, size = 0x400, scoped, tag = 'output window, operand 0, single buffered']
    %31 = vsyncpa [#allocation4], 0
    %32 = vsyncpa [#allocation7], 0
    %33 = vsyncpa [#allocation10], 0
    %34 = vsyncpa [#allocation13], 0
    %35 = vsyncpa [#allocation16], 0
    %36 = vsyncpa [#allocation19], 0
    %37 = vsyncpa [#allocation22], 0
    %38 = vsyncpa [#allocation5], 0
    // Predicated region
    $region2: #{tpu_custom_call.1} parent=1 // pred_check
      _
    $region3: #{tpu_custom_call.1} parent=1 // pred_check_branch
      %40 = sbr.rel (0) target = $region5
    $region4: #{tpu_custom_call.1} parent=1 // pred_region
      %s42 = ssub.s32 512, 512
      %43 = vsyncadd [#allocation4], %s42
      %s44 = sshll.u32 [#allocation3], 4
      %s45 = int_to_ptr.vmem [resolvable:$true] %s44
      %50 = dma.hbm_to_vmem [thread:$0]  %s0, 512, %s45, [#allocation4], 128, 128, 8
    $region5: #{tpu_custom_call.1} parent=1 // pred_fallthru
      _
    // Predicated region
    $region6: #{tpu_custom_call.1} parent=1 // pred_check
      _
    $region7: #{tpu_custom_call.1} parent=1 // pred_check_branch
      %52 = sbr.rel (0) target = $region9
    $region8: #{tpu_custom_call.1} parent=1 // pred_region
      %s54 = ssub.s32 1024, 1024
      %55 = vsyncadd [#allocation7], %s54
      %s56 = sshll.u32 [#allocation6], 4
      %s57 = int_to_ptr.vmem [resolvable:$true] %s56
      %62 = dma.hbm_to_vmem [thread:$0]  %s1, 1024, %s57, [#allocation7], 128, 128, 8
    $region9: #{tpu_custom_call.1} parent=1 // pred_fallthru
      _
    // Predicated region
    $region10: #{tpu_custom_call.1} parent=1 // pred_check
      _
    $region11: #{tpu_custom_call.1} parent=1 // pred_check_branch
      %64 = sbr.rel (0) target = $region13
    $region12: #{tpu_custom_call.1} parent=1 // pred_region
      _
    $region13: #{tpu_custom_call.1} parent=1 // pred_fallthru
      _
    // Predicated region
    $region14: #{tpu_custom_call.1} parent=1 // pred_check
      _
    $region15: #{tpu_custom_call.1} parent=1 // pred_check_branch
      %66 = sbr.rel (0) target = $region17
    $region16: #{tpu_custom_call.1} parent=1 // pred_region
      _
    $region17: #{tpu_custom_call.1} parent=1 // pred_fallthru
      _
    // Predicated region
    $region18: #{tpu_custom_call.1} parent=1 // pred_check
      _
    $region19: #{tpu_custom_call.1} parent=1 // pred_check_branch
      %68 = sbr.rel (0) target = $region21
    $region20: #{tpu_custom_call.1} parent=1 // pred_region
      %s70 = ssub.s32 32, 32
      %71 = vsyncadd [#allocation7], %s70
      %s73 = sshll.u32 [#allocation8], 4
      %s74 = int_to_ptr.vmem [resolvable:$true] %s73
      %76 = dma.hbm_to_vmem [thread:$0]  %s4, 32, %s74, [#allocation7]
    $region21: #{tpu_custom_call.1} parent=1 // pred_fallthru
      _
    // Predicated region
    $region22: #{tpu_custom_call.1} parent=1 // pred_check
      _
    $region23: #{tpu_custom_call.1} parent=1 // pred_check_branch
      %78 = sbr.rel (0) target = $region25
    $region24: #{tpu_custom_call.1} parent=1 // pred_region
      _
    $region25: #{tpu_custom_call.1} parent=1 // pred_fallthru
      _
    // Predicated region
    $region26: #{tpu_custom_call.1} parent=1 // pred_check
      _
    $region27: #{tpu_custom_call.1} parent=1 // pred_check_branch
      %80 = sbr.rel (0) target = $region29
    $region28: #{tpu_custom_call.1} parent=1 // pred_region
      %s82 = ssub.s32 16, 16
      %83 = vsyncadd [#allocation10], %s82
      %s85 = sshll.u32 [#allocation9], 4
      %s86 = int_to_ptr.vmem [resolvable:$true] %s85
      %88 = dma.hbm_to_vmem [thread:$0]  %s6, 16, %s86, [#allocation10]
    $region29: #{tpu_custom_call.1} parent=1 // pred_fallthru
      _
    // Predicated region
    $region30: #{tpu_custom_call.1} parent=1 // pred_check
      _
    $region31: #{tpu_custom_call.1} parent=1 // pred_check_branch
      %90 = sbr.rel (0) target = $region33
    $region32: #{tpu_custom_call.1} parent=1 // pred_region
      _
    $region33: #{tpu_custom_call.1} parent=1 // pred_fallthru
      _
    // Predicated region
    $region34: #{tpu_custom_call.1} parent=1 // pred_check
      _
    $region35: #{tpu_custom_call.1} parent=1 // pred_check_branch
      %92 = sbr.rel (0) target = $region37
    $region36: #{tpu_custom_call.1} parent=1 // pred_region
      %s94 = ssub.s32 16, 16
      %95 = vsyncadd [#allocation10], %s94
      %s97 = sshll.u32 [#allocation11], 4
      %s98 = int_to_ptr.vmem [resolvable:$true] %s97
      %100 = dma.hbm_to_vmem [thread:$0]  %s8, 16, %s98, [#allocation10]
    $region37: #{tpu_custom_call.1} parent=1 // pred_fallthru
      _
    // Predicated region
    $region38: #{tpu_custom_call.1} parent=1 // pred_check
      _
    $region39: #{tpu_custom_call.1} parent=1 // pred_check_branch
      %102 = sbr.rel (0) target = $region41
    $region40: #{tpu_custom_call.1} parent=1 // pred_region
      %s104 = ssub.s32 16384, 16384
      %105 = vsyncadd [#allocation13], %s104
      %s106 = sshll.u32 [#allocation12], 4
      %s107 = int_to_ptr.vmem [resolvable:$true] %s106
      %112 = dma.hbm_to_vmem [thread:$0]  %s9, 16384, %s107, [#allocation13], 256, 256, 16
    $region41: #{tpu_custom_call.1} parent=1 // pred_fallthru
      _
    // Predicated region
    $region42: #{tpu_custom_call.1} parent=1 // pred_check
      _
    $region43: #{tpu_custom_call.1} parent=1 // pred_check_branch
      %114 = sbr.rel (0) target = $region45
    $region44: #{tpu_custom_call.1} parent=1 // pred_region
      %s116 = ssub.s32 128, 128
      %117 = vsyncadd [#allocation13], %s116
      %s118 = sshll.u32 [#allocation14], 4
      %s119 = int_to_ptr.vmem [resolvable:$true] %s118
      %124 = dma.hbm_to_vmem [thread:$0]  %s10, 128, %s119, [#allocation13], 32, 32, 2
    $region45: #{tpu_custom_call.1} parent=1 // pred_fallthru
      _
    // Predicated region
    $region46: #{tpu_custom_call.1} parent=1 // pred_check
      _
    $region47: #{tpu_custom_call.1} parent=1 // pred_check_branch
      %126 = sbr.rel (0) target = $region49
    $region48: #{tpu_custom_call.1} parent=1 // pred_region
      %s128 = ssub.s32 16384, 16384
      %129 = vsyncadd [#allocation16], %s128
      %s130 = sshll.u32 [#allocation15], 4
      %s131 = int_to_ptr.vmem [resolvable:$true] %s130
      %136 = dma.hbm_to_vmem [thread:$0]  %s11, 16384, %s131, [#allocation16], 128, 128, 8
    $region49: #{tpu_custom_call.1} parent=1 // pred_fallthru
      _
    // Predicated region
    $region50: #{tpu_custom_call.1} parent=1 // pred_check
      _
    $region51: #{tpu_custom_call.1} parent=1 // pred_check_branch
      %138 = sbr.rel (0) target = $region53
    $region52: #{tpu_custom_call.1} parent=1 // pred_region
      %s140 = ssub.s32 64, 64
      %141 = vsyncadd [#allocation16], %s140
      %s142 = sshll.u32 [#allocation17], 4
      %s143 = int_to_ptr.vmem [resolvable:$true] %s142
      %148 = dma.hbm_to_vmem [thread:$0]  %s12, 64, %s143, [#allocation16], 16, 16, 1
    $region53: #{tpu_custom_call.1} parent=1 // pred_fallthru
      _
    // Predicated region
    $region54: #{tpu_custom_call.1} parent=1 // pred_check
      _
    $region55: #{tpu_custom_call.1} parent=1 // pred_check_branch
      %150 = sbr.rel (0) target = $region57
    $region56: #{tpu_custom_call.1} parent=1 // pred_region
      %s152 = ssub.s32 24576, 24576
      %153 = vsyncadd [#allocation19], %s152
      %s154 = sshll.u32 [#allocation18], 4
      %s155 = int_to_ptr.vmem [resolvable:$true] %s154
      %160 = dma.hbm_to_vmem [thread:$0]  %s13, 24576, %s155, [#allocation19], 384, 384, 24
    $region57: #{tpu_custom_call.1} parent=1 // pred_fallthru
      _
    // Predicated region
    $region58: #{tpu_custom_call.1} parent=1 // pred_check
      _
    $region59: #{tpu_custom_call.1} parent=1 // pred_check_branch
      %162 = sbr.rel (0) target = $region61
    $region60: #{tpu_custom_call.1} parent=1 // pred_region
      %s164 = ssub.s32 192, 192
      %165 = vsyncadd [#allocation19], %s164
      %s166 = sshll.u32 [#allocation20], 4
      %s167 = int_to_ptr.vmem [resolvable:$true] %s166
      %172 = dma.hbm_to_vmem [thread:$0]  %s14, 192, %s167, [#allocation19], 48, 48, 3
    $region61: #{tpu_custom_call.1} parent=1 // pred_fallthru
      _
    // Predicated region
    $region62: #{tpu_custom_call.1} parent=1 // pred_check
      _
    $region63: #{tpu_custom_call.1} parent=1 // pred_check_branch
      %174 = sbr.rel (0) target = $region65
    $region64: #{tpu_custom_call.1} parent=1 // pred_region
      _
    $region65: #{tpu_custom_call.1} parent=1 // pred_fallthru
      _
    // Predicated region
    $region66: #{tpu_custom_call.1} parent=1 // pred_check
      _
    $region67: #{tpu_custom_call.1} parent=1 // pred_check_branch
      %176 = sbr.rel (0) target = $region69
    $region68: #{tpu_custom_call.1} parent=1 // pred_region
      %s178 = ssub.s32 64, 64
      %179 = vsyncadd [#allocation22], %s178
      %s180 = sshll.u32 [#allocation21], 4
      %s181 = int_to_ptr.vmem [resolvable:$true] %s180
      %186 = dma.hbm_to_vmem [thread:$0]  %s16, 64, %s181, [#allocation22], 16, 16, 1
    $region69: #{tpu_custom_call.1} parent=1 // pred_fallthru
      _
    // Predicated region
    $region70: #{tpu_custom_call.1} parent=1 // pred_check
      _
    $region71: #{tpu_custom_call.1} parent=1 // pred_check_branch
      %188 = sbr.rel (0) target = $region73
    $region72: #{tpu_custom_call.1} parent=1 // pred_region
      _
    $region73: #{tpu_custom_call.1} parent=1 // pred_fallthru
      _
    // Predicated region
    $region74: #{tpu_custom_call.1} parent=1 // pred_check
      _
    $region75: #{tpu_custom_call.1} parent=1 // pred_check_branch
      %190 = sbr.rel (0) target = $region77
    $region76: #{tpu_custom_call.1} parent=1 // pred_region
      _
    $region77: #{tpu_custom_call.1} parent=1 // pred_fallthru
      _
    // Predicated region
    $region78: #{tpu_custom_call.1} parent=1 // pred_check
      _
    $region79: #{tpu_custom_call.1} parent=1 // pred_check_branch
      %192 = sbr.rel (0) target = $region81
    $region80: #{tpu_custom_call.1} parent=1 // pred_region
      _
    $region81: #{tpu_custom_call.1} parent=1 // pred_fallthru
      _
    // Predicated region
    $region82: #{tpu_custom_call.1} parent=1 // pred_check
      _
    $region83: #{tpu_custom_call.1} parent=1 // pred_check_branch
      %194 = sbr.rel (0) target = $region85
    $region84: #{tpu_custom_call.1} parent=1 // pred_region
      _
    $region85: #{tpu_custom_call.1} parent=1 // pred_fallthru
      _
    // Predicated region
    $region86: #{tpu_custom_call.1} parent=1 // pred_check
      _
    $region87: #{tpu_custom_call.1} parent=1 // pred_check_branch
      %196 = sbr.rel (0) target = $region89
    $region88: #{tpu_custom_call.1} parent=1 // pred_region
      _
    $region89: #{tpu_custom_call.1} parent=1 // pred_fallthru
      _
    // Predicated region
    $region90: #{tpu_custom_call.1} parent=1 // pred_check
      _
    $region91: #{tpu_custom_call.1} parent=1 // pred_check_branch
      %198 = sbr.rel (0) target = $region93
    $region92: #{tpu_custom_call.1} parent=1 // pred_region
      _
    $region93: #{tpu_custom_call.1} parent=1 // pred_fallthru
      _
    // Predicated region
    $region94: #{tpu_custom_call.1} parent=1 // pred_check
      _
    $region95: #{tpu_custom_call.1} parent=1 // pred_check_branch
      %200 = sbr.rel (0) target = $region97
    $region96: #{tpu_custom_call.1} parent=1 // pred_region
      _
    $region97: #{tpu_custom_call.1} parent=1 // pred_fallthru
      _
    // Predicated region
    $region98: #{tpu_custom_call.1} parent=1 // pred_check
      _
    $region99: #{tpu_custom_call.1} parent=1 // pred_check_branch
      %202 = sbr.rel (0) target = $region101
    $region100: #{tpu_custom_call.1} parent=1 // pred_region
      %203 = dma.done [#allocation4], 512
    $region101: #{tpu_custom_call.1} parent=1 // pred_fallthru
      _
    // Predicated region
    $region102: #{tpu_custom_call.1} parent=1 // pred_check
      _
    $region103: #{tpu_custom_call.1} parent=1 // pred_check_branch
      %205 = sbr.rel (0) target = $region105
    $region104: #{tpu_custom_call.1} parent=1 // pred_region
      %206 = dma.done [#allocation7], 1024
    $region105: #{tpu_custom_call.1} parent=1 // pred_fallthru
      _
    // Predicated region
    $region106: #{tpu_custom_call.1} parent=1 // pred_check
      _
    $region107: #{tpu_custom_call.1} parent=1 // pred_check_branch
      %208 = sbr.rel (0) target = $region109
    $region108: #{tpu_custom_call.1} parent=1 // pred_region
      %209 = dma.done [#allocation7], 32
    $region109: #{tpu_custom_call.1} parent=1 // pred_fallthru
      _
    // Predicated region
    $region110: #{tpu_custom_call.1} parent=1 // pred_check
      _
    $region111: #{tpu_custom_call.1} parent=1 // pred_check_branch
      %211 = sbr.rel (0) target = $region113
    $region112: #{tpu_custom_call.1} parent=1 // pred_region
      %212 = dma.done [#allocation10], 16
    $region113: #{tpu_custom_call.1} parent=1 // pred_fallthru
      _
    // Predicated region
    $region114: #{tpu_custom_call.1} parent=1 // pred_check
      _
    $region115: #{tpu_custom_call.1} parent=1 // pred_check_branch
      %214 = sbr.rel (0) target = $region117
    $region116: #{tpu_custom_call.1} parent=1 // pred_region
      %215 = dma.done [#allocation10], 16
    $region117: #{tpu_custom_call.1} parent=1 // pred_fallthru
      _
    // Predicated region
    $region118: #{tpu_custom_call.1} parent=1 // pred_check
      _
    $region119: #{tpu_custom_call.1} parent=1 // pred_check_branch
      %217 = sbr.rel (0) target = $region121
    $region120: #{tpu_custom_call.1} parent=1 // pred_region
      %218 = dma.done [#allocation13], 16384
    $region121: #{tpu_custom_call.1} parent=1 // pred_fallthru
      _
    // Predicated region
    $region122: #{tpu_custom_call.1} parent=1 // pred_check
      _
    $region123: #{tpu_custom_call.1} parent=1 // pred_check_branch
      %220 = sbr.rel (0) target = $region125
    $region124: #{tpu_custom_call.1} parent=1 // pred_region
      %221 = dma.done [#allocation13], 128
    $region125: #{tpu_custom_call.1} parent=1 // pred_fallthru
      _
    // Predicated region
    $region126: #{tpu_custom_call.1} parent=1 // pred_check
      _
    $region127: #{tpu_custom_call.1} parent=1 // pred_check_branch
      %223 = sbr.rel (0) target = $region129
    $region128: #{tpu_custom_call.1} parent=1 // pred_region
      %224 = dma.done [#allocation16], 16384
    $region129: #{tpu_custom_call.1} parent=1 // pred_fallthru
      _
    // Predicated region
    $region130: #{tpu_custom_call.1} parent=1 // pred_check
      _
    $region131: #{tpu_custom_call.1} parent=1 // pred_check_branch
      %226 = sbr.rel (0) target = $region133
    $region132: #{tpu_custom_call.1} parent=1 // pred_region
      %227 = dma.done [#allocation16], 64
    $region133: #{tpu_custom_call.1} parent=1 // pred_fallthru
      _
    // Predicated region
    $region134: #{tpu_custom_call.1} parent=1 // pred_check
      _
    $region135: #{tpu_custom_call.1} parent=1 // pred_check_branch
      %229 = sbr.rel (0) target = $region137
    $region136: #{tpu_custom_call.1} parent=1 // pred_region
      %230 = dma.done [#allocation19], 24576
    $region137: #{tpu_custom_call.1} parent=1 // pred_fallthru
      _
    // Predicated region
    $region138: #{tpu_custom_call.1} parent=1 // pred_check
      _
    $region139: #{tpu_custom_call.1} parent=1 // pred_check_branch
      %232 = sbr.rel (0) target = $region141
    $region140: #{tpu_custom_call.1} parent=1 // pred_region
      %233 = dma.done [#allocation19], 192
    $region141: #{tpu_custom_call.1} parent=1 // pred_fallthru
      _
    // Predicated region
    $region142: #{tpu_custom_call.1} parent=1 // pred_check
      _
    $region143: #{tpu_custom_call.1} parent=1 // pred_check_branch
      %235 = sbr.rel (0) target = $region145
    $region144: #{tpu_custom_call.1} parent=1 // pred_region
      %236 = dma.done [#allocation22], 64
    $region145: #{tpu_custom_call.1} parent=1 // pred_fallthru
      _
    %v238 = vld [vmem:[#allocation3] sm:$0xff]
    %v239 = vld [vmem:[#allocation3 + $0x8] sm:$0xff]
    %v240 = vld [vmem:[#allocation3 + $0x10] sm:$0xff]
    %v241 = vld [vmem:[#allocation3 + $0x18] sm:$0xff]
    loop: start=0, step=1, limit=4
    $region146: #{tpu_custom_call.1} parent=1 // loop_pre_header
      _
    $region147: #{tpu_custom_call.1} parent=1 // loop_header
      %s243 = sphi 0, %s247
      %p244 = scmp.ge.s32.totalorder %s243, 4
      %v248 = vphi %v238, %v2480
      %v249 = vphi %v239, %v2481
      %v250 = vphi %v240, %v2482
      %v251 = vphi %v241, %v2483
    $region148: #{tpu_custom_call.1} parent=1 // loop_header_branch
      %246 = sbr.rel (%p244) target = $region152
    $region149: #{tpu_custom_call.1} parent=1 // loop_body
      %v252 = vld [vmem:[%s2] sm:$0xf]
      %v253 = vld [vmem:[%s2 + $0x4] sm:$0xf]
      %v254 = vld [vmem:[%s2 + $0x8] sm:$0xf]
      %v255 = vld [vmem:[%s2 + $0xc] sm:$0xf]
      %v256 = vld [vmem:[%s2 + $0x10] sm:$0xf]
      %v257 = vld [vmem:[%s2 + $0x14] sm:$0xf]
      %v258 = vld [vmem:[%s2 + $0x18] sm:$0xf]
      %v259 = vld [vmem:[%s2 + $0x1c] sm:$0xf]
      %v260 = vpack.c.bf16 %v249, %v248
      %v261 = vpack.c.bf16 %v251, %v250
      %v262 = vld [vmem:[#allocation6] sm:$0xff]
      %v263 = vld [vmem:[#allocation6 + $0x8] sm:$0xff]
      %v264 = vld [vmem:[#allocation6 + $0x10] sm:$0xff]
      %v265 = vld [vmem:[#allocation6 + $0x18] sm:$0xff]
      %v266 = vld [vmem:[#allocation6 + $0x20] sm:$0xff]
      %v267 = vld [vmem:[#allocation6 + $0x28] sm:$0xff]
      %v268 = vld [vmem:[#allocation6 + $0x30] sm:$0xff]
      %v269 = vld [vmem:[#allocation6 + $0x38] sm:$0xff]
      %v278 = vunpack.c.l.b16 %v252
      %v279 = vunpack.c.l.b16 %v253
      %v280 = vunpack.c.l.b16 %v254
      %v281 = vunpack.c.l.b16 %v255
      %v282 = vunpack.c.l.b16 %v256
      %v283 = vunpack.c.l.b16 %v257
      %v284 = vunpack.c.l.b16 %v258
      %v285 = vunpack.c.l.b16 %v259
      %v286 = vpack.c.b16 %v279, %v278
      %v287 = vpack.c.b16 %v281, %v280
      %v288 = vpack.c.b16 %v283, %v282
      %v289 = vpack.c.b16 %v285, %v284
      %vm290 = vcmask 261120
      %v292 = vsel %vm290, %v286, 0
      %v295 = vsel %vm290, %v287, 0
      %v298 = vsel %vm290, %v288, 0
      %v301 = vsel %vm290, %v289, 0
      %303 = vmatprep.subr.bf16.mxu0 0
      %304 = vmatpush1.bf16.msra.mxu0 %v260
      %305 = vmatprep.subr.bf16.mxu0 0
      %306 = vmatpush1.bf16.msra.mxu0 %v261
      %307 = vmatprep.subr.bf16.mxu0 0
      %308 = vmatpush1.bf16.msra.mxu0 0
      %309 = vmatprep.subr.bf16.mxu0 0
      %310 = vmatpush1.bf16.msra.mxu0 0
      %311 = vmatprep.subr.bf16.mxu0 0
      %312 = vmatpush1.bf16.msra.mxu0 0
      %313 = vmatprep.subr.bf16.mxu0 0
      %314 = vmatpush1.bf16.msra.mxu0 0
      %315 = vmatprep.subr.bf16.mxu0 0
      %316 = vmatpush1.bf16.msra.mxu0 0
      %317 = vmatprep.subr.bf16.mxu0 0
      %318 = vmatpush1.bf16.msra.mxu0 0
      %319 = vmatprep.subr.bf16.mxu0 0
      %320 = vmatpush1.bf16.msra.mxu0 0
      %321 = vmatprep.subr.bf16.mxu0 0
      %322 = vmatpush1.bf16.msra.mxu0 0
      %323 = vmatprep.subr.bf16.mxu0 0
      %324 = vmatpush1.bf16.msra.mxu0 0
      %325 = vmatprep.subr.bf16.mxu0 0
      %326 = vmatpush1.bf16.msra.mxu0 0
      %327 = vmatprep.subr.bf16.mxu0 0
      %328 = vmatpush1.bf16.msra.mxu0 0
      %329 = vmatprep.subr.bf16.mxu0 0
      %330 = vmatpush1.bf16.msra.mxu0 0
      %331 = vmatprep.subr.bf16.mxu0 0
      %332 = vmatpush1.bf16.msra.mxu0 0
      %333 = vmatprep.subr.bf16.mxu0 0
      %334 = vmatpush1.bf16.msra.mxu0 0
      %335 = vmatprep.mubr.bf16.mxu0 0
      %336 = vmatmul.mubr.bf16.gmra.mrb[0].mxu0 %v292
      %v337 = vpop.f32.mrb[0].mxu0
      %v338 = vadd.f32 %v262, %v337
      %v339 = vpop.f32.mrb[0].mxu0
      %v340 = vpop.f32.mrb[0].mxu0
      %v341 = vadd.f32 %v263, %v340
      %v342 = vpop.f32.mrb[0].mxu0
      %343 = vmatprep.mubr.bf16.mxu0 0
      %344 = vmatmul.mubr.bf16.gmra.mrb[0].mxu0 %v295
      %v345 = vpop.f32.mrb[0].mxu0
      %v346 = vadd.f32 %v264, %v345
      %v347 = vpop.f32.mrb[0].mxu0
      %v348 = vpop.f32.mrb[0].mxu0
      %v349 = vadd.f32 %v265, %v348
      %v350 = vpop.f32.mrb[0].mxu0
      %351 = vmatprep.mubr.bf16.mxu0 0
      %352 = vmatmul.mubr.bf16.gmra.mrb[0].mxu0 %v298
      %v353 = vpop.f32.mrb[0].mxu0
      %v354 = vadd.f32 %v266, %v353
      %v355 = vpop.f32.mrb[0].mxu0
      %v356 = vpop.f32.mrb[0].mxu0
      %v357 = vadd.f32 %v267, %v356
      %v358 = vpop.f32.mrb[0].mxu0
      %359 = vmatprep.mubr.bf16.mxu0 0
      %360 = vmatmul.mubr.bf16.gmra.mrb[0].mxu0 %v301
      %v361 = vpop.f32.mrb[0].mxu0
      %v362 = vadd.f32 %v268, %v361
      %v363 = vpop.f32.mrb[0].mxu0
      %v364 = vpop.f32.mrb[0].mxu0
      %v365 = vadd.f32 %v269, %v364
      %v366 = vpop.f32.mrb[0].mxu0
      %367 = vdwg.mxu0
      %v368 = vmax.f32 %v338, 0.0
      %v369 = vmax.f32 %v341, 0.0
      %v370 = vmax.f32 %v346, 0.0
      %v371 = vmax.f32 %v349, 0.0
      %v372 = vmax.f32 %v354, 0.0
      %v373 = vmax.f32 %v357, 0.0
      %v374 = vmax.f32 %v362, 0.0
      %v375 = vmax.f32 %v365, 0.0
      %v376 = vadd.f32 %v368, 1e-07
      %v377 = vadd.f32 %v369, 1e-07
      %v378 = vadd.f32 %v370, 1e-07
      %v379 = vadd.f32 %v371, 1e-07
      %v380 = vadd.f32 %v372, 1e-07
      %v381 = vadd.f32 %v373, 1e-07
      %v382 = vadd.f32 %v374, 1e-07
      %v383 = vadd.f32 %v375, 1e-07
      %v384 = vmax.f32 %v376, %v380
      %v385 = vmax.f32 %v377, %v381
      %v386 = vmax.f32 %v378, %v382
      %v387 = vmax.f32 %v379, %v383
      %v388 = vmax.f32 %v384, %v385
      %v389 = vmax.f32 %v386, %v387
      %v390 = vmax.f32 %v388, %v389
      %v391 = vrot.slane %v390, 4
      %v392 = vmax.f32 %v390, %v391
      %v393 = vrot.slane %v392, 2
      %v394 = vmax.f32 %v392, %v393
      %v395 = vrot.slane %v394, 1
      %v396 = vmax.f32 %v394, %v395
      %v397 = vsub.f32 %v376, %v396
      %v398 = vsub.f32 %v377, %v396
      %v399 = vsub.f32 %v378, %v396
      %v400 = vsub.f32 %v379, %v396
      %v401 = vsub.f32 %v380, %v396
      %v402 = vsub.f32 %v381, %v396
      %v403 = vsub.f32 %v382, %v396
      %v404 = vsub.f32 %v383, %v396
      %v405 = vmul.f32 %v397, 1.442695
      %v406 = vpow.pop %v405
      %v407 = vmul.f32 %v398, 1.442695
      %v408 = vpow.pop %v407
      %v409 = vmul.f32 %v399, 1.442695
      %v410 = vpow.pop %v409
      %v411 = vmul.f32 %v400, 1.442695
      %v412 = vpow.pop %v411
      %v413 = vmul.f32 %v401, 1.442695
      %v414 = vpow.pop %v413
      %v415 = vmul.f32 %v402, 1.442695
      %v416 = vpow.pop %v415
      %v417 = vmul.f32 %v403, 1.442695
      %v418 = vpow.pop %v417
      %v419 = vmul.f32 %v404, 1.442695
      %v420 = vpow.pop %v419
      %v421 = vld [vmem:[%s3] sm:$0xf]
      %v422 = vld [vmem:[%s3 + $0x4] sm:$0xf]
      %v423 = vld [vmem:[%s3 + $0x8] sm:$0xf]
      %v424 = vld [vmem:[%s3 + $0xc] sm:$0xf]
      %v425 = vmul.f32 %v406, %v376
      %v426 = vmul.f32 %v408, %v377
      %v427 = vmul.f32 %v410, %v378
      %v428 = vmul.f32 %v412, %v379
      %v429 = vmul.f32 %v414, %v380
      %v430 = vmul.f32 %v416, %v381
      %v431 = vmul.f32 %v418, %v382
      %v432 = vmul.f32 %v420, %v383
      %v433 = vpack.c.bf16 %v426, %v425
      %v434 = vpack.c.bf16 %v408, %v406
      %v435 = vpack.c.bf16 %v428, %v427
      %v436 = vpack.c.bf16 %v412, %v410
      %v437 = vpack.c.bf16 %v430, %v429
      %v438 = vpack.c.bf16 %v416, %v414
      %v439 = vpack.c.bf16 %v432, %v431
      %v440 = vpack.c.bf16 %v420, %v418
      %v445 = vunpack.c.l.b16 %v421
      %v446 = vunpack.c.l.b16 %v422
      %v447 = vunpack.c.l.b16 %v423
      %v448 = vunpack.c.l.b16 %v424
      %v449 = vpack.c.b16 %v446, %v445
      %v450 = vpack.c.b16 %v448, %v447
      %vm451 = vcmask 523264
      %v453 = vsel %vm451, %v449, 0
      %v456 = vsel %vm451, %v450, 0
      %458 = vmatprep.subr.bf16.mxu0 %v434
      %459 = vmatpush1.bf16.msra.mxu0 %v433
      %460 = vmatprep.subr.bf16.mxu0 %v436
      %461 = vmatpush1.bf16.msra.mxu0 %v435
      %462 = vmatprep.subr.bf16.mxu0 %v438
      %463 = vmatpush1.bf16.msra.mxu0 %v437
      %464 = vmatprep.subr.bf16.mxu0 %v440
      %465 = vmatpush1.bf16.msra.mxu0 %v439
      %466 = vmatprep.subr.bf16.mxu0 0
      %467 = vmatpush1.bf16.msra.mxu0 0
      %468 = vmatprep.subr.bf16.mxu0 0
      %469 = vmatpush1.bf16.msra.mxu0 0
      %470 = vmatprep.subr.bf16.mxu0 0
      %471 = vmatpush1.bf16.msra.mxu0 0
      %472 = vmatprep.subr.bf16.mxu0 0
      %473 = vmatpush1.bf16.msra.mxu0 0
      %474 = vmatprep.subr.bf16.mxu0 0
      %475 = vmatpush1.bf16.msra.mxu0 0
      %476 = vmatprep.subr.bf16.mxu0 0
      %477 = vmatpush1.bf16.msra.mxu0 0
      %478 = vmatprep.subr.bf16.mxu0 0
      %479 = vmatpush1.bf16.msra.mxu0 0
      %480 = vmatprep.subr.bf16.mxu0 0
      %481 = vmatpush1.bf16.msra.mxu0 0
      %482 = vmatprep.subr.bf16.mxu0 0
      %483 = vmatpush1.bf16.msra.mxu0 0
      %484 = vmatprep.subr.bf16.mxu0 0
      %485 = vmatpush1.bf16.msra.mxu0 0
      %486 = vmatprep.subr.bf16.mxu0 0
      %487 = vmatpush1.bf16.msra.mxu0 0
      %488 = vmatprep.subr.bf16.mxu0 0
      %489 = vmatpush1.bf16.msra.mxu0 0
      %490 = vmatprep.mubr.bf16.mxu0 0
      %491 = vmatmul.mubr.bf16.gmra.mrb[0].mxu0 %v453
      %v492 = vpop.f32.mrb[0].mxu0
      %v493 = vadd.f32 0.0, %v492
      %v494 = vpop.f32.mrb[0].mxu0
      %v495 = vadd.f32 0.0, %v494
      %v496 = vpop.f32.mrb[0].mxu0
      %v497 = vadd.f32 0.0, %v496
      %v498 = vpop.f32.mrb[0].mxu0
      %v499 = vadd.f32 0.0, %v498
      %500 = vmatprep.mubr.bf16.mxu0 0
      %501 = vmatmul.mubr.bf16.gmra.mrb[0].mxu0 %v456
      %v502 = vpop.f32.mrb[0].mxu0
      %v503 = vadd.f32 0.0, %v502
      %v504 = vpop.f32.mrb[0].mxu0
      %v505 = vadd.f32 0.0, %v504
      %v506 = vpop.f32.mrb[0].mxu0
      %v507 = vadd.f32 0.0, %v506
      %v508 = vpop.f32.mrb[0].mxu0
      %v509 = vadd.f32 0.0, %v508
      %510 = vdwg.mxu0
      %v511 = vmax.f32 %v495, 1e-09
      %v512 = vmax.f32 %v499, 1e-09
      %v513 = vmax.f32 %v505, 1e-09
      %v514 = vmax.f32 %v509, 1e-09
      %v515 = vrcp.pop %v511
      %v516 = vrcp.pop %v512
      %v517 = vrcp.pop %v513
      %v518 = vrcp.pop %v514
      %v519 = vmul.f32 %v493, %v515
      %v520 = vmul.f32 %v497, %v516
      %v521 = vmul.f32 %v503, %v517
      %v522 = vmul.f32 %v507, %v518
      %v523 = vadd.f32 %v519, %v248
      %v524 = vadd.f32 %v520, %v249
      %v525 = vadd.f32 %v521, %v250
      %v526 = vadd.f32 %v522, %v251
      %s527 = smul.u32 %s243, 32
      %s528 = smul.addr %s527, 8
      %s529 = scalar_lea.vmem [#allocation12], %s528
      %v530 = vld [vmem:[%s529] sm:$0xff]
      %v531 = vld [vmem:[%s529 + $0x8] sm:$0xff]
      %v532 = vld [vmem:[%s529 + $0x10] sm:$0xff]
      %v533 = vld [vmem:[%s529 + $0x18] sm:$0xff]
      %v534 = vld [vmem:[%s529 + $0x20] sm:$0xff]
      %v535 = vld [vmem:[%s529 + $0x28] sm:$0xff]
      %v536 = vld [vmem:[%s529 + $0x30] sm:$0xff]
      %v537 = vld [vmem:[%s529 + $0x38] sm:$0xff]
      %v538 = vld [vmem:[%s529 + $0x40] sm:$0xff]
      %v539 = vld [vmem:[%s529 + $0x48] sm:$0xff]
      %v540 = vld [vmem:[%s529 + $0x50] sm:$0xff]
      %v541 = vld [vmem:[%s529 + $0x58] sm:$0xff]
      %v542 = vld [vmem:[%s529 + $0x60] sm:$0xff]
      %v543 = vld [vmem:[%s529 + $0x68] sm:$0xff]
      %v544 = vld [vmem:[%s529 + $0x70] sm:$0xff]
      %v545 = vld [vmem:[%s529 + $0x78] sm:$0xff]
      %v546 = vld [vmem:[%s529 + $0x80] sm:$0xff]
      %v547 = vld [vmem:[%s529 + $0x88] sm:$0xff]
      %v548 = vld [vmem:[%s529 + $0x90] sm:$0xff]
      %v549 = vld [vmem:[%s529 + $0x98] sm:$0xff]
      %v550 = vld [vmem:[%s529 + $0xa0] sm:$0xff]
      %v551 = vld [vmem:[%s529 + $0xa8] sm:$0xff]
      %v552 = vld [vmem:[%s529 + $0xb0] sm:$0xff]
      %v553 = vld [vmem:[%s529 + $0xb8] sm:$0xff]
      %v554 = vld [vmem:[%s529 + $0xc0] sm:$0xff]
      %v555 = vld [vmem:[%s529 + $0xc8] sm:$0xff]
      %v556 = vld [vmem:[%s529 + $0xd0] sm:$0xff]
      %v557 = vld [vmem:[%s529 + $0xd8] sm:$0xff]
      %v558 = vld [vmem:[%s529 + $0xe0] sm:$0xff]
      %v559 = vld [vmem:[%s529 + $0xe8] sm:$0xff]
      %v560 = vld [vmem:[%s529 + $0xf0] sm:$0xff]
      %v561 = vld [vmem:[%s529 + $0xf8] sm:$0xff]
      %v562 = vpack.c.bf16 %v524, %v523
      %v563 = vpack.c.bf16 %v526, %v525
      %v564 = vpack.c.bf16 %v532, %v530
      %v565 = vpack.c.bf16 %v533, %v531
      %v566 = vpack.c.bf16 %v536, %v534
      %v567 = vpack.c.bf16 %v537, %v535
      %v568 = vpack.c.bf16 %v540, %v538
      %v569 = vpack.c.bf16 %v541, %v539
      %v570 = vpack.c.bf16 %v544, %v542
      %v571 = vpack.c.bf16 %v545, %v543
      %v572 = vpack.c.bf16 %v548, %v546
      %v573 = vpack.c.bf16 %v549, %v547
      %v574 = vpack.c.bf16 %v552, %v550
      %v575 = vpack.c.bf16 %v553, %v551
      %v576 = vpack.c.bf16 %v556, %v554
      %v577 = vpack.c.bf16 %v557, %v555
      %v578 = vpack.c.bf16 %v560, %v558
      %v579 = vpack.c.bf16 %v561, %v559
      %s580 = smul.u32 %s243, 2
      %s581 = scalar_lea.vmem [#allocation14], %s580
      %v582 = vld [vmem:[%s581] sm:$0x3]
      %v584 = vlaneseq
      %v585 = vshrl.u32 %v584, 7
      %v586 = vsub.s32 0, %v585
      %v587 = vrot.slane %v582, %v586
      %v588 = vlaneseq
      %v589 = vshrl.u32 %v588, 7
      %v590 = vsub.s32 1, %v589
      %v591 = vrot.slane %v582, %v590
      %594 = vmatprep.subr.bf16.mxu0 %v565
      %595 = vmatpush1.bf16.msra.mxu0 %v564
      %596 = vmatprep.subr.bf16.mxu0 %v567
      %597 = vmatpush1.bf16.msra.mxu0 %v566
      %598 = vmatprep.subr.bf16.mxu0 %v569
      %599 = vmatpush1.bf16.msra.mxu0 %v568
      %600 = vmatprep.subr.bf16.mxu0 %v571
      %601 = vmatpush1.bf16.msra.mxu0 %v570
      %602 = vmatprep.subr.bf16.mxu0 %v573
      %603 = vmatpush1.bf16.msra.mxu0 %v572
      %604 = vmatprep.subr.bf16.mxu0 %v575
      %605 = vmatpush1.bf16.msra.mxu0 %v574
      %606 = vmatprep.subr.bf16.mxu0 %v577
      %607 = vmatpush1.bf16.msra.mxu0 %v576
      %608 = vmatprep.subr.bf16.mxu0 %v579
      %609 = vmatpush1.bf16.msra.mxu0 %v578
      %610 = vmatprep.subr.bf16.mxu0 0
      %611 = vmatpush1.bf16.msra.mxu0 0
      %612 = vmatprep.subr.bf16.mxu0 0
      %613 = vmatpush1.bf16.msra.mxu0 0
      %614 = vmatprep.subr.bf16.mxu0 0
      %615 = vmatpush1.bf16.msra.mxu0 0
      %616 = vmatprep.subr.bf16.mxu0 0
      %617 = vmatpush1.bf16.msra.mxu0 0
      %618 = vmatprep.subr.bf16.mxu0 0
      %619 = vmatpush1.bf16.msra.mxu0 0
      %620 = vmatprep.subr.bf16.mxu0 0
      %621 = vmatpush1.bf16.msra.mxu0 0
      %622 = vmatprep.subr.bf16.mxu0 0
      %623 = vmatpush1.bf16.msra.mxu0 0
      %624 = vmatprep.subr.bf16.mxu0 0
      %625 = vmatpush1.bf16.msra.mxu0 0
      %626 = vmatprep.mubr.bf16.mxu0 0
      %627 = vmatmul.mubr.bf16.gmra.mrb[0].mxu0 %v562
      %v628 = vpop.f32.mrb[0].mxu0
      %v629 = vadd.f32 %v587, %v628
      %v630 = vpop.f32.mrb[0].mxu0
      %v631 = vadd.f32 %v591, %v630
      %v632 = vpop.f32.mrb[0].mxu0
      %v633 = vadd.f32 %v587, %v632
      %v634 = vpop.f32.mrb[0].mxu0
      %v635 = vadd.f32 %v591, %v634
      %636 = vmatprep.mubr.bf16.mxu0 0
      %637 = vmatmul.mubr.bf16.gmra.mrb[0].mxu0 %v563
      %v638 = vpop.f32.mrb[0].mxu0
      %v639 = vadd.f32 %v587, %v638
      %v640 = vpop.f32.mrb[0].mxu0
      %v641 = vadd.f32 %v591, %v640
      %v642 = vpop.f32.mrb[0].mxu0
      %v643 = vadd.f32 %v587, %v642
      %v644 = vpop.f32.mrb[0].mxu0
      %v645 = vadd.f32 %v591, %v644
      %646 = vdwg.mxu0
      %v647 = vmax.f32 %v629, 0.0
      %v648 = vmax.f32 %v631, 0.0
      %v649 = vmax.f32 %v633, 0.0
      %v650 = vmax.f32 %v635, 0.0
      %v651 = vmax.f32 %v639, 0.0
      %v652 = vmax.f32 %v641, 0.0
      %v653 = vmax.f32 %v643, 0.0
      %v654 = vmax.f32 %v645, 0.0
      %s655 = smul.u32 %s243, 256
      %s656 = scalar_lea.vmem [#allocation15], %s655
      %v657 = vld [vmem:[%s656] sm:$0xff]
      %v658 = vld [vmem:[%s656 + $0x8] sm:$0xff]
      %v659 = vld [vmem:[%s656 + $0x10] sm:$0xff]
      %v660 = vld [vmem:[%s656 + $0x18] sm:$0xff]
      %v661 = vld [vmem:[%s656 + $0x20] sm:$0xff]
      %v662 = vld [vmem:[%s656 + $0x28] sm:$0xff]
      %v663 = vld [vmem:[%s656 + $0x30] sm:$0xff]
      %v664 = vld [vmem:[%s656 + $0x38] sm:$0xff]
      %v665 = vld [vmem:[%s656 + $0x40] sm:$0xff]
      %v666 = vld [vmem:[%s656 + $0x48] sm:$0xff]
      %v667 = vld [vmem:[%s656 + $0x50] sm:$0xff]
      %v668 = vld [vmem:[%s656 + $0x58] sm:$0xff]
      %v669 = vld [vmem:[%s656 + $0x60] sm:$0xff]
      %v670 = vld [vmem:[%s656 + $0x68] sm:$0xff]
      %v671 = vld [vmem:[%s656 + $0x70] sm:$0xff]
      %v672 = vld [vmem:[%s656 + $0x78] sm:$0xff]
      %v673 = vld [vmem:[%s656 + $0x80] sm:$0xff]
      %v674 = vld [vmem:[%s656 + $0x88] sm:$0xff]
      %v675 = vld [vmem:[%s656 + $0x90] sm:$0xff]
      %v676 = vld [vmem:[%s656 + $0x98] sm:$0xff]
      %v677 = vld [vmem:[%s656 + $0xa0] sm:$0xff]
      %v678 = vld [vmem:[%s656 + $0xa8] sm:$0xff]
      %v679 = vld [vmem:[%s656 + $0xb0] sm:$0xff]
      %v680 = vld [vmem:[%s656 + $0xb8] sm:$0xff]
      %v681 = vld [vmem:[%s656 + $0xc0] sm:$0xff]
      %v682 = vld [vmem:[%s656 + $0xc8] sm:$0xff]
      %v683 = vld [vmem:[%s656 + $0xd0] sm:$0xff]
      %v684 = vld [vmem:[%s656 + $0xd8] sm:$0xff]
      %v685 = vld [vmem:[%s656 + $0xe0] sm:$0xff]
      %v686 = vld [vmem:[%s656 + $0xe8] sm:$0xff]
      %v687 = vld [vmem:[%s656 + $0xf0] sm:$0xff]
      %v688 = vld [vmem:[%s656 + $0xf8] sm:$0xff]
      %v689 = vpack.c.bf16 %v649, %v647
      %v690 = vpack.c.bf16 %v650, %v648
      %v691 = vpack.c.bf16 %v653, %v651
      %v692 = vpack.c.bf16 %v654, %v652
      %v693 = vpack.c.bf16 %v658, %v657
      %v694 = vpack.c.bf16 %v660, %v659
      %v695 = vpack.c.bf16 %v662, %v661
      %v696 = vpack.c.bf16 %v664, %v663
      %v697 = vpack.c.bf16 %v666, %v665
      %v698 = vpack.c.bf16 %v668, %v667
      %v699 = vpack.c.bf16 %v670, %v669
      %v700 = vpack.c.bf16 %v672, %v671
      %v701 = vpack.c.bf16 %v674, %v673
      %v702 = vpack.c.bf16 %v676, %v675
      %v703 = vpack.c.bf16 %v678, %v677
      %v704 = vpack.c.bf16 %v680, %v679
      %v705 = vpack.c.bf16 %v682, %v681
      %v706 = vpack.c.bf16 %v684, %v683
      %v707 = vpack.c.bf16 %v686, %v685
      %v708 = vpack.c.bf16 %v688, %v687
      %s709 = scalar_lea.vmem [#allocation17], %s243
      %v710 = vld [vmem:[%s709] sm:$0x1]
      %v712 = vlaneseq
      %v713 = vshrl.u32 %v712, 7
      %v714 = vsub.s32 0, %v713
      %v715 = vrot.slane %v710, %v714
      %717 = vmatprep.subr.bf16.mxu0 0
      %718 = vmatpush1.bf16.msra.mxu0 %v693
      %719 = vmatprep.subr.bf16.mxu0 0
      %720 = vmatpush1.bf16.msra.mxu0 %v694
      %721 = vmatprep.subr.bf16.mxu0 0
      %722 = vmatpush1.bf16.msra.mxu0 %v695
      %723 = vmatprep.subr.bf16.mxu0 0
      %724 = vmatpush1.bf16.msra.mxu0 %v696
      %725 = vmatprep.subr.bf16.mxu0 0
      %726 = vmatpush1.bf16.msra.mxu0 %v697
      %727 = vmatprep.subr.bf16.mxu0 0
      %728 = vmatpush1.bf16.msra.mxu0 %v698
      %729 = vmatprep.subr.bf16.mxu0 0
      %730 = vmatpush1.bf16.msra.mxu0 %v699
      %731 = vmatprep.subr.bf16.mxu0 0
      %732 = vmatpush1.bf16.msra.mxu0 %v700
      %733 = vmatprep.subr.bf16.mxu0 0
      %734 = vmatpush1.bf16.msra.mxu0 %v701
      %735 = vmatprep.subr.bf16.mxu0 0
      %736 = vmatpush1.bf16.msra.mxu0 %v702
      %737 = vmatprep.subr.bf16.mxu0 0
      %738 = vmatpush1.bf16.msra.mxu0 %v703
      %739 = vmatprep.subr.bf16.mxu0 0
      %740 = vmatpush1.bf16.msra.mxu0 %v704
      %741 = vmatprep.subr.bf16.mxu0 0
      %742 = vmatpush1.bf16.msra.mxu0 %v705
      %743 = vmatprep.subr.bf16.mxu0 0
      %744 = vmatpush1.bf16.msra.mxu0 %v706
      %745 = vmatprep.subr.bf16.mxu0 0
      %746 = vmatpush1.bf16.msra.mxu0 %v707
      %747 = vmatprep.subr.bf16.mxu0 0
      %748 = vmatpush1.bf16.msra.mxu0 %v708
      %749 = vmatprep.mubr.bf16.mxu0 %v690
      %750 = vmatmul.mubr.bf16.gmra.mrb[0].mxu0 %v689
      %v751 = vpop.f32.mrb[0].mxu0
      %v752 = vadd.f32 %v715, %v751
      %v753 = vpop.f32.mrb[0].mxu0
      %v754 = vpop.f32.mrb[0].mxu0
      %v755 = vadd.f32 %v715, %v754
      %v756 = vpop.f32.mrb[0].mxu0
      %757 = vmatprep.mubr.bf16.mxu0 %v692
      %758 = vmatmul.mubr.bf16.gmra.mrb[0].mxu0 %v691
      %v759 = vpop.f32.mrb[0].mxu0
      %v760 = vadd.f32 %v715, %v759
      %v761 = vpop.f32.mrb[0].mxu0
      %v762 = vpop.f32.mrb[0].mxu0
      %v763 = vadd.f32 %v715, %v762
      %v764 = vpop.f32.mrb[0].mxu0
      %765 = vdwg.mxu0
      %s766 = smul.u32 %s243, 48
      %s767 = smul.addr %s766, 8
      %s768 = scalar_lea.vmem [#allocation18], %s767
      %v769 = vld [vmem:[%s768] sm:$0xff]
      %v770 = vld [vmem:[%s768 + $0x8] sm:$0xff]
      %v771 = vld [vmem:[%s768 + $0x10] sm:$0xff]
      %v772 = vld [vmem:[%s768 + $0x18] sm:$0xff]
      %v773 = vld [vmem:[%s768 + $0x20] sm:$0xff]
      %v774 = vld [vmem:[%s768 + $0x28] sm:$0xff]
      %v775 = vld [vmem:[%s768 + $0x30] sm:$0xff]
      %v776 = vld [vmem:[%s768 + $0x38] sm:$0xff]
      %v777 = vld [vmem:[%s768 + $0x40] sm:$0xff]
      %v778 = vld [vmem:[%s768 + $0x48] sm:$0xff]
      %v779 = vld [vmem:[%s768 + $0x50] sm:$0xff]
      %v780 = vld [vmem:[%s768 + $0x58] sm:$0xff]
      %v781 = vld [vmem:[%s768 + $0x60] sm:$0xff]
      %v782 = vld [vmem:[%s768 + $0x68] sm:$0xff]
      %v783 = vld [vmem:[%s768 + $0x70] sm:$0xff]
      %v784 = vld [vmem:[%s768 + $0x78] sm:$0xff]
      %v785 = vld [vmem:[%s768 + $0x80] sm:$0xff]
      %v786 = vld [vmem:[%s768 + $0x88] sm:$0xff]
      %v787 = vld [vmem:[%s768 + $0x90] sm:$0xff]
      %v788 = vld [vmem:[%s768 + $0x98] sm:$0xff]
      %v789 = vld [vmem:[%s768 + $0xa0] sm:$0xff]
      %v790 = vld [vmem:[%s768 + $0xa8] sm:$0xff]
      %v791 = vld [vmem:[%s768 + $0xb0] sm:$0xff]
      %v792 = vld [vmem:[%s768 + $0xb8] sm:$0xff]
      %v793 = vld [vmem:[%s768 + $0xc0] sm:$0xff]
      %v794 = vld [vmem:[%s768 + $0xc8] sm:$0xff]
      %v795 = vld [vmem:[%s768 + $0xd0] sm:$0xff]
      %v796 = vld [vmem:[%s768 + $0xd8] sm:$0xff]
      %v797 = vld [vmem:[%s768 + $0xe0] sm:$0xff]
      %v798 = vld [vmem:[%s768 + $0xe8] sm:$0xff]
      %v799 = vld [vmem:[%s768 + $0xf0] sm:$0xff]
      %v800 = vld [vmem:[%s768 + $0xf8] sm:$0xff]
      %v801 = vld [vmem:[%s768 + $0x100] sm:$0xff]
      %v802 = vld [vmem:[%s768 + $0x108] sm:$0xff]
      %v803 = vld [vmem:[%s768 + $0x110] sm:$0xff]
      %v804 = vld [vmem:[%s768 + $0x118] sm:$0xff]
      %v805 = vld [vmem:[%s768 + $0x120] sm:$0xff]
      %v806 = vld [vmem:[%s768 + $0x128] sm:$0xff]
      %v807 = vld [vmem:[%s768 + $0x130] sm:$0xff]
      %v808 = vld [vmem:[%s768 + $0x138] sm:$0xff]
      %v809 = vld [vmem:[%s768 + $0x140] sm:$0xff]
      %v810 = vld [vmem:[%s768 + $0x148] sm:$0xff]
      %v811 = vld [vmem:[%s768 + $0x150] sm:$0xff]
      %v812 = vld [vmem:[%s768 + $0x158] sm:$0xff]
      %v813 = vld [vmem:[%s768 + $0x160] sm:$0xff]
      %v814 = vld [vmem:[%s768 + $0x168] sm:$0xff]
      %v815 = vld [vmem:[%s768 + $0x170] sm:$0xff]
      %v816 = vld [vmem:[%s768 + $0x178] sm:$0xff]
      %v817 = vpack.c.bf16 %v755, %v752
      %v818 = vpack.c.bf16 %v763, %v760
      %v819 = vpack.c.bf16 %v772, %v769
      %v820 = vpack.c.bf16 %v773, %v770
      %v821 = vpack.c.bf16 %v774, %v771
      %v822 = vpack.c.bf16 %v778, %v775
      %v823 = vpack.c.bf16 %v779, %v776
      %v824 = vpack.c.bf16 %v780, %v777
      %v825 = vpack.c.bf16 %v784, %v781
      %v826 = vpack.c.bf16 %v785, %v782
      %v827 = vpack.c.bf16 %v786, %v783
      %v828 = vpack.c.bf16 %v790, %v787
      %v829 = vpack.c.bf16 %v791, %v788
      %v830 = vpack.c.bf16 %v792, %v789
      %v831 = vpack.c.bf16 %v796, %v793
      %v832 = vpack.c.bf16 %v797, %v794
      %v833 = vpack.c.bf16 %v798, %v795
      %v834 = vpack.c.bf16 %v802, %v799
      %v835 = vpack.c.bf16 %v803, %v800
      %v836 = vpack.c.bf16 %v804, %v801
      %v837 = vpack.c.bf16 %v808, %v805
      %v838 = vpack.c.bf16 %v809, %v806
      %v839 = vpack.c.bf16 %v810, %v807
      %v840 = vpack.c.bf16 %v814, %v811
      %v841 = vpack.c.bf16 %v815, %v812
      %v842 = vpack.c.bf16 %v816, %v813
      %s843 = smul.u32 %s243, 3
      %s844 = scalar_lea.vmem [#allocation20], %s843
      %v845 = vld [vmem:[%s844] sm:$0x7]
      %v847 = vlaneseq
      %v848 = vshrl.u32 %v847, 7
      %v849 = vsub.s32 0, %v848
      %v850 = vrot.slane %v845, %v849
      %v851 = vlaneseq
      %v852 = vshrl.u32 %v851, 7
      %v853 = vsub.s32 1, %v852
      %v854 = vrot.slane %v845, %v853
      %v855 = vlaneseq
      %v856 = vshrl.u32 %v855, 7
      %v857 = vsub.s32 2, %v856
      %v858 = vrot.slane %v845, %v857
      %862 = vmatprep.subr.bf16.mxu0 %v820
      %863 = vmatpush1.bf16.msra.mxu0 %v819
      %864 = vmatprep.subr.bf16.mxu0 %v823
      %865 = vmatpush1.bf16.msra.mxu0 %v822
      %866 = vmatprep.subr.bf16.mxu0 %v826
      %867 = vmatpush1.bf16.msra.mxu0 %v825
      %868 = vmatprep.subr.bf16.mxu0 %v829
      %869 = vmatpush1.bf16.msra.mxu0 %v828
      %870 = vmatprep.subr.bf16.mxu0 %v832
      %871 = vmatpush1.bf16.msra.mxu0 %v831
      %872 = vmatprep.subr.bf16.mxu0 %v835
      %873 = vmatpush1.bf16.msra.mxu0 %v834
      %874 = vmatprep.subr.bf16.mxu0 %v838
      %875 = vmatpush1.bf16.msra.mxu0 %v837
      %876 = vmatprep.subr.bf16.mxu0 %v841
      %877 = vmatpush1.bf16.msra.mxu0 %v840
      %878 = vmatprep.subr.bf16.mxu0 0
      %879 = vmatpush1.bf16.msra.mxu0 0
      %880 = vmatprep.subr.bf16.mxu0 0
      %881 = vmatpush1.bf16.msra.mxu0 0
      %882 = vmatprep.subr.bf16.mxu0 0
      %883 = vmatpush1.bf16.msra.mxu0 0
      %884 = vmatprep.subr.bf16.mxu0 0
      %885 = vmatpush1.bf16.msra.mxu0 0
      %886 = vmatprep.subr.bf16.mxu0 0
      %887 = vmatpush1.bf16.msra.mxu0 0
      %888 = vmatprep.subr.bf16.mxu0 0
      %889 = vmatpush1.bf16.msra.mxu0 0
      %890 = vmatprep.subr.bf16.mxu0 0
      %891 = vmatpush1.bf16.msra.mxu0 0
      %892 = vmatprep.subr.bf16.mxu0 0
      %893 = vmatpush1.bf16.msra.mxu0 0
      %894 = vmatprep.mubr.bf16.mxu0 0
      %895 = vmatmul.mubr.bf16.gmra.mrb[0].mxu0 %v817
      %v896 = vpop.f32.mrb[0].mxu0
      %v897 = vadd.f32 %v850, %v896
      %v898 = vpop.f32.mrb[0].mxu0
      %v899 = vadd.f32 %v854, %v898
      %v900 = vpop.f32.mrb[0].mxu0
      %v901 = vadd.f32 %v850, %v900
      %v902 = vpop.f32.mrb[0].mxu0
      %v903 = vadd.f32 %v854, %v902
      %904 = vmatprep.mubr.bf16.mxu0 0
      %905 = vmatmul.mubr.bf16.gmra.mrb[0].mxu0 %v818
      %v906 = vpop.f32.mrb[0].mxu0
      %v907 = vadd.f32 %v850, %v906
      %v908 = vpop.f32.mrb[0].mxu0
      %v909 = vadd.f32 %v854, %v908
      %v910 = vpop.f32.mrb[0].mxu0
      %v911 = vadd.f32 %v850, %v910
      %v912 = vpop.f32.mrb[0].mxu0
      %v913 = vadd.f32 %v854, %v912
      %914 = vdwg.mxu0
      %915 = vmatprep.subr.bf16.mxu0 0
      %916 = vmatpush1.bf16.msra.mxu0 %v821
      %917 = vmatprep.subr.bf16.mxu0 0
      %918 = vmatpush1.bf16.msra.mxu0 %v824
      %919 = vmatprep.subr.bf16.mxu0 0
      %920 = vmatpush1.bf16.msra.mxu0 %v827
      %921 = vmatprep.subr.bf16.mxu0 0
      %922 = vmatpush1.bf16.msra.mxu0 %v830
      %923 = vmatprep.subr.bf16.mxu0 0
      %924 = vmatpush1.bf16.msra.mxu0 %v833
      %925 = vmatprep.subr.bf16.mxu0 0
      %926 = vmatpush1.bf16.msra.mxu0 %v836
      %927 = vmatprep.subr.bf16.mxu0 0
      %928 = vmatpush1.bf16.msra.mxu0 %v839
      %929 = vmatprep.subr.bf16.mxu0 0
      %930 = vmatpush1.bf16.msra.mxu0 %v842
      %931 = vmatprep.subr.bf16.mxu0 0
      %932 = vmatpush1.bf16.msra.mxu0 0
      %933 = vmatprep.subr.bf16.mxu0 0
      %934 = vmatpush1.bf16.msra.mxu0 0
      %935 = vmatprep.subr.bf16.mxu0 0
      %936 = vmatpush1.bf16.msra.mxu0 0
      %937 = vmatprep.subr.bf16.mxu0 0
      %938 = vmatpush1.bf16.msra.mxu0 0
      %939 = vmatprep.subr.bf16.mxu0 0
      %940 = vmatpush1.bf16.msra.mxu0 0
      %941 = vmatprep.subr.bf16.mxu0 0
      %942 = vmatpush1.bf16.msra.mxu0 0
      %943 = vmatprep.subr.bf16.mxu0 0
      %944 = vmatpush1.bf16.msra.mxu0 0
      %945 = vmatprep.subr.bf16.mxu0 0
      %946 = vmatpush1.bf16.msra.mxu0 0
      %947 = vmatprep.mubr.bf16.mxu0 0
      %948 = vmatmul.mubr.bf16.gmra.mrb[0].mxu0 %v817
      %v949 = vpop.f32.mrb[0].mxu0
      %v950 = vadd.f32 %v858, %v949
      %v951 = vpop.f32.mrb[0].mxu0
      %v952 = vpop.f32.mrb[0].mxu0
      %v953 = vadd.f32 %v858, %v952
      %v954 = vpop.f32.mrb[0].mxu0
      %955 = vmatprep.mubr.bf16.mxu0 0
      %956 = vmatmul.mubr.bf16.gmra.mrb[0].mxu0 %v818
      %v957 = vpop.f32.mrb[0].mxu0
      %v958 = vadd.f32 %v858, %v957
      %v959 = vpop.f32.mrb[0].mxu0
      %v960 = vpop.f32.mrb[0].mxu0
      %v961 = vadd.f32 %v858, %v960
      %v962 = vpop.f32.mrb[0].mxu0
      %963 = vdwg.mxu0
      %v964 = vld [vmem:[%s5] sm:$0xff]
      %v965 = vld [vmem:[%s5 + $0x8] sm:$0xff]
      %v966 = vld [vmem:[#allocation11] sm:$0x1]
      %967 = vset.pattern.permute.xlu0 0
      %968 = vperm.xlu0 %967, %v964
      %v969 = vpop.permute.xlu0 %968
      %970 = vset.pattern.permute.xlu0 0
      %971 = vperm.xlu0 %970, %v965
      %v972 = vpop.permute.xlu0 %971
      %v973 = vlaneseq
      %v974 = vshrl.u32 %v973, 7
      %v975 = vsub.s32 0, %v974
      %v976 = vrot.slane %v966, %v975
      %vm977 = vcmp.ne.s32.totalorder %v969, %v976
      %vm978 = vcmp.ne.s32.totalorder %v972, %v976
      %v979 = vsel %vm977, -1e+09, 0.0
      %v980 = vsel %vm978, -1e+09, 0.0
      %v981 = vld [vmem:[%s7] sm:$0xff]
      %v982 = vld [vmem:[%s7 + $0x8] sm:$0xff]
      %v983 = vld [vmem:[#allocation9] sm:$0x1]
      %984 = vset.pattern.permute.xlu0 0
      %985 = vperm.xlu0 %984, %v981
      %v986 = vpop.permute.xlu0 %985
      %987 = vset.pattern.permute.xlu0 0
      %988 = vperm.xlu0 %987, %v982
      %v989 = vpop.permute.xlu0 %988
      %v990 = vlaneseq
      %v991 = vshrl.u32 %v990, 7
      %v992 = vsub.s32 0, %v991
      %v993 = vrot.slane %v983, %v992
      %vm994 = vcmp.ne.s32.totalorder %v986, %v993
      %vm995 = vcmp.ne.s32.totalorder %v989, %v993
      %v996 = vsel %vm994, -1e+09, 0.0
      %v997 = vsel %vm995, -1e+09, 0.0
      %998 = vxpose.xlu0.b32.start [1/16] %v909, 128
      %999 = vxpose.xlu0.b32.cont [2/16] %v913, 128
      %1000 = vxpose.xlu0.b32.cont [3/16] 0.0, 128
      %1001 = vxpose.xlu0.b32.cont [4/16] 0.0, 128
      %1002 = vxpose.xlu0.b32.cont [5/16] 0.0, 128
      %1003 = vxpose.xlu0.b32.cont [6/16] 0.0, 128
      %1004 = vxpose.xlu0.b32.cont [7/16] 0.0, 128
      %1005 = vxpose.xlu0.b32.cont [8/16] 0.0, 128
      %1006 = vxpose.xlu0.b32.cont [9/16] 0.0, 128
      %1007 = vxpose.xlu0.b32.cont [10/16] 0.0, 128
      %1008 = vxpose.xlu0.b32.cont [11/16] 0.0, 128
      %1009 = vxpose.xlu0.b32.cont [12/16] 0.0, 128
      %1010 = vxpose.xlu0.b32.cont [13/16] 0.0, 128
      %1011 = vxpose.xlu0.b32.cont [14/16] 0.0, 128
      %1012 = vxpose.xlu0.b32.cont [15/16] 0.0, 128
      %1013 = vxpose.xlu0.b32.end [16/16] 0.0, 128
      %v1014 = vpop.trf.xlu0
      %v1015 = vpop.trf.xlu0
      %v1016 = vpop.trf.xlu0
      %v1017 = vpop.trf.xlu0
      %v1018 = vpop.trf.xlu0
      %v1019 = vpop.trf.xlu0
      %v1020 = vpop.trf.xlu0
      %v1021 = vpop.trf.xlu0
      %v1022 = vpop.trf.xlu0
      %v1023 = vpop.trf.xlu0
      %v1024 = vpop.trf.xlu0
      %v1025 = vpop.trf.xlu0
      %v1026 = vpop.trf.xlu0
      %v1027 = vpop.trf.xlu0
      %v1028 = vpop.trf.xlu0
      %v1029 = vpop.trf.xlu0
      %v1030 = vpack.c.bf16 %v901, %v897
      %v1031 = vpack.c.bf16 %v1015, %v1014
      %v1032 = vpack.c.bf16 %v1017, %v1016
      %v1034 = vsel %vm290, %v1030, 0
      %1036 = vmatprep.subr.bf16.mxu0 0
      %1037 = vmatpush1.bf16.msra.mxu0 %v1031
      %1038 = vmatprep.subr.bf16.mxu0 0
      %1039 = vmatpush1.bf16.msra.mxu0 %v1032
      %1040 = vmatprep.subr.bf16.mxu0 0
      %1041 = vmatpush1.bf16.msra.mxu0 0
      %1042 = vmatprep.subr.bf16.mxu0 0
      %1043 = vmatpush1.bf16.msra.mxu0 0
      %1044 = vmatprep.subr.bf16.mxu0 0
      %1045 = vmatpush1.bf16.msra.mxu0 0
      %1046 = vmatprep.subr.bf16.mxu0 0
      %1047 = vmatpush1.bf16.msra.mxu0 0
      %1048 = vmatprep.subr.bf16.mxu0 0
      %1049 = vmatpush1.bf16.msra.mxu0 0
      %1050 = vmatprep.subr.bf16.mxu0 0
      %1051 = vmatpush1.bf16.msra.mxu0 0
      %1052 = vmatprep.subr.bf16.mxu0 0
      %1053 = vmatpush1.bf16.msra.mxu0 0
      %1054 = vmatprep.subr.bf16.mxu0 0
      %1055 = vmatpush1.bf16.msra.mxu0 0
      %1056 = vmatprep.subr.bf16.mxu0 0
      %1057 = vmatpush1.bf16.msra.mxu0 0
      %1058 = vmatprep.subr.bf16.mxu0 0
      %1059 = vmatpush1.bf16.msra.mxu0 0
      %1060 = vmatprep.subr.bf16.mxu0 0
      %1061 = vmatpush1.bf16.msra.mxu0 0
      %1062 = vmatprep.subr.bf16.mxu0 0
      %1063 = vmatpush1.bf16.msra.mxu0 0
      %1064 = vmatprep.subr.bf16.mxu0 0
      %1065 = vmatpush1.bf16.msra.mxu0 0
      %1066 = vmatprep.subr.bf16.mxu0 0
      %1067 = vmatpush1.bf16.msra.mxu0 0
      %1068 = vmatprep.mubr.bf16.mxu0 0
      %1069 = vmatmul.mubr.bf16.gmra.mrb[0].mxu0 %v1034
      %v1070 = vpop.f32.mrb[0].mxu0
      %v1071 = vadd.f32 0.0, %v1070
      %v1072 = vpop.f32.mrb[0].mxu0
      %v1073 = vpop.f32.mrb[0].mxu0
      %v1074 = vadd.f32 0.0, %v1073
      %v1075 = vpop.f32.mrb[0].mxu0
      %1076 = vdwg.mxu0
      %v1077 = vmul.f32 %v1071, 0.17677669
      %v1078 = vmul.f32 %v1074, 0.17677669
      %v1079 = vadd.f32 %v1077, %v979
      %v1080 = vadd.f32 %v1078, %v980
      %vm1081 = vcmask 130048
      %v1082 = vsel %vm1081, %v1079, -inf
      %1083 = vmax.xlane.f32.xlu0 %v1082
      %v1084 = vpop.xlane.xlu0 %1083
      %v1085 = vsel %vm1081, %v1080, -inf
      %1086 = vmax.xlane.f32.xlu0 %v1085
      %v1087 = vpop.xlane.xlu0 %1086
      %v1088 = vsub.f32 %v1079, %v1084
      %v1089 = vsub.f32 %v1080, %v1087
      %v1090 = vmul.f32 %v1088, 1.442695
      %v1091 = vpow.pop %v1090
      %v1092 = vmul.f32 %v1089, 1.442695
      %v1093 = vpow.pop %v1092
      %v1094 = vsel %vm1081, %v1091, 0.0
      %1095 = vadd.xlane.f32.xlu0 %v1094
      %v1096 = vpop.xlane.xlu0 %1095
      %v1097 = vsel %vm1081, %v1093, 0.0
      %1098 = vadd.xlane.f32.xlu0 %v1097
      %v1099 = vpop.xlane.xlu0 %1098
      %v1100 = vrcp.pop %v1096
      %v1101 = vrcp.pop %v1099
      %v1102 = vmul.f32 %v1091, %v1100
      %v1103 = vmul.f32 %v1093, %v1101
      %v1104 = vpack.c.bf16 %v1103, %v1102
      %v1105 = vpack.c.bf16 %v961, %v958
      %v1107 = vsel %vm1081, %v1104, 0
      %1109 = vmatprep.subr.bf16.mxu0 0
      %1110 = vmatpush1.bf16.msra.mxu0 %v1105
      %1111 = vmatprep.subr.bf16.mxu0 0
      %1112 = vmatpush1.bf16.msra.mxu0 0
      %1113 = vmatprep.subr.bf16.mxu0 0
      %1114 = vmatpush1.bf16.msra.mxu0 0
      %1115 = vmatprep.subr.bf16.mxu0 0
      %1116 = vmatpush1.bf16.msra.mxu0 0
      %1117 = vmatprep.subr.bf16.mxu0 0
      %1118 = vmatpush1.bf16.msra.mxu0 0
      %1119 = vmatprep.subr.bf16.mxu0 0
      %1120 = vmatpush1.bf16.msra.mxu0 0
      %1121 = vmatprep.subr.bf16.mxu0 0
      %1122 = vmatpush1.bf16.msra.mxu0 0
      %1123 = vmatprep.subr.bf16.mxu0 0
      %1124 = vmatpush1.bf16.msra.mxu0 0
      %1125 = vmatprep.subr.bf16.mxu0 0
      %1126 = vmatpush1.bf16.msra.mxu0 0
      %1127 = vmatprep.subr.bf16.mxu0 0
      %1128 = vmatpush1.bf16.msra.mxu0 0
      %1129 = vmatprep.subr.bf16.mxu0 0
      %1130 = vmatpush1.bf16.msra.mxu0 0
      %1131 = vmatprep.subr.bf16.mxu0 0
      %1132 = vmatpush1.bf16.msra.mxu0 0
      %1133 = vmatprep.subr.bf16.mxu0 0
      %1134 = vmatpush1.bf16.msra.mxu0 0
      %1135 = vmatprep.subr.bf16.mxu0 0
      %1136 = vmatpush1.bf16.msra.mxu0 0
      %1137 = vmatprep.subr.bf16.mxu0 0
      %1138 = vmatpush1.bf16.msra.mxu0 0
      %1139 = vmatprep.subr.bf16.mxu0 0
      %1140 = vmatpush1.bf16.msra.mxu0 0
      %1141 = vmatprep.mubr.bf16.mxu0 0
      %1142 = vmatmul.mubr.bf16.gmra.mrb[0].mxu0 %v1107
      %v1143 = vpop.f32.mrb[0].mxu0
      %v1144 = vadd.f32 0.0, %v1143
      %v1145 = vpop.f32.mrb[0].mxu0
      %v1146 = vpop.f32.mrb[0].mxu0
      %v1147 = vadd.f32 0.0, %v1146
      %v1148 = vpop.f32.mrb[0].mxu0
      %1149 = vdwg.mxu0
      %1152 = vrot.lane.b32.xlu0 %v909, 96
      %v1153 = vpop.permute.xlu0 %1152
      %1154 = vrot.lane.b32.xlu0 %v913, 96
      %v1155 = vpop.permute.xlu0 %1154
      %1158 = vxpose.xlu0.b32.start [1/16] %v1153, 128
      %1159 = vxpose.xlu0.b32.cont [2/16] %v1155, 128
      %1160 = vxpose.xlu0.b32.cont [3/16] 0.0, 128
      %1161 = vxpose.xlu0.b32.cont [4/16] 0.0, 128
      %1162 = vxpose.xlu0.b32.cont [5/16] 0.0, 128
      %1163 = vxpose.xlu0.b32.cont [6/16] 0.0, 128
      %1164 = vxpose.xlu0.b32.cont [7/16] 0.0, 128
      %1165 = vxpose.xlu0.b32.cont [8/16] 0.0, 128
      %1166 = vxpose.xlu0.b32.cont [9/16] 0.0, 128
      %1167 = vxpose.xlu0.b32.cont [10/16] 0.0, 128
      %1168 = vxpose.xlu0.b32.cont [11/16] 0.0, 128
      %1169 = vxpose.xlu0.b32.cont [12/16] 0.0, 128
      %1170 = vxpose.xlu0.b32.cont [13/16] 0.0, 128
      %1171 = vxpose.xlu0.b32.cont [14/16] 0.0, 128
      %1172 = vxpose.xlu0.b32.cont [15/16] 0.0, 128
      %1173 = vxpose.xlu0.b32.end [16/16] 0.0, 128
      %v1174 = vpop.trf.xlu0
      %v1175 = vpop.trf.xlu0
      %v1176 = vpop.trf.xlu0
      %v1177 = vpop.trf.xlu0
      %v1178 = vpop.trf.xlu0
      %v1179 = vpop.trf.xlu0
      %v1180 = vpop.trf.xlu0
      %v1181 = vpop.trf.xlu0
      %v1182 = vpop.trf.xlu0
      %v1183 = vpop.trf.xlu0
      %v1184 = vpop.trf.xlu0
      %v1185 = vpop.trf.xlu0
      %v1186 = vpop.trf.xlu0
      %v1187 = vpop.trf.xlu0
      %v1188 = vpop.trf.xlu0
      %v1189 = vpop.trf.xlu0
      %v1190 = vpack.c.bf16 %v1175, %v1174
      %v1191 = vpack.c.bf16 %v1177, %v1176
      %1193 = vrot.lane.b32.xlu0 %v1030, 96
      %v1194 = vpop.permute.xlu0 %1193
      %v1196 = vsel %vm290, %v1194, 0
      %1198 = vmatprep.subr.bf16.mxu0 0
      %1199 = vmatpush1.bf16.msra.mxu0 %v1190
      %1200 = vmatprep.subr.bf16.mxu0 0
      %1201 = vmatpush1.bf16.msra.mxu0 %v1191
      %1202 = vmatprep.subr.bf16.mxu0 0
      %1203 = vmatpush1.bf16.msra.mxu0 0
      %1204 = vmatprep.subr.bf16.mxu0 0
      %1205 = vmatpush1.bf16.msra.mxu0 0
      %1206 = vmatprep.subr.bf16.mxu0 0
      %1207 = vmatpush1.bf16.msra.mxu0 0
      %1208 = vmatprep.subr.bf16.mxu0 0
      %1209 = vmatpush1.bf16.msra.mxu0 0
      %1210 = vmatprep.subr.bf16.mxu0 0
      %1211 = vmatpush1.bf16.msra.mxu0 0
      %1212 = vmatprep.subr.bf16.mxu0 0
      %1213 = vmatpush1.bf16.msra.mxu0 0
      %1214 = vmatprep.subr.bf16.mxu0 0
      %1215 = vmatpush1.bf16.msra.mxu0 0
      %1216 = vmatprep.subr.bf16.mxu0 0
      %1217 = vmatpush1.bf16.msra.mxu0 0
      %1218 = vmatprep.subr.bf16.mxu0 0
      %1219 = vmatpush1.bf16.msra.mxu0 0
      %1220 = vmatprep.subr.bf16.mxu0 0
      %1221 = vmatpush1.bf16.msra.mxu0 0
      %1222 = vmatprep.subr.bf16.mxu0 0
      %1223 = vmatpush1.bf16.msra.mxu0 0
      %1224 = vmatprep.subr.bf16.mxu0 0
      %1225 = vmatpush1.bf16.msra.mxu0 0
      %1226 = vmatprep.subr.bf16.mxu0 0
      %1227 = vmatpush1.bf16.msra.mxu0 0
      %1228 = vmatprep.subr.bf16.mxu0 0
      %1229 = vmatpush1.bf16.msra.mxu0 0
      %1230 = vmatprep.mubr.bf16.mxu0 0
      %1231 = vmatmul.mubr.bf16.gmra.mrb[0].mxu0 %v1196
      %v1232 = vpop.f32.mrb[0].mxu0
      %v1233 = vadd.f32 0.0, %v1232
      %v1234 = vpop.f32.mrb[0].mxu0
      %v1235 = vpop.f32.mrb[0].mxu0
      %v1236 = vadd.f32 0.0, %v1235
      %v1237 = vpop.f32.mrb[0].mxu0
      %1238 = vdwg.mxu0
      %v1239 = vmul.f32 %v1233, 0.17677669
      %v1240 = vmul.f32 %v1236, 0.17677669
      %v1241 = vadd.f32 %v1239, %v979
      %v1242 = vadd.f32 %v1240, %v980
      %v1243 = vsel %vm1081, %v1241, -inf
      %1244 = vmax.xlane.f32.xlu0 %v1243
      %v1245 = vpop.xlane.xlu0 %1244
      %v1246 = vsel %vm1081, %v1242, -inf
      %1247 = vmax.xlane.f32.xlu0 %v1246
      %v1248 = vpop.xlane.xlu0 %1247
      %v1249 = vsub.f32 %v1241, %v1245
      %v1250 = vsub.f32 %v1242, %v1248
      %v1251 = vmul.f32 %v1249, 1.442695
      %v1252 = vpow.pop %v1251
      %v1253 = vmul.f32 %v1250, 1.442695
      %v1254 = vpow.pop %v1253
      %v1255 = vsel %vm1081, %v1252, 0.0
      %1256 = vadd.xlane.f32.xlu0 %v1255
      %v1257 = vpop.xlane.xlu0 %1256
      %v1258 = vsel %vm1081, %v1254, 0.0
      %1259 = vadd.xlane.f32.xlu0 %v1258
      %v1260 = vpop.xlane.xlu0 %1259
      %v1261 = vrcp.pop %v1257
      %v1262 = vrcp.pop %v1260
      %v1263 = vmul.f32 %v1252, %v1261
      %v1264 = vmul.f32 %v1254, %v1262
      %v1265 = vpack.c.bf16 %v1264, %v1263
      %1267 = vrot.lane.b32.xlu0 %v1105, 96
      %v1268 = vpop.permute.xlu0 %1267
      %v1271 = vsel %vm1081, %v1265, 0
      %1273 = vmatprep.subr.bf16.mxu0 0
      %1274 = vmatpush1.bf16.msra.mxu0 %v1268
      %1275 = vmatprep.subr.bf16.mxu0 0
      %1276 = vmatpush1.bf16.msra.mxu0 0
      %1277 = vmatprep.subr.bf16.mxu0 0
      %1278 = vmatpush1.bf16.msra.mxu0 0
      %1279 = vmatprep.subr.bf16.mxu0 0
      %1280 = vmatpush1.bf16.msra.mxu0 0
      %1281 = vmatprep.subr.bf16.mxu0 0
      %1282 = vmatpush1.bf16.msra.mxu0 0
      %1283 = vmatprep.subr.bf16.mxu0 0
      %1284 = vmatpush1.bf16.msra.mxu0 0
      %1285 = vmatprep.subr.bf16.mxu0 0
      %1286 = vmatpush1.bf16.msra.mxu0 0
      %1287 = vmatprep.subr.bf16.mxu0 0
      %1288 = vmatpush1.bf16.msra.mxu0 0
      %1289 = vmatprep.subr.bf16.mxu0 0
      %1290 = vmatpush1.bf16.msra.mxu0 0
      %1291 = vmatprep.subr.bf16.mxu0 0
      %1292 = vmatpush1.bf16.msra.mxu0 0
      %1293 = vmatprep.subr.bf16.mxu0 0
      %1294 = vmatpush1.bf16.msra.mxu0 0
      %1295 = vmatprep.subr.bf16.mxu0 0
      %1296 = vmatpush1.bf16.msra.mxu0 0
      %1297 = vmatprep.subr.bf16.mxu0 0
      %1298 = vmatpush1.bf16.msra.mxu0 0
      %1299 = vmatprep.subr.bf16.mxu0 0
      %1300 = vmatpush1.bf16.msra.mxu0 0
      %1301 = vmatprep.subr.bf16.mxu0 0
      %1302 = vmatpush1.bf16.msra.mxu0 0
      %1303 = vmatprep.subr.bf16.mxu0 0
      %1304 = vmatpush1.bf16.msra.mxu0 0
      %1305 = vmatprep.mubr.bf16.mxu0 0
      %1306 = vmatmul.mubr.bf16.gmra.mrb[0].mxu0 %v1271
      %v1307 = vpop.f32.mrb[0].mxu0
      %v1308 = vadd.f32 0.0, %v1307
      %v1309 = vpop.f32.mrb[0].mxu0
      %v1310 = vpop.f32.mrb[0].mxu0
      %v1311 = vadd.f32 0.0, %v1310
      %v1312 = vpop.f32.mrb[0].mxu0
      %1313 = vdwg.mxu0
      %1314 = vrot.lane.b32.xlu0 %v909, 64
      %v1315 = vpop.permute.xlu0 %1314
      %1316 = vrot.lane.b32.xlu0 %v913, 64
      %v1317 = vpop.permute.xlu0 %1316
      %1320 = vxpose.xlu0.b32.start [1/16] %v1315, 128
      %1321 = vxpose.xlu0.b32.cont [2/16] %v1317, 128
      %1322 = vxpose.xlu0.b32.cont [3/16] 0.0, 128
      %1323 = vxpose.xlu0.b32.cont [4/16] 0.0, 128
      %1324 = vxpose.xlu0.b32.cont [5/16] 0.0, 128
      %1325 = vxpose.xlu0.b32.cont [6/16] 0.0, 128
      %1326 = vxpose.xlu0.b32.cont [7/16] 0.0, 128
      %1327 = vxpose.xlu0.b32.cont [8/16] 0.0, 128
      %1328 = vxpose.xlu0.b32.cont [9/16] 0.0, 128
      %1329 = vxpose.xlu0.b32.cont [10/16] 0.0, 128
      %1330 = vxpose.xlu0.b32.cont [11/16] 0.0, 128
      %1331 = vxpose.xlu0.b32.cont [12/16] 0.0, 128
      %1332 = vxpose.xlu0.b32.cont [13/16] 0.0, 128
      %1333 = vxpose.xlu0.b32.cont [14/16] 0.0, 128
      %1334 = vxpose.xlu0.b32.cont [15/16] 0.0, 128
      %1335 = vxpose.xlu0.b32.end [16/16] 0.0, 128
      %v1336 = vpop.trf.xlu0
      %v1337 = vpop.trf.xlu0
      %v1338 = vpop.trf.xlu0
      %v1339 = vpop.trf.xlu0
      %v1340 = vpop.trf.xlu0
      %v1341 = vpop.trf.xlu0
      %v1342 = vpop.trf.xlu0
      %v1343 = vpop.trf.xlu0
      %v1344 = vpop.trf.xlu0
      %v1345 = vpop.trf.xlu0
      %v1346 = vpop.trf.xlu0
      %v1347 = vpop.trf.xlu0
      %v1348 = vpop.trf.xlu0
      %v1349 = vpop.trf.xlu0
      %v1350 = vpop.trf.xlu0
      %v1351 = vpop.trf.xlu0
      %v1352 = vpack.c.bf16 %v1337, %v1336
      %v1353 = vpack.c.bf16 %v1339, %v1338
      %1354 = vrot.lane.b32.xlu0 %v1030, 64
      %v1355 = vpop.permute.xlu0 %1354
      %v1357 = vsel %vm290, %v1355, 0
      %1359 = vmatprep.subr.bf16.mxu0 0
      %1360 = vmatpush1.bf16.msra.mxu0 %v1352
      %1361 = vmatprep.subr.bf16.mxu0 0
      %1362 = vmatpush1.bf16.msra.mxu0 %v1353
      %1363 = vmatprep.subr.bf16.mxu0 0
      %1364 = vmatpush1.bf16.msra.mxu0 0
      %1365 = vmatprep.subr.bf16.mxu0 0
      %1366 = vmatpush1.bf16.msra.mxu0 0
      %1367 = vmatprep.subr.bf16.mxu0 0
      %1368 = vmatpush1.bf16.msra.mxu0 0
      %1369 = vmatprep.subr.bf16.mxu0 0
      %1370 = vmatpush1.bf16.msra.mxu0 0
      %1371 = vmatprep.subr.bf16.mxu0 0
      %1372 = vmatpush1.bf16.msra.mxu0 0
      %1373 = vmatprep.subr.bf16.mxu0 0
      %1374 = vmatpush1.bf16.msra.mxu0 0
      %1375 = vmatprep.subr.bf16.mxu0 0
      %1376 = vmatpush1.bf16.msra.mxu0 0
      %1377 = vmatprep.subr.bf16.mxu0 0
      %1378 = vmatpush1.bf16.msra.mxu0 0
      %1379 = vmatprep.subr.bf16.mxu0 0
      %1380 = vmatpush1.bf16.msra.mxu0 0
      %1381 = vmatprep.subr.bf16.mxu0 0
      %1382 = vmatpush1.bf16.msra.mxu0 0
      %1383 = vmatprep.subr.bf16.mxu0 0
      %1384 = vmatpush1.bf16.msra.mxu0 0
      %1385 = vmatprep.subr.bf16.mxu0 0
      %1386 = vmatpush1.bf16.msra.mxu0 0
      %1387 = vmatprep.subr.bf16.mxu0 0
      %1388 = vmatpush1.bf16.msra.mxu0 0
      %1389 = vmatprep.subr.bf16.mxu0 0
      %1390 = vmatpush1.bf16.msra.mxu0 0
      %1391 = vmatprep.mubr.bf16.mxu0 0
      %1392 = vmatmul.mubr.bf16.gmra.mrb[0].mxu0 %v1357
      %v1393 = vpop.f32.mrb[0].mxu0
      %v1394 = vadd.f32 0.0, %v1393
      %v1395 = vpop.f32.mrb[0].mxu0
      %v1396 = vpop.f32.mrb[0].mxu0
      %v1397 = vadd.f32 0.0, %v1396
      %v1398 = vpop.f32.mrb[0].mxu0
      %1399 = vdwg.mxu0
      %v1400 = vmul.f32 %v1394, 0.17677669
      %v1401 = vmul.f32 %v1397, 0.17677669
      %v1402 = vadd.f32 %v1400, %v979
      %v1403 = vadd.f32 %v1401, %v980
      %v1404 = vsel %vm1081, %v1402, -inf
      %1405 = vmax.xlane.f32.xlu0 %v1404
      %v1406 = vpop.xlane.xlu0 %1405
      %v1407 = vsel %vm1081, %v1403, -inf
      %1408 = vmax.xlane.f32.xlu0 %v1407
      %v1409 = vpop.xlane.xlu0 %1408
      %v1410 = vsub.f32 %v1402, %v1406
      %v1411 = vsub.f32 %v1403, %v1409
      %v1412 = vmul.f32 %v1410, 1.442695
      %v1413 = vpow.pop %v1412
      %v1414 = vmul.f32 %v1411, 1.442695
      %v1415 = vpow.pop %v1414
      %v1416 = vsel %vm1081, %v1413, 0.0
      %1417 = vadd.xlane.f32.xlu0 %v1416
      %v1418 = vpop.xlane.xlu0 %1417
      %v1419 = vsel %vm1081, %v1415, 0.0
      %1420 = vadd.xlane.f32.xlu0 %v1419
      %v1421 = vpop.xlane.xlu0 %1420
      %v1422 = vrcp.pop %v1418
      %v1423 = vrcp.pop %v1421
      %v1424 = vmul.f32 %v1413, %v1422
      %v1425 = vmul.f32 %v1415, %v1423
      %v1426 = vpack.c.bf16 %v1425, %v1424
      %1427 = vrot.lane.b32.xlu0 %v1105, 64
      %v1428 = vpop.permute.xlu0 %1427
      %v1431 = vsel %vm1081, %v1426, 0
      %1433 = vmatprep.subr.bf16.mxu0 0
      %1434 = vmatpush1.bf16.msra.mxu0 %v1428
      %1435 = vmatprep.subr.bf16.mxu0 0
      %1436 = vmatpush1.bf16.msra.mxu0 0
      %1437 = vmatprep.subr.bf16.mxu0 0
      %1438 = vmatpush1.bf16.msra.mxu0 0
      %1439 = vmatprep.subr.bf16.mxu0 0
      %1440 = vmatpush1.bf16.msra.mxu0 0
      %1441 = vmatprep.subr.bf16.mxu0 0
      %1442 = vmatpush1.bf16.msra.mxu0 0
      %1443 = vmatprep.subr.bf16.mxu0 0
      %1444 = vmatpush1.bf16.msra.mxu0 0
      %1445 = vmatprep.subr.bf16.mxu0 0
      %1446 = vmatpush1.bf16.msra.mxu0 0
      %1447 = vmatprep.subr.bf16.mxu0 0
      %1448 = vmatpush1.bf16.msra.mxu0 0
      %1449 = vmatprep.subr.bf16.mxu0 0
      %1450 = vmatpush1.bf16.msra.mxu0 0
      %1451 = vmatprep.subr.bf16.mxu0 0
      %1452 = vmatpush1.bf16.msra.mxu0 0
      %1453 = vmatprep.subr.bf16.mxu0 0
      %1454 = vmatpush1.bf16.msra.mxu0 0
      %1455 = vmatprep.subr.bf16.mxu0 0
      %1456 = vmatpush1.bf16.msra.mxu0 0
      %1457 = vmatprep.subr.bf16.mxu0 0
      %1458 = vmatpush1.bf16.msra.mxu0 0
      %1459 = vmatprep.subr.bf16.mxu0 0
      %1460 = vmatpush1.bf16.msra.mxu0 0
      %1461 = vmatprep.subr.bf16.mxu0 0
      %1462 = vmatpush1.bf16.msra.mxu0 0
      %1463 = vmatprep.subr.bf16.mxu0 0
      %1464 = vmatpush1.bf16.msra.mxu0 0
      %1465 = vmatprep.mubr.bf16.mxu0 0
      %1466 = vmatmul.mubr.bf16.gmra.mrb[0].mxu0 %v1431
      %v1467 = vpop.f32.mrb[0].mxu0
      %v1468 = vadd.f32 0.0, %v1467
      %v1469 = vpop.f32.mrb[0].mxu0
      %v1470 = vpop.f32.mrb[0].mxu0
      %v1471 = vadd.f32 0.0, %v1470
      %v1472 = vpop.f32.mrb[0].mxu0
      %1473 = vdwg.mxu0
      %1474 = vrot.lane.b32.xlu0 %v909, 32
      %v1475 = vpop.permute.xlu0 %1474
      %1476 = vrot.lane.b32.xlu0 %v913, 32
      %v1477 = vpop.permute.xlu0 %1476
      %1480 = vxpose.xlu0.b32.start [1/16] %v1475, 128
      %1481 = vxpose.xlu0.b32.cont [2/16] %v1477, 128
      %1482 = vxpose.xlu0.b32.cont [3/16] 0.0, 128
      %1483 = vxpose.xlu0.b32.cont [4/16] 0.0, 128
      %1484 = vxpose.xlu0.b32.cont [5/16] 0.0, 128
      %1485 = vxpose.xlu0.b32.cont [6/16] 0.0, 128
      %1486 = vxpose.xlu0.b32.cont [7/16] 0.0, 128
      %1487 = vxpose.xlu0.b32.cont [8/16] 0.0, 128
      %1488 = vxpose.xlu0.b32.cont [9/16] 0.0, 128
      %1489 = vxpose.xlu0.b32.cont [10/16] 0.0, 128
      %1490 = vxpose.xlu0.b32.cont [11/16] 0.0, 128
      %1491 = vxpose.xlu0.b32.cont [12/16] 0.0, 128
      %1492 = vxpose.xlu0.b32.cont [13/16] 0.0, 128
      %1493 = vxpose.xlu0.b32.cont [14/16] 0.0, 128
      %1494 = vxpose.xlu0.b32.cont [15/16] 0.0, 128
      %1495 = vxpose.xlu0.b32.end [16/16] 0.0, 128
      %v1496 = vpop.trf.xlu0
      %v1497 = vpop.trf.xlu0
      %v1498 = vpop.trf.xlu0
      %v1499 = vpop.trf.xlu0
      %v1500 = vpop.trf.xlu0
      %v1501 = vpop.trf.xlu0
      %v1502 = vpop.trf.xlu0
      %v1503 = vpop.trf.xlu0
      %v1504 = vpop.trf.xlu0
      %v1505 = vpop.trf.xlu0
      %v1506 = vpop.trf.xlu0
      %v1507 = vpop.trf.xlu0
      %v1508 = vpop.trf.xlu0
      %v1509 = vpop.trf.xlu0
      %v1510 = vpop.trf.xlu0
      %v1511 = vpop.trf.xlu0
      %v1512 = vpack.c.bf16 %v1497, %v1496
      %v1513 = vpack.c.bf16 %v1499, %v1498
      %1514 = vrot.lane.b32.xlu0 %v1030, 32
      %v1515 = vpop.permute.xlu0 %1514
      %v1517 = vsel %vm290, %v1515, 0
      %1519 = vmatprep.subr.bf16.mxu0 0
      %1520 = vmatpush1.bf16.msra.mxu0 %v1512
      %1521 = vmatprep.subr.bf16.mxu0 0
      %1522 = vmatpush1.bf16.msra.mxu0 %v1513
      %1523 = vmatprep.subr.bf16.mxu0 0
      %1524 = vmatpush1.bf16.msra.mxu0 0
      %1525 = vmatprep.subr.bf16.mxu0 0
      %1526 = vmatpush1.bf16.msra.mxu0 0
      %1527 = vmatprep.subr.bf16.mxu0 0
      %1528 = vmatpush1.bf16.msra.mxu0 0
      %1529 = vmatprep.subr.bf16.mxu0 0
      %1530 = vmatpush1.bf16.msra.mxu0 0
      %1531 = vmatprep.subr.bf16.mxu0 0
      %1532 = vmatpush1.bf16.msra.mxu0 0
      %1533 = vmatprep.subr.bf16.mxu0 0
      %1534 = vmatpush1.bf16.msra.mxu0 0
      %1535 = vmatprep.subr.bf16.mxu0 0
      %1536 = vmatpush1.bf16.msra.mxu0 0
      %1537 = vmatprep.subr.bf16.mxu0 0
      %1538 = vmatpush1.bf16.msra.mxu0 0
      %1539 = vmatprep.subr.bf16.mxu0 0
      %1540 = vmatpush1.bf16.msra.mxu0 0
      %1541 = vmatprep.subr.bf16.mxu0 0
      %1542 = vmatpush1.bf16.msra.mxu0 0
      %1543 = vmatprep.subr.bf16.mxu0 0
      %1544 = vmatpush1.bf16.msra.mxu0 0
      %1545 = vmatprep.subr.bf16.mxu0 0
      %1546 = vmatpush1.bf16.msra.mxu0 0
      %1547 = vmatprep.subr.bf16.mxu0 0
      %1548 = vmatpush1.bf16.msra.mxu0 0
      %1549 = vmatprep.subr.bf16.mxu0 0
      %1550 = vmatpush1.bf16.msra.mxu0 0
      %1551 = vmatprep.mubr.bf16.mxu0 0
      %1552 = vmatmul.mubr.bf16.gmra.mrb[0].mxu0 %v1517
      %v1553 = vpop.f32.mrb[0].mxu0
      %v1554 = vadd.f32 0.0, %v1553
      %v1555 = vpop.f32.mrb[0].mxu0
      %v1556 = vpop.f32.mrb[0].mxu0
      %v1557 = vadd.f32 0.0, %v1556
      %v1558 = vpop.f32.mrb[0].mxu0
      %1559 = vdwg.mxu0
      %v1560 = vmul.f32 %v1554, 0.17677669
      %v1561 = vmul.f32 %v1557, 0.17677669
      %v1562 = vadd.f32 %v1560, %v979
      %v1563 = vadd.f32 %v1561, %v980
      %v1564 = vsel %vm1081, %v1562, -inf
      %1565 = vmax.xlane.f32.xlu0 %v1564
      %v1566 = vpop.xlane.xlu0 %1565
      %v1567 = vsel %vm1081, %v1563, -inf
      %1568 = vmax.xlane.f32.xlu0 %v1567
      %v1569 = vpop.xlane.xlu0 %1568
      %v1570 = vsub.f32 %v1562, %v1566
      %v1571 = vsub.f32 %v1563, %v1569
      %v1572 = vmul.f32 %v1570, 1.442695
      %v1573 = vpow.pop %v1572
      %v1574 = vmul.f32 %v1571, 1.442695
      %v1575 = vpow.pop %v1574
      %v1576 = vsel %vm1081, %v1573, 0.0
      %1577 = vadd.xlane.f32.xlu0 %v1576
      %v1578 = vpop.xlane.xlu0 %1577
      %v1579 = vsel %vm1081, %v1575, 0.0
      %1580 = vadd.xlane.f32.xlu0 %v1579
      %v1581 = vpop.xlane.xlu0 %1580
      %v1582 = vrcp.pop %v1578
      %v1583 = vrcp.pop %v1581
      %v1584 = vmul.f32 %v1573, %v1582
      %v1585 = vmul.f32 %v1575, %v1583
      %v1586 = vpack.c.bf16 %v1585, %v1584
      %1587 = vrot.lane.b32.xlu0 %v1105, 32
      %v1588 = vpop.permute.xlu0 %1587
      %v1591 = vsel %vm1081, %v1586, 0
      %1593 = vmatprep.subr.bf16.mxu0 0
      %1594 = vmatpush1.bf16.msra.mxu0 %v1588
      %1595 = vmatprep.subr.bf16.mxu0 0
      %1596 = vmatpush1.bf16.msra.mxu0 0
      %1597 = vmatprep.subr.bf16.mxu0 0
      %1598 = vmatpush1.bf16.msra.mxu0 0
      %1599 = vmatprep.subr.bf16.mxu0 0
      %1600 = vmatpush1.bf16.msra.mxu0 0
      %1601 = vmatprep.subr.bf16.mxu0 0
      %1602 = vmatpush1.bf16.msra.mxu0 0
      %1603 = vmatprep.subr.bf16.mxu0 0
      %1604 = vmatpush1.bf16.msra.mxu0 0
      %1605 = vmatprep.subr.bf16.mxu0 0
      %1606 = vmatpush1.bf16.msra.mxu0 0
      %1607 = vmatprep.subr.bf16.mxu0 0
      %1608 = vmatpush1.bf16.msra.mxu0 0
      %1609 = vmatprep.subr.bf16.mxu0 0
      %1610 = vmatpush1.bf16.msra.mxu0 0
      %1611 = vmatprep.subr.bf16.mxu0 0
      %1612 = vmatpush1.bf16.msra.mxu0 0
      %1613 = vmatprep.subr.bf16.mxu0 0
      %1614 = vmatpush1.bf16.msra.mxu0 0
      %1615 = vmatprep.subr.bf16.mxu0 0
      %1616 = vmatpush1.bf16.msra.mxu0 0
      %1617 = vmatprep.subr.bf16.mxu0 0
      %1618 = vmatpush1.bf16.msra.mxu0 0
      %1619 = vmatprep.subr.bf16.mxu0 0
      %1620 = vmatpush1.bf16.msra.mxu0 0
      %1621 = vmatprep.subr.bf16.mxu0 0
      %1622 = vmatpush1.bf16.msra.mxu0 0
      %1623 = vmatprep.subr.bf16.mxu0 0
      %1624 = vmatpush1.bf16.msra.mxu0 0
      %1625 = vmatprep.mubr.bf16.mxu0 0
      %1626 = vmatmul.mubr.bf16.gmra.mrb[0].mxu0 %v1591
      %v1627 = vpop.f32.mrb[0].mxu0
      %v1628 = vadd.f32 0.0, %v1627
      %v1629 = vpop.f32.mrb[0].mxu0
      %v1630 = vpop.f32.mrb[0].mxu0
      %v1631 = vadd.f32 0.0, %v1630
      %v1632 = vpop.f32.mrb[0].mxu0
      %1633 = vdwg.mxu0
      %1636 = vrot.lane.b32.xlu0 %v1308, 32
      %v1637 = vpop.permute.xlu0 %1636
      %1638 = vrot.lane.b32.xlu0 %v1311, 32
      %v1639 = vpop.permute.xlu0 %1638
      %1644 = vrot.lane.b32.xlu0 %v1468, 64
      %v1645 = vpop.permute.xlu0 %1644
      %1646 = vrot.lane.b32.xlu0 %v1471, 64
      %v1647 = vpop.permute.xlu0 %1646
      %1652 = vrot.lane.b32.xlu0 %v1628, 96
      %v1653 = vpop.permute.xlu0 %1652
      %1654 = vrot.lane.b32.xlu0 %v1631, 96
      %v1655 = vpop.permute.xlu0 %1654
      %v1658 = vsel %vm290, %v1144, %v1637
      %v1659 = vsel %vm290, %v1147, %v1639
      %v1660 = vsel %vm451, %v1658, %v1645
      %v1661 = vsel %vm451, %v1659, %v1647
      %vm1662 = vcmask 785408
      %v1663 = vsel %vm1662, %v1660, %v1653
      %v1664 = vsel %vm1662, %v1661, %v1655
      %1665 = vxpose.xlu0.b32.start [1/16] %v899, 128
      %1666 = vxpose.xlu0.b32.cont [2/16] %v903, 128
      %1667 = vxpose.xlu0.b32.cont [3/16] 0.0, 128
      %1668 = vxpose.xlu0.b32.cont [4/16] 0.0, 128
      %1669 = vxpose.xlu0.b32.cont [5/16] 0.0, 128
      %1670 = vxpose.xlu0.b32.cont [6/16] 0.0, 128
      %1671 = vxpose.xlu0.b32.cont [7/16] 0.0, 128
      %1672 = vxpose.xlu0.b32.cont [8/16] 0.0, 128
      %1673 = vxpose.xlu0.b32.cont [9/16] 0.0, 128
      %1674 = vxpose.xlu0.b32.cont [10/16] 0.0, 128
      %1675 = vxpose.xlu0.b32.cont [11/16] 0.0, 128
      %1676 = vxpose.xlu0.b32.cont [12/16] 0.0, 128
      %1677 = vxpose.xlu0.b32.cont [13/16] 0.0, 128
      %1678 = vxpose.xlu0.b32.cont [14/16] 0.0, 128
      %1679 = vxpose.xlu0.b32.cont [15/16] 0.0, 128
      %1680 = vxpose.xlu0.b32.end [16/16] 0.0, 128
      %v1681 = vpop.trf.xlu0
      %v1682 = vpop.trf.xlu0
      %v1683 = vpop.trf.xlu0
      %v1684 = vpop.trf.xlu0
      %v1685 = vpop.trf.xlu0
      %v1686 = vpop.trf.xlu0
      %v1687 = vpop.trf.xlu0
      %v1688 = vpop.trf.xlu0
      %v1689 = vpop.trf.xlu0
      %v1690 = vpop.trf.xlu0
      %v1691 = vpop.trf.xlu0
      %v1692 = vpop.trf.xlu0
      %v1693 = vpop.trf.xlu0
      %v1694 = vpop.trf.xlu0
      %v1695 = vpop.trf.xlu0
      %v1696 = vpop.trf.xlu0
      %v1697 = vpack.c.bf16 %v911, %v907
      %v1698 = vpack.c.bf16 %v1682, %v1681
      %v1699 = vpack.c.bf16 %v1684, %v1683
      %v1701 = vsel %vm290, %v1697, 0
      %1703 = vmatprep.subr.bf16.mxu0 0
      %1704 = vmatpush1.bf16.msra.mxu0 %v1698
      %1705 = vmatprep.subr.bf16.mxu0 0
      %1706 = vmatpush1.bf16.msra.mxu0 %v1699
      %1707 = vmatprep.subr.bf16.mxu0 0
      %1708 = vmatpush1.bf16.msra.mxu0 0
      %1709 = vmatprep.subr.bf16.mxu0 0
      %1710 = vmatpush1.bf16.msra.mxu0 0
      %1711 = vmatprep.subr.bf16.mxu0 0
      %1712 = vmatpush1.bf16.msra.mxu0 0
      %1713 = vmatprep.subr.bf16.mxu0 0
      %1714 = vmatpush1.bf16.msra.mxu0 0
      %1715 = vmatprep.subr.bf16.mxu0 0
      %1716 = vmatpush1.bf16.msra.mxu0 0
      %1717 = vmatprep.subr.bf16.mxu0 0
      %1718 = vmatpush1.bf16.msra.mxu0 0
      %1719 = vmatprep.subr.bf16.mxu0 0
      %1720 = vmatpush1.bf16.msra.mxu0 0
      %1721 = vmatprep.subr.bf16.mxu0 0
      %1722 = vmatpush1.bf16.msra.mxu0 0
      %1723 = vmatprep.subr.bf16.mxu0 0
      %1724 = vmatpush1.bf16.msra.mxu0 0
      %1725 = vmatprep.subr.bf16.mxu0 0
      %1726 = vmatpush1.bf16.msra.mxu0 0
      %1727 = vmatprep.subr.bf16.mxu0 0
      %1728 = vmatpush1.bf16.msra.mxu0 0
      %1729 = vmatprep.subr.bf16.mxu0 0
      %1730 = vmatpush1.bf16.msra.mxu0 0
      %1731 = vmatprep.subr.bf16.mxu0 0
      %1732 = vmatpush1.bf16.msra.mxu0 0
      %1733 = vmatprep.subr.bf16.mxu0 0
      %1734 = vmatpush1.bf16.msra.mxu0 0
      %1735 = vmatprep.mubr.bf16.mxu0 0
      %1736 = vmatmul.mubr.bf16.gmra.mrb[0].mxu0 %v1701
      %v1737 = vpop.f32.mrb[0].mxu0
      %v1738 = vadd.f32 0.0, %v1737
      %v1739 = vpop.f32.mrb[0].mxu0
      %v1740 = vpop.f32.mrb[0].mxu0
      %v1741 = vadd.f32 0.0, %v1740
      %v1742 = vpop.f32.mrb[0].mxu0
      %1743 = vdwg.mxu0
      %v1744 = vmul.f32 %v1738, 0.17677669
      %v1745 = vmul.f32 %v1741, 0.17677669
      %v1746 = vadd.f32 %v1744, %v996
      %v1747 = vadd.f32 %v1745, %v997
      %v1748 = vsel %vm1081, %v1746, -inf
      %1749 = vmax.xlane.f32.xlu0 %v1748
      %v1750 = vpop.xlane.xlu0 %1749
      %v1751 = vsel %vm1081, %v1747, -inf
      %1752 = vmax.xlane.f32.xlu0 %v1751
      %v1753 = vpop.xlane.xlu0 %1752
      %v1754 = vsub.f32 %v1746, %v1750
      %v1755 = vsub.f32 %v1747, %v1753
      %v1756 = vmul.f32 %v1754, 1.442695
      %v1757 = vpow.pop %v1756
      %v1758 = vmul.f32 %v1755, 1.442695
      %v1759 = vpow.pop %v1758
      %v1760 = vsel %vm1081, %v1757, 0.0
      %1761 = vadd.xlane.f32.xlu0 %v1760
      %v1762 = vpop.xlane.xlu0 %1761
      %v1763 = vsel %vm1081, %v1759, 0.0
      %1764 = vadd.xlane.f32.xlu0 %v1763
      %v1765 = vpop.xlane.xlu0 %1764
      %v1766 = vrcp.pop %v1762
      %v1767 = vrcp.pop %v1765
      %v1768 = vmul.f32 %v1757, %v1766
      %v1769 = vmul.f32 %v1759, %v1767
      %v1770 = vpack.c.bf16 %v1769, %v1768
      %v1771 = vpack.c.bf16 %v953, %v950
      %v1773 = vsel %vm1081, %v1770, 0
      %1775 = vmatprep.subr.bf16.mxu0 0
      %1776 = vmatpush1.bf16.msra.mxu0 %v1771
      %1777 = vmatprep.subr.bf16.mxu0 0
      %1778 = vmatpush1.bf16.msra.mxu0 0
      %1779 = vmatprep.subr.bf16.mxu0 0
      %1780 = vmatpush1.bf16.msra.mxu0 0
      %1781 = vmatprep.subr.bf16.mxu0 0
      %1782 = vmatpush1.bf16.msra.mxu0 0
      %1783 = vmatprep.subr.bf16.mxu0 0
      %1784 = vmatpush1.bf16.msra.mxu0 0
      %1785 = vmatprep.subr.bf16.mxu0 0
      %1786 = vmatpush1.bf16.msra.mxu0 0
      %1787 = vmatprep.subr.bf16.mxu0 0
      %1788 = vmatpush1.bf16.msra.mxu0 0
      %1789 = vmatprep.subr.bf16.mxu0 0
      %1790 = vmatpush1.bf16.msra.mxu0 0
      %1791 = vmatprep.subr.bf16.mxu0 0
      %1792 = vmatpush1.bf16.msra.mxu0 0
      %1793 = vmatprep.subr.bf16.mxu0 0
      %1794 = vmatpush1.bf16.msra.mxu0 0
      %1795 = vmatprep.subr.bf16.mxu0 0
      %1796 = vmatpush1.bf16.msra.mxu0 0
      %1797 = vmatprep.subr.bf16.mxu0 0
      %1798 = vmatpush1.bf16.msra.mxu0 0
      %1799 = vmatprep.subr.bf16.mxu0 0
      %1800 = vmatpush1.bf16.msra.mxu0 0
      %1801 = vmatprep.subr.bf16.mxu0 0
      %1802 = vmatpush1.bf16.msra.mxu0 0
      %1803 = vmatprep.subr.bf16.mxu0 0
      %1804 = vmatpush1.bf16.msra.mxu0 0
      %1805 = vmatprep.subr.bf16.mxu0 0
      %1806 = vmatpush1.bf16.msra.mxu0 0
      %1807 = vmatprep.mubr.bf16.mxu0 0
      %1808 = vmatmul.mubr.bf16.gmra.mrb[0].mxu0 %v1773
      %v1809 = vpop.f32.mrb[0].mxu0
      %v1810 = vadd.f32 0.0, %v1809
      %v1811 = vpop.f32.mrb[0].mxu0
      %v1812 = vpop.f32.mrb[0].mxu0
      %v1813 = vadd.f32 0.0, %v1812
      %v1814 = vpop.f32.mrb[0].mxu0
      %1815 = vdwg.mxu0
      %1818 = vrot.lane.b32.xlu0 %v899, 96
      %v1819 = vpop.permute.xlu0 %1818
      %1820 = vrot.lane.b32.xlu0 %v903, 96
      %v1821 = vpop.permute.xlu0 %1820
      %1824 = vxpose.xlu0.b32.start [1/16] %v1819, 128
      %1825 = vxpose.xlu0.b32.cont [2/16] %v1821, 128
      %1826 = vxpose.xlu0.b32.cont [3/16] 0.0, 128
      %1827 = vxpose.xlu0.b32.cont [4/16] 0.0, 128
      %1828 = vxpose.xlu0.b32.cont [5/16] 0.0, 128
      %1829 = vxpose.xlu0.b32.cont [6/16] 0.0, 128
      %1830 = vxpose.xlu0.b32.cont [7/16] 0.0, 128
      %1831 = vxpose.xlu0.b32.cont [8/16] 0.0, 128
      %1832 = vxpose.xlu0.b32.cont [9/16] 0.0, 128
      %1833 = vxpose.xlu0.b32.cont [10/16] 0.0, 128
      %1834 = vxpose.xlu0.b32.cont [11/16] 0.0, 128
      %1835 = vxpose.xlu0.b32.cont [12/16] 0.0, 128
      %1836 = vxpose.xlu0.b32.cont [13/16] 0.0, 128
      %1837 = vxpose.xlu0.b32.cont [14/16] 0.0, 128
      %1838 = vxpose.xlu0.b32.cont [15/16] 0.0, 128
      %1839 = vxpose.xlu0.b32.end [16/16] 0.0, 128
      %v1840 = vpop.trf.xlu0
      %v1841 = vpop.trf.xlu0
      %v1842 = vpop.trf.xlu0
      %v1843 = vpop.trf.xlu0
      %v1844 = vpop.trf.xlu0
      %v1845 = vpop.trf.xlu0
      %v1846 = vpop.trf.xlu0
      %v1847 = vpop.trf.xlu0
      %v1848 = vpop.trf.xlu0
      %v1849 = vpop.trf.xlu0
      %v1850 = vpop.trf.xlu0
      %v1851 = vpop.trf.xlu0
      %v1852 = vpop.trf.xlu0
      %v1853 = vpop.trf.xlu0
      %v1854 = vpop.trf.xlu0
      %v1855 = vpop.trf.xlu0
      %v1856 = vpack.c.bf16 %v1841, %v1840
      %v1857 = vpack.c.bf16 %v1843, %v1842
      %1859 = vrot.lane.b32.xlu0 %v1697, 96
      %v1860 = vpop.permute.xlu0 %1859
      %v1862 = vsel %vm290, %v1860, 0
      %1864 = vmatprep.subr.bf16.mxu0 0
      %1865 = vmatpush1.bf16.msra.mxu0 %v1856
      %1866 = vmatprep.subr.bf16.mxu0 0
      %1867 = vmatpush1.bf16.msra.mxu0 %v1857
      %1868 = vmatprep.subr.bf16.mxu0 0
      %1869 = vmatpush1.bf16.msra.mxu0 0
      %1870 = vmatprep.subr.bf16.mxu0 0
      %1871 = vmatpush1.bf16.msra.mxu0 0
      %1872 = vmatprep.subr.bf16.mxu0 0
      %1873 = vmatpush1.bf16.msra.mxu0 0
      %1874 = vmatprep.subr.bf16.mxu0 0
      %1875 = vmatpush1.bf16.msra.mxu0 0
      %1876 = vmatprep.subr.bf16.mxu0 0
      %1877 = vmatpush1.bf16.msra.mxu0 0
      %1878 = vmatprep.subr.bf16.mxu0 0
      %1879 = vmatpush1.bf16.msra.mxu0 0
      %1880 = vmatprep.subr.bf16.mxu0 0
      %1881 = vmatpush1.bf16.msra.mxu0 0
      %1882 = vmatprep.subr.bf16.mxu0 0
      %1883 = vmatpush1.bf16.msra.mxu0 0
      %1884 = vmatprep.subr.bf16.mxu0 0
      %1885 = vmatpush1.bf16.msra.mxu0 0
      %1886 = vmatprep.subr.bf16.mxu0 0
      %1887 = vmatpush1.bf16.msra.mxu0 0
      %1888 = vmatprep.subr.bf16.mxu0 0
      %1889 = vmatpush1.bf16.msra.mxu0 0
      %1890 = vmatprep.subr.bf16.mxu0 0
      %1891 = vmatpush1.bf16.msra.mxu0 0
      %1892 = vmatprep.subr.bf16.mxu0 0
      %1893 = vmatpush1.bf16.msra.mxu0 0
      %1894 = vmatprep.subr.bf16.mxu0 0
      %1895 = vmatpush1.bf16.msra.mxu0 0
      %1896 = vmatprep.mubr.bf16.mxu0 0
      %1897 = vmatmul.mubr.bf16.gmra.mrb[0].mxu0 %v1862
      %v1898 = vpop.f32.mrb[0].mxu0
      %v1899 = vadd.f32 0.0, %v1898
      %v1900 = vpop.f32.mrb[0].mxu0
      %v1901 = vpop.f32.mrb[0].mxu0
      %v1902 = vadd.f32 0.0, %v1901
      %v1903 = vpop.f32.mrb[0].mxu0
      %1904 = vdwg.mxu0
      %v1905 = vmul.f32 %v1899, 0.17677669
      %v1906 = vmul.f32 %v1902, 0.17677669
      %v1907 = vadd.f32 %v1905, %v996
      %v1908 = vadd.f32 %v1906, %v997
      %v1909 = vsel %vm1081, %v1907, -inf
      %1910 = vmax.xlane.f32.xlu0 %v1909
      %v1911 = vpop.xlane.xlu0 %1910
      %v1912 = vsel %vm1081, %v1908, -inf
      %1913 = vmax.xlane.f32.xlu0 %v1912
      %v1914 = vpop.xlane.xlu0 %1913
      %v1915 = vsub.f32 %v1907, %v1911
      %v1916 = vsub.f32 %v1908, %v1914
      %v1917 = vmul.f32 %v1915, 1.442695
      %v1918 = vpow.pop %v1917
      %v1919 = vmul.f32 %v1916, 1.442695
      %v1920 = vpow.pop %v1919
      %v1921 = vsel %vm1081, %v1918, 0.0
      %1922 = vadd.xlane.f32.xlu0 %v1921
      %v1923 = vpop.xlane.xlu0 %1922
      %v1924 = vsel %vm1081, %v1920, 0.0
      %1925 = vadd.xlane.f32.xlu0 %v1924
      %v1926 = vpop.xlane.xlu0 %1925
      %v1927 = vrcp.pop %v1923
      %v1928 = vrcp.pop %v1926
      %v1929 = vmul.f32 %v1918, %v1927
      %v1930 = vmul.f32 %v1920, %v1928
      %v1931 = vpack.c.bf16 %v1930, %v1929
      %1933 = vrot.lane.b32.xlu0 %v1771, 96
      %v1934 = vpop.permute.xlu0 %1933
      %v1937 = vsel %vm1081, %v1931, 0
      %1939 = vmatprep.subr.bf16.mxu0 0
      %1940 = vmatpush1.bf16.msra.mxu0 %v1934
      %1941 = vmatprep.subr.bf16.mxu0 0
      %1942 = vmatpush1.bf16.msra.mxu0 0
      %1943 = vmatprep.subr.bf16.mxu0 0
      %1944 = vmatpush1.bf16.msra.mxu0 0
      %1945 = vmatprep.subr.bf16.mxu0 0
      %1946 = vmatpush1.bf16.msra.mxu0 0
      %1947 = vmatprep.subr.bf16.mxu0 0
      %1948 = vmatpush1.bf16.msra.mxu0 0
      %1949 = vmatprep.subr.bf16.mxu0 0
      %1950 = vmatpush1.bf16.msra.mxu0 0
      %1951 = vmatprep.subr.bf16.mxu0 0
      %1952 = vmatpush1.bf16.msra.mxu0 0
      %1953 = vmatprep.subr.bf16.mxu0 0
      %1954 = vmatpush1.bf16.msra.mxu0 0
      %1955 = vmatprep.subr.bf16.mxu0 0
      %1956 = vmatpush1.bf16.msra.mxu0 0
      %1957 = vmatprep.subr.bf16.mxu0 0
      %1958 = vmatpush1.bf16.msra.mxu0 0
      %1959 = vmatprep.subr.bf16.mxu0 0
      %1960 = vmatpush1.bf16.msra.mxu0 0
      %1961 = vmatprep.subr.bf16.mxu0 0
      %1962 = vmatpush1.bf16.msra.mxu0 0
      %1963 = vmatprep.subr.bf16.mxu0 0
      %1964 = vmatpush1.bf16.msra.mxu0 0
      %1965 = vmatprep.subr.bf16.mxu0 0
      %1966 = vmatpush1.bf16.msra.mxu0 0
      %1967 = vmatprep.subr.bf16.mxu0 0
      %1968 = vmatpush1.bf16.msra.mxu0 0
      %1969 = vmatprep.subr.bf16.mxu0 0
      %1970 = vmatpush1.bf16.msra.mxu0 0
      %1971 = vmatprep.mubr.bf16.mxu0 0
      %1972 = vmatmul.mubr.bf16.gmra.mrb[0].mxu0 %v1937
      %v1973 = vpop.f32.mrb[0].mxu0
      %v1974 = vadd.f32 0.0, %v1973
      %v1975 = vpop.f32.mrb[0].mxu0
      %v1976 = vpop.f32.mrb[0].mxu0
      %v1977 = vadd.f32 0.0, %v1976
      %v1978 = vpop.f32.mrb[0].mxu0
      %1979 = vdwg.mxu0
      %1980 = vrot.lane.b32.xlu0 %v899, 64
      %v1981 = vpop.permute.xlu0 %1980
      %1982 = vrot.lane.b32.xlu0 %v903, 64
      %v1983 = vpop.permute.xlu0 %1982
      %1986 = vxpose.xlu0.b32.start [1/16] %v1981, 128
      %1987 = vxpose.xlu0.b32.cont [2/16] %v1983, 128
      %1988 = vxpose.xlu0.b32.cont [3/16] 0.0, 128
      %1989 = vxpose.xlu0.b32.cont [4/16] 0.0, 128
      %1990 = vxpose.xlu0.b32.cont [5/16] 0.0, 128
      %1991 = vxpose.xlu0.b32.cont [6/16] 0.0, 128
      %1992 = vxpose.xlu0.b32.cont [7/16] 0.0, 128
      %1993 = vxpose.xlu0.b32.cont [8/16] 0.0, 128
      %1994 = vxpose.xlu0.b32.cont [9/16] 0.0, 128
      %1995 = vxpose.xlu0.b32.cont [10/16] 0.0, 128
      %1996 = vxpose.xlu0.b32.cont [11/16] 0.0, 128
      %1997 = vxpose.xlu0.b32.cont [12/16] 0.0, 128
      %1998 = vxpose.xlu0.b32.cont [13/16] 0.0, 128
      %1999 = vxpose.xlu0.b32.cont [14/16] 0.0, 128
      %2000 = vxpose.xlu0.b32.cont [15/16] 0.0, 128
      %2001 = vxpose.xlu0.b32.end [16/16] 0.0, 128
      %v2002 = vpop.trf.xlu0
      %v2003 = vpop.trf.xlu0
      %v2004 = vpop.trf.xlu0
      %v2005 = vpop.trf.xlu0
      %v2006 = vpop.trf.xlu0
      %v2007 = vpop.trf.xlu0
      %v2008 = vpop.trf.xlu0
      %v2009 = vpop.trf.xlu0
      %v2010 = vpop.trf.xlu0
      %v2011 = vpop.trf.xlu0
      %v2012 = vpop.trf.xlu0
      %v2013 = vpop.trf.xlu0
      %v2014 = vpop.trf.xlu0
      %v2015 = vpop.trf.xlu0
      %v2016 = vpop.trf.xlu0
      %v2017 = vpop.trf.xlu0
      %v2018 = vpack.c.bf16 %v2003, %v2002
      %v2019 = vpack.c.bf16 %v2005, %v2004
      %2020 = vrot.lane.b32.xlu0 %v1697, 64
      %v2021 = vpop.permute.xlu0 %2020
      %v2023 = vsel %vm290, %v2021, 0
      %2025 = vmatprep.subr.bf16.mxu0 0
      %2026 = vmatpush1.bf16.msra.mxu0 %v2018
      %2027 = vmatprep.subr.bf16.mxu0 0
      %2028 = vmatpush1.bf16.msra.mxu0 %v2019
      %2029 = vmatprep.subr.bf16.mxu0 0
      %2030 = vmatpush1.bf16.msra.mxu0 0
      %2031 = vmatprep.subr.bf16.mxu0 0
      %2032 = vmatpush1.bf16.msra.mxu0 0
      %2033 = vmatprep.subr.bf16.mxu0 0
      %2034 = vmatpush1.bf16.msra.mxu0 0
      %2035 = vmatprep.subr.bf16.mxu0 0
      %2036 = vmatpush1.bf16.msra.mxu0 0
      %2037 = vmatprep.subr.bf16.mxu0 0
      %2038 = vmatpush1.bf16.msra.mxu0 0
      %2039 = vmatprep.subr.bf16.mxu0 0
      %2040 = vmatpush1.bf16.msra.mxu0 0
      %2041 = vmatprep.subr.bf16.mxu0 0
      %2042 = vmatpush1.bf16.msra.mxu0 0
      %2043 = vmatprep.subr.bf16.mxu0 0
      %2044 = vmatpush1.bf16.msra.mxu0 0
      %2045 = vmatprep.subr.bf16.mxu0 0
      %2046 = vmatpush1.bf16.msra.mxu0 0
      %2047 = vmatprep.subr.bf16.mxu0 0
      %2048 = vmatpush1.bf16.msra.mxu0 0
      %2049 = vmatprep.subr.bf16.mxu0 0
      %2050 = vmatpush1.bf16.msra.mxu0 0
      %2051 = vmatprep.subr.bf16.mxu0 0
      %2052 = vmatpush1.bf16.msra.mxu0 0
      %2053 = vmatprep.subr.bf16.mxu0 0
      %2054 = vmatpush1.bf16.msra.mxu0 0
      %2055 = vmatprep.subr.bf16.mxu0 0
      %2056 = vmatpush1.bf16.msra.mxu0 0
      %2057 = vmatprep.mubr.bf16.mxu0 0
      %2058 = vmatmul.mubr.bf16.gmra.mrb[0].mxu0 %v2023
      %v2059 = vpop.f32.mrb[0].mxu0
      %v2060 = vadd.f32 0.0, %v2059
      %v2061 = vpop.f32.mrb[0].mxu0
      %v2062 = vpop.f32.mrb[0].mxu0
      %v2063 = vadd.f32 0.0, %v2062
      %v2064 = vpop.f32.mrb[0].mxu0
      %2065 = vdwg.mxu0
      %v2066 = vmul.f32 %v2060, 0.17677669
      %v2067 = vmul.f32 %v2063, 0.17677669
      %v2068 = vadd.f32 %v2066, %v996
      %v2069 = vadd.f32 %v2067, %v997
      %v2070 = vsel %vm1081, %v2068, -inf
      %2071 = vmax.xlane.f32.xlu0 %v2070
      %v2072 = vpop.xlane.xlu0 %2071
      %v2073 = vsel %vm1081, %v2069, -inf
      %2074 = vmax.xlane.f32.xlu0 %v2073
      %v2075 = vpop.xlane.xlu0 %2074
      %v2076 = vsub.f32 %v2068, %v2072
      %v2077 = vsub.f32 %v2069, %v2075
      %v2078 = vmul.f32 %v2076, 1.442695
      %v2079 = vpow.pop %v2078
      %v2080 = vmul.f32 %v2077, 1.442695
      %v2081 = vpow.pop %v2080
      %v2082 = vsel %vm1081, %v2079, 0.0
      %2083 = vadd.xlane.f32.xlu0 %v2082
      %v2084 = vpop.xlane.xlu0 %2083
      %v2085 = vsel %vm1081, %v2081, 0.0
      %2086 = vadd.xlane.f32.xlu0 %v2085
      %v2087 = vpop.xlane.xlu0 %2086
      %v2088 = vrcp.pop %v2084
      %v2089 = vrcp.pop %v2087
      %v2090 = vmul.f32 %v2079, %v2088
      %v2091 = vmul.f32 %v2081, %v2089
      %v2092 = vpack.c.bf16 %v2091, %v2090
      %2093 = vrot.lane.b32.xlu0 %v1771, 64
      %v2094 = vpop.permute.xlu0 %2093
      %v2097 = vsel %vm1081, %v2092, 0
      %2099 = vmatprep.subr.bf16.mxu0 0
      %2100 = vmatpush1.bf16.msra.mxu0 %v2094
      %2101 = vmatprep.subr.bf16.mxu0 0
      %2102 = vmatpush1.bf16.msra.mxu0 0
      %2103 = vmatprep.subr.bf16.mxu0 0
      %2104 = vmatpush1.bf16.msra.mxu0 0
      %2105 = vmatprep.subr.bf16.mxu0 0
      %2106 = vmatpush1.bf16.msra.mxu0 0
      %2107 = vmatprep.subr.bf16.mxu0 0
      %2108 = vmatpush1.bf16.msra.mxu0 0
      %2109 = vmatprep.subr.bf16.mxu0 0
      %2110 = vmatpush1.bf16.msra.mxu0 0
      %2111 = vmatprep.subr.bf16.mxu0 0
      %2112 = vmatpush1.bf16.msra.mxu0 0
      %2113 = vmatprep.subr.bf16.mxu0 0
      %2114 = vmatpush1.bf16.msra.mxu0 0
      %2115 = vmatprep.subr.bf16.mxu0 0
      %2116 = vmatpush1.bf16.msra.mxu0 0
      %2117 = vmatprep.subr.bf16.mxu0 0
      %2118 = vmatpush1.bf16.msra.mxu0 0
      %2119 = vmatprep.subr.bf16.mxu0 0
      %2120 = vmatpush1.bf16.msra.mxu0 0
      %2121 = vmatprep.subr.bf16.mxu0 0
      %2122 = vmatpush1.bf16.msra.mxu0 0
      %2123 = vmatprep.subr.bf16.mxu0 0
      %2124 = vmatpush1.bf16.msra.mxu0 0
      %2125 = vmatprep.subr.bf16.mxu0 0
      %2126 = vmatpush1.bf16.msra.mxu0 0
      %2127 = vmatprep.subr.bf16.mxu0 0
      %2128 = vmatpush1.bf16.msra.mxu0 0
      %2129 = vmatprep.subr.bf16.mxu0 0
      %2130 = vmatpush1.bf16.msra.mxu0 0
      %2131 = vmatprep.mubr.bf16.mxu0 0
      %2132 = vmatmul.mubr.bf16.gmra.mrb[0].mxu0 %v2097
      %v2133 = vpop.f32.mrb[0].mxu0
      %v2134 = vadd.f32 0.0, %v2133
      %v2135 = vpop.f32.mrb[0].mxu0
      %v2136 = vpop.f32.mrb[0].mxu0
      %v2137 = vadd.f32 0.0, %v2136
      %v2138 = vpop.f32.mrb[0].mxu0
      %2139 = vdwg.mxu0
      %2140 = vrot.lane.b32.xlu0 %v899, 32
      %v2141 = vpop.permute.xlu0 %2140
      %2142 = vrot.lane.b32.xlu0 %v903, 32
      %v2143 = vpop.permute.xlu0 %2142
      %2146 = vxpose.xlu0.b32.start [1/16] %v2141, 128
      %2147 = vxpose.xlu0.b32.cont [2/16] %v2143, 128
      %2148 = vxpose.xlu0.b32.cont [3/16] 0.0, 128
      %2149 = vxpose.xlu0.b32.cont [4/16] 0.0, 128
      %2150 = vxpose.xlu0.b32.cont [5/16] 0.0, 128
      %2151 = vxpose.xlu0.b32.cont [6/16] 0.0, 128
      %2152 = vxpose.xlu0.b32.cont [7/16] 0.0, 128
      %2153 = vxpose.xlu0.b32.cont [8/16] 0.0, 128
      %2154 = vxpose.xlu0.b32.cont [9/16] 0.0, 128
      %2155 = vxpose.xlu0.b32.cont [10/16] 0.0, 128
      %2156 = vxpose.xlu0.b32.cont [11/16] 0.0, 128
      %2157 = vxpose.xlu0.b32.cont [12/16] 0.0, 128
      %2158 = vxpose.xlu0.b32.cont [13/16] 0.0, 128
      %2159 = vxpose.xlu0.b32.cont [14/16] 0.0, 128
      %2160 = vxpose.xlu0.b32.cont [15/16] 0.0, 128
      %2161 = vxpose.xlu0.b32.end [16/16] 0.0, 128
      %v2162 = vpop.trf.xlu0
      %v2163 = vpop.trf.xlu0
      %v2164 = vpop.trf.xlu0
      %v2165 = vpop.trf.xlu0
      %v2166 = vpop.trf.xlu0
      %v2167 = vpop.trf.xlu0
      %v2168 = vpop.trf.xlu0
      %v2169 = vpop.trf.xlu0
      %v2170 = vpop.trf.xlu0
      %v2171 = vpop.trf.xlu0
      %v2172 = vpop.trf.xlu0
      %v2173 = vpop.trf.xlu0
      %v2174 = vpop.trf.xlu0
      %v2175 = vpop.trf.xlu0
      %v2176 = vpop.trf.xlu0
      %v2177 = vpop.trf.xlu0
      %v2178 = vpack.c.bf16 %v2163, %v2162
      %v2179 = vpack.c.bf16 %v2165, %v2164
      %2180 = vrot.lane.b32.xlu0 %v1697, 32
      %v2181 = vpop.permute.xlu0 %2180
      %v2183 = vsel %vm290, %v2181, 0
      %2185 = vmatprep.subr.bf16.mxu0 0
      %2186 = vmatpush1.bf16.msra.mxu0 %v2178
      %2187 = vmatprep.subr.bf16.mxu0 0
      %2188 = vmatpush1.bf16.msra.mxu0 %v2179
      %2189 = vmatprep.subr.bf16.mxu0 0
      %2190 = vmatpush1.bf16.msra.mxu0 0
      %2191 = vmatprep.subr.bf16.mxu0 0
      %2192 = vmatpush1.bf16.msra.mxu0 0
      %2193 = vmatprep.subr.bf16.mxu0 0
      %2194 = vmatpush1.bf16.msra.mxu0 0
      %2195 = vmatprep.subr.bf16.mxu0 0
      %2196 = vmatpush1.bf16.msra.mxu0 0
      %2197 = vmatprep.subr.bf16.mxu0 0
      %2198 = vmatpush1.bf16.msra.mxu0 0
      %2199 = vmatprep.subr.bf16.mxu0 0
      %2200 = vmatpush1.bf16.msra.mxu0 0
      %2201 = vmatprep.subr.bf16.mxu0 0
      %2202 = vmatpush1.bf16.msra.mxu0 0
      %2203 = vmatprep.subr.bf16.mxu0 0
      %2204 = vmatpush1.bf16.msra.mxu0 0
      %2205 = vmatprep.subr.bf16.mxu0 0
      %2206 = vmatpush1.bf16.msra.mxu0 0
      %2207 = vmatprep.subr.bf16.mxu0 0
      %2208 = vmatpush1.bf16.msra.mxu0 0
      %2209 = vmatprep.subr.bf16.mxu0 0
      %2210 = vmatpush1.bf16.msra.mxu0 0
      %2211 = vmatprep.subr.bf16.mxu0 0
      %2212 = vmatpush1.bf16.msra.mxu0 0
      %2213 = vmatprep.subr.bf16.mxu0 0
      %2214 = vmatpush1.bf16.msra.mxu0 0
      %2215 = vmatprep.subr.bf16.mxu0 0
      %2216 = vmatpush1.bf16.msra.mxu0 0
      %2217 = vmatprep.mubr.bf16.mxu0 0
      %2218 = vmatmul.mubr.bf16.gmra.mrb[0].mxu0 %v2183
      %v2219 = vpop.f32.mrb[0].mxu0
      %v2220 = vadd.f32 0.0, %v2219
      %v2221 = vpop.f32.mrb[0].mxu0
      %v2222 = vpop.f32.mrb[0].mxu0
      %v2223 = vadd.f32 0.0, %v2222
      %v2224 = vpop.f32.mrb[0].mxu0
      %2225 = vdwg.mxu0
      %v2226 = vmul.f32 %v2220, 0.17677669
      %v2227 = vmul.f32 %v2223, 0.17677669
      %v2228 = vadd.f32 %v2226, %v996
      %v2229 = vadd.f32 %v2227, %v997
      %v2230 = vsel %vm1081, %v2228, -inf
      %2231 = vmax.xlane.f32.xlu0 %v2230
      %v2232 = vpop.xlane.xlu0 %2231
      %v2233 = vsel %vm1081, %v2229, -inf
      %2234 = vmax.xlane.f32.xlu0 %v2233
      %v2235 = vpop.xlane.xlu0 %2234
      %v2236 = vsub.f32 %v2228, %v2232
      %v2237 = vsub.f32 %v2229, %v2235
      %v2238 = vmul.f32 %v2236, 1.442695
      %v2239 = vpow.pop %v2238
      %v2240 = vmul.f32 %v2237, 1.442695
      %v2241 = vpow.pop %v2240
      %v2242 = vsel %vm1081, %v2239, 0.0
      %2243 = vadd.xlane.f32.xlu0 %v2242
      %v2244 = vpop.xlane.xlu0 %2243
      %v2245 = vsel %vm1081, %v2241, 0.0
      %2246 = vadd.xlane.f32.xlu0 %v2245
      %v2247 = vpop.xlane.xlu0 %2246
      %v2248 = vrcp.pop %v2244
      %v2249 = vrcp.pop %v2247
      %v2250 = vmul.f32 %v2239, %v2248
      %v2251 = vmul.f32 %v2241, %v2249
      %v2252 = vpack.c.bf16 %v2251, %v2250
      %2253 = vrot.lane.b32.xlu0 %v1771, 32
      %v2254 = vpop.permute.xlu0 %2253
      %v2257 = vsel %vm1081, %v2252, 0
      %2259 = vmatprep.subr.bf16.mxu0 0
      %2260 = vmatpush1.bf16.msra.mxu0 %v2254
      %2261 = vmatprep.subr.bf16.mxu0 0
      %2262 = vmatpush1.bf16.msra.mxu0 0
      %2263 = vmatprep.subr.bf16.mxu0 0
      %2264 = vmatpush1.bf16.msra.mxu0 0
      %2265 = vmatprep.subr.bf16.mxu0 0
      %2266 = vmatpush1.bf16.msra.mxu0 0
      %2267 = vmatprep.subr.bf16.mxu0 0
      %2268 = vmatpush1.bf16.msra.mxu0 0
      %2269 = vmatprep.subr.bf16.mxu0 0
      %2270 = vmatpush1.bf16.msra.mxu0 0
      %2271 = vmatprep.subr.bf16.mxu0 0
      %2272 = vmatpush1.bf16.msra.mxu0 0
      %2273 = vmatprep.subr.bf16.mxu0 0
      %2274 = vmatpush1.bf16.msra.mxu0 0
      %2275 = vmatprep.subr.bf16.mxu0 0
      %2276 = vmatpush1.bf16.msra.mxu0 0
      %2277 = vmatprep.subr.bf16.mxu0 0
      %2278 = vmatpush1.bf16.msra.mxu0 0
      %2279 = vmatprep.subr.bf16.mxu0 0
      %2280 = vmatpush1.bf16.msra.mxu0 0
      %2281 = vmatprep.subr.bf16.mxu0 0
      %2282 = vmatpush1.bf16.msra.mxu0 0
      %2283 = vmatprep.subr.bf16.mxu0 0
      %2284 = vmatpush1.bf16.msra.mxu0 0
      %2285 = vmatprep.subr.bf16.mxu0 0
      %2286 = vmatpush1.bf16.msra.mxu0 0
      %2287 = vmatprep.subr.bf16.mxu0 0
      %2288 = vmatpush1.bf16.msra.mxu0 0
      %2289 = vmatprep.subr.bf16.mxu0 0
      %2290 = vmatpush1.bf16.msra.mxu0 0
      %2291 = vmatprep.mubr.bf16.mxu0 0
      %2292 = vmatmul.mubr.bf16.gmra.mrb[0].mxu0 %v2257
      %v2293 = vpop.f32.mrb[0].mxu0
      %v2294 = vadd.f32 0.0, %v2293
      %v2295 = vpop.f32.mrb[0].mxu0
      %v2296 = vpop.f32.mrb[0].mxu0
      %v2297 = vadd.f32 0.0, %v2296
      %v2298 = vpop.f32.mrb[0].mxu0
      %2299 = vdwg.mxu0
      %2302 = vrot.lane.b32.xlu0 %v1974, 32
      %v2303 = vpop.permute.xlu0 %2302
      %2304 = vrot.lane.b32.xlu0 %v1977, 32
      %v2305 = vpop.permute.xlu0 %2304
      %2310 = vrot.lane.b32.xlu0 %v2134, 64
      %v2311 = vpop.permute.xlu0 %2310
      %2312 = vrot.lane.b32.xlu0 %v2137, 64
      %v2313 = vpop.permute.xlu0 %2312
      %2318 = vrot.lane.b32.xlu0 %v2294, 96
      %v2319 = vpop.permute.xlu0 %2318
      %2320 = vrot.lane.b32.xlu0 %v2297, 96
      %v2321 = vpop.permute.xlu0 %2320
      %v2324 = vsel %vm290, %v1810, %v2303
      %v2325 = vsel %vm290, %v1813, %v2305
      %v2326 = vsel %vm451, %v2324, %v2311
      %v2327 = vsel %vm451, %v2325, %v2313
      %v2328 = vsel %vm1662, %v2326, %v2319
      %v2329 = vsel %vm1662, %v2327, %v2321
      %s2330 = smul.u32 %s243, 128
      %s2331 = scalar_lea.vmem %s15, %s2330
      %v2332 = vld [vmem:[%s2331] sm:$0xff]
      %v2333 = vld [vmem:[%s2331 + $0x8] sm:$0xff]
      %v2334 = vld [vmem:[%s2331 + $0x10] sm:$0xff]
      %v2335 = vld [vmem:[%s2331 + $0x18] sm:$0xff]
      %v2336 = vld [vmem:[%s2331 + $0x20] sm:$0xff]
      %v2337 = vld [vmem:[%s2331 + $0x28] sm:$0xff]
      %v2338 = vld [vmem:[%s2331 + $0x30] sm:$0xff]
      %v2339 = vld [vmem:[%s2331 + $0x38] sm:$0xff]
      %v2340 = vld [vmem:[%s2331 + $0x40] sm:$0xff]
      %v2341 = vld [vmem:[%s2331 + $0x48] sm:$0xff]
      %v2342 = vld [vmem:[%s2331 + $0x50] sm:$0xff]
      %v2343 = vld [vmem:[%s2331 + $0x58] sm:$0xff]
      %v2344 = vld [vmem:[%s2331 + $0x60] sm:$0xff]
      %v2345 = vld [vmem:[%s2331 + $0x68] sm:$0xff]
      %v2346 = vld [vmem:[%s2331 + $0x70] sm:$0xff]
      %v2347 = vld [vmem:[%s2331 + $0x78] sm:$0xff]
      %v2348 = vpack.c.bf16 %v1664, %v1663
      %v2349 = vpack.c.bf16 %v2329, %v2328
      %v2350 = vpack.c.bf16 %v2333, %v2332
      %v2351 = vpack.c.bf16 %v2335, %v2334
      %v2352 = vpack.c.bf16 %v2337, %v2336
      %v2353 = vpack.c.bf16 %v2339, %v2338
      %v2354 = vpack.c.bf16 %v2341, %v2340
      %v2355 = vpack.c.bf16 %v2343, %v2342
      %v2356 = vpack.c.bf16 %v2345, %v2344
      %v2357 = vpack.c.bf16 %v2347, %v2346
      %s2358 = scalar_lea.vmem [#allocation21], %s243
      %v2359 = vld [vmem:[%s2358] sm:$0x1]
      %v2361 = vlaneseq
      %v2362 = vshrl.u32 %v2361, 7
      %v2363 = vsub.s32 0, %v2362
      %v2364 = vrot.slane %v2359, %v2363
      %2366 = vmatprep.subr.bf16.mxu0 0
      %2367 = vmatpush1.bf16.msra.mxu0 %v2350
      %2368 = vmatprep.subr.bf16.mxu0 0
      %2369 = vmatpush1.bf16.msra.mxu0 %v2351
      %2370 = vmatprep.subr.bf16.mxu0 0
      %2371 = vmatpush1.bf16.msra.mxu0 %v2352
      %2372 = vmatprep.subr.bf16.mxu0 0
      %2373 = vmatpush1.bf16.msra.mxu0 %v2353
      %2374 = vmatprep.subr.bf16.mxu0 0
      %2375 = vmatpush1.bf16.msra.mxu0 %v2354
      %2376 = vmatprep.subr.bf16.mxu0 0
      %2377 = vmatpush1.bf16.msra.mxu0 %v2355
      %2378 = vmatprep.subr.bf16.mxu0 0
      %2379 = vmatpush1.bf16.msra.mxu0 %v2356
      %2380 = vmatprep.subr.bf16.mxu0 0
      %2381 = vmatpush1.bf16.msra.mxu0 %v2357
      %2382 = vmatprep.subr.bf16.mxu0 0
      %2383 = vmatpush1.bf16.msra.mxu0 0
      %2384 = vmatprep.subr.bf16.mxu0 0
      %2385 = vmatpush1.bf16.msra.mxu0 0
      %2386 = vmatprep.subr.bf16.mxu0 0
      %2387 = vmatpush1.bf16.msra.mxu0 0
      %2388 = vmatprep.subr.bf16.mxu0 0
      %2389 = vmatpush1.bf16.msra.mxu0 0
      %2390 = vmatprep.subr.bf16.mxu0 0
      %2391 = vmatpush1.bf16.msra.mxu0 0
      %2392 = vmatprep.subr.bf16.mxu0 0
      %2393 = vmatpush1.bf16.msra.mxu0 0
      %2394 = vmatprep.subr.bf16.mxu0 0
      %2395 = vmatpush1.bf16.msra.mxu0 0
      %2396 = vmatprep.subr.bf16.mxu0 0
      %2397 = vmatpush1.bf16.msra.mxu0 0
      %2398 = vmatprep.mubr.bf16.mxu0 0
      %2399 = vmatmul.mubr.bf16.gmra.mrb[0].mxu0 %v2348
      %v2400 = vpop.f32.mrb[0].mxu0
      %v2401 = vadd.f32 %v2364, %v2400
      %v2402 = vpop.f32.mrb[0].mxu0
      %v2403 = vpop.f32.mrb[0].mxu0
      %v2404 = vadd.f32 %v2364, %v2403
      %v2405 = vpop.f32.mrb[0].mxu0
      %2406 = vmatprep.mubr.bf16.mxu0 0
      %2407 = vmatmul.mubr.bf16.gmra.mrb[0].mxu0 %v2349
      %v2408 = vpop.f32.mrb[0].mxu0
      %v2409 = vadd.f32 %v2364, %v2408
      %v2410 = vpop.f32.mrb[0].mxu0
      %v2411 = vpop.f32.mrb[0].mxu0
      %v2412 = vadd.f32 %v2364, %v2411
      %v2413 = vpop.f32.mrb[0].mxu0
      %2414 = vdwg.mxu0
      %2415 = vadd.xlane.f32.xlu0 %v2401
      %v2416 = vpop.xlane.xlu0 %2415
      %2417 = vadd.xlane.f32.xlu0 %v2404
      %v2418 = vpop.xlane.xlu0 %2417
      %2419 = vadd.xlane.f32.xlu0 %v2409
      %v2420 = vpop.xlane.xlu0 %2419
      %2421 = vadd.xlane.f32.xlu0 %v2412
      %v2422 = vpop.xlane.xlu0 %2421
      %v2423 = vrcp.pop 128.0
      %v2424 = vmul.f32 %v2416, %v2423
      %v2425 = vmul.f32 %v2418, %v2423
      %v2426 = vmul.f32 %v2420, %v2423
      %v2427 = vmul.f32 %v2422, %v2423
      %v2428 = vsub.f32 %v2401, %v2424
      %v2429 = vsub.f32 %v2404, %v2425
      %v2430 = vsub.f32 %v2409, %v2426
      %v2431 = vsub.f32 %v2412, %v2427
      %v2432 = vmul.f32 %v2428, %v2428
      %v2433 = vmul.f32 %v2429, %v2429
      %v2434 = vmul.f32 %v2430, %v2430
      %v2435 = vmul.f32 %v2431, %v2431
      %2436 = vadd.xlane.f32.xlu0 %v2432
      %v2437 = vpop.xlane.xlu0 %2436
      %2438 = vadd.xlane.f32.xlu0 %v2433
      %v2439 = vpop.xlane.xlu0 %2438
      %2440 = vadd.xlane.f32.xlu0 %v2434
      %v2441 = vpop.xlane.xlu0 %2440
      %2442 = vadd.xlane.f32.xlu0 %v2435
      %v2443 = vpop.xlane.xlu0 %2442
      %v2444 = vmul.f32 %v2437, %v2423
      %v2445 = vmul.f32 %v2439, %v2423
      %v2446 = vmul.f32 %v2441, %v2423
      %v2447 = vmul.f32 %v2443, %v2423
      %v2448 = vadd.f32 %v2444, 1e-05
      %v2449 = vadd.f32 %v2445, 1e-05
      %v2450 = vadd.f32 %v2446, 1e-05
      %v2451 = vadd.f32 %v2447, 1e-05
      %v2452 = vrsqrt.pop %v2448
      %v2453 = vrsqrt.pop %v2449
      %v2454 = vrsqrt.pop %v2450
      %v2455 = vrsqrt.pop %v2451
      %v2456 = vmul.f32 %v2428, %v2452
      %v2457 = vmul.f32 %v2429, %v2453
      %v2458 = vmul.f32 %v2430, %v2454
      %v2459 = vmul.f32 %v2431, %v2455
      %s2460 = scalar_lea.vmem %s17, %s243
      %v2461 = vld [vmem:[%s2460] sm:$0x1]
      %v2463 = vlaneseq
      %v2464 = vshrl.u32 %v2463, 7
      %v2465 = vsub.s32 0, %v2464
      %v2466 = vrot.slane %v2461, %v2465
      %v2468 = vmul.f32 %v2456, %v2466
      %v2469 = vmul.f32 %v2457, %v2466
      %v2470 = vmul.f32 %v2458, %v2466
      %v2471 = vmul.f32 %v2459, %v2466
      %s2472 = scalar_lea.vmem %s18, %s243
      %v2473 = vld [vmem:[%s2472] sm:$0x1]
      %v2475 = vlaneseq
      %v2476 = vshrl.u32 %v2475, 7
      %v2477 = vsub.s32 0, %v2476
      %v2478 = vrot.slane %v2473, %v2477
      %v2480 = vadd.f32 %v2468, %v2478
      %v2481 = vadd.f32 %v2469, %v2478
      %v2482 = vadd.f32 %v2470, %v2478
      %v2483 = vadd.f32 %v2471, %v2478
    $region150: #{tpu_custom_call.1} parent=1 // loop_footer
      %s247 = sadd.s32 1, %s243
    $region151: #{tpu_custom_call.1} parent=1 // loop_footer_branch
      %242 = sbr.rel target = $region147
    $region152: #{tpu_custom_call.1} parent=1 // loop_exit
      _
    %v2484 = vld [vmem:[%s19] sm:$0xff]
    %v2485 = vld [vmem:[%s19 + $0x8] sm:$0xff]
    %v2486 = vld [vmem:[%s19 + $0x10] sm:$0xff]
    %v2487 = vld [vmem:[%s19 + $0x18] sm:$0xff]
    %v2488 = vld [vmem:[%s19 + $0x20] sm:$0xff]
    %v2489 = vld [vmem:[%s19 + $0x28] sm:$0xff]
    %v2490 = vld [vmem:[%s19 + $0x30] sm:$0xff]
    %v2491 = vld [vmem:[%s19 + $0x38] sm:$0xff]
    %v2492 = vld [vmem:[%s19 + $0x40] sm:$0xff]
    %v2493 = vld [vmem:[%s19 + $0x48] sm:$0xff]
    %v2494 = vld [vmem:[%s19 + $0x50] sm:$0xff]
    %v2495 = vld [vmem:[%s19 + $0x58] sm:$0xff]
    %v2496 = vld [vmem:[%s19 + $0x60] sm:$0xff]
    %v2497 = vld [vmem:[%s19 + $0x68] sm:$0xff]
    %v2498 = vld [vmem:[%s19 + $0x70] sm:$0xff]
    %v2499 = vld [vmem:[%s19 + $0x78] sm:$0xff]
    %v2500 = vpack.c.bf16 %v249, %v248
    %v2501 = vpack.c.bf16 %v251, %v250
    %v2502 = vpack.c.bf16 %v2485, %v2484
    %v2503 = vpack.c.bf16 %v2487, %v2486
    %v2504 = vpack.c.bf16 %v2489, %v2488
    %v2505 = vpack.c.bf16 %v2491, %v2490
    %v2506 = vpack.c.bf16 %v2493, %v2492
    %v2507 = vpack.c.bf16 %v2495, %v2494
    %v2508 = vpack.c.bf16 %v2497, %v2496
    %v2509 = vpack.c.bf16 %v2499, %v2498
    %v2510 = vld [vmem:[#allocation2] sm:$0x1]
    %v2512 = vlaneseq
    %v2513 = vshrl.u32 %v2512, 7
    %v2514 = vsub.s32 0, %v2513
    %v2515 = vrot.slane %v2510, %v2514
    %2517 = vmatprep.subr.bf16.mxu0 0
    %2518 = vmatpush1.bf16.msra.mxu0 %v2502
    %2519 = vmatprep.subr.bf16.mxu0 0
    %2520 = vmatpush1.bf16.msra.mxu0 %v2503
    %2521 = vmatprep.subr.bf16.mxu0 0
    %2522 = vmatpush1.bf16.msra.mxu0 %v2504
    %2523 = vmatprep.subr.bf16.mxu0 0
    %2524 = vmatpush1.bf16.msra.mxu0 %v2505
    %2525 = vmatprep.subr.bf16.mxu0 0
    %2526 = vmatpush1.bf16.msra.mxu0 %v2506
    %2527 = vmatprep.subr.bf16.mxu0 0
    %2528 = vmatpush1.bf16.msra.mxu0 %v2507
    %2529 = vmatprep.subr.bf16.mxu0 0
    %2530 = vmatpush1.bf16.msra.mxu0 %v2508
    %2531 = vmatprep.subr.bf16.mxu0 0
    %2532 = vmatpush1.bf16.msra.mxu0 %v2509
    %2533 = vmatprep.subr.bf16.mxu0 0
    %2534 = vmatpush1.bf16.msra.mxu0 0
    %2535 = vmatprep.subr.bf16.mxu0 0
    %2536 = vmatpush1.bf16.msra.mxu0 0
    %2537 = vmatprep.subr.bf16.mxu0 0
    %2538 = vmatpush1.bf16.msra.mxu0 0
    %2539 = vmatprep.subr.bf16.mxu0 0
    %2540 = vmatpush1.bf16.msra.mxu0 0
    %2541 = vmatprep.subr.bf16.mxu0 0
    %2542 = vmatpush1.bf16.msra.mxu0 0
    %2543 = vmatprep.subr.bf16.mxu0 0
    %2544 = vmatpush1.bf16.msra.mxu0 0
    %2545 = vmatprep.subr.bf16.mxu0 0
    %2546 = vmatpush1.bf16.msra.mxu0 0
    %2547 = vmatprep.subr.bf16.mxu0 0
    %2548 = vmatpush1.bf16.msra.mxu0 0
    %2549 = vmatprep.mubr.bf16.mxu0 0
    %2550 = vmatmul.mubr.bf16.gmra.mrb[0].mxu0 %v2500
    %v2551 = vpop.f32.mrb[0].mxu0
    %v2552 = vadd.f32 %v2515, %v2551
    %v2553 = vpop.f32.mrb[0].mxu0
    %v2554 = vpop.f32.mrb[0].mxu0
    %v2555 = vadd.f32 %v2515, %v2554
    %v2556 = vpop.f32.mrb[0].mxu0
    %2557 = vmatprep.mubr.bf16.mxu0 0
    %2558 = vmatmul.mubr.bf16.gmra.mrb[0].mxu0 %v2501
    %v2559 = vpop.f32.mrb[0].mxu0
    %v2560 = vadd.f32 %v2515, %v2559
    %v2561 = vpop.f32.mrb[0].mxu0
    %v2562 = vpop.f32.mrb[0].mxu0
    %v2563 = vadd.f32 %v2515, %v2562
    %v2564 = vpop.f32.mrb[0].mxu0
    %2565 = vdwg.mxu0
    %v2566 = vsub.f32 0.0, %v2552
    %v2567 = vsub.f32 0.0, %v2555
    %v2568 = vsub.f32 0.0, %v2560
    %v2569 = vsub.f32 0.0, %v2563
    %v2570 = vmul.f32 %v2566, 1.442695
    %v2571 = vpow.pop %v2570
    %v2572 = vmul.f32 %v2567, 1.442695
    %v2573 = vpow.pop %v2572
    %v2574 = vmul.f32 %v2568, 1.442695
    %v2575 = vpow.pop %v2574
    %v2576 = vmul.f32 %v2569, 1.442695
    %v2577 = vpow.pop %v2576
    %v2578 = vadd.f32 %v2571, 1.0
    %v2579 = vadd.f32 %v2573, 1.0
    %v2580 = vadd.f32 %v2575, 1.0
    %v2581 = vadd.f32 %v2577, 1.0
    %v2582 = vrcp.pop %v2578
    %v2583 = vrcp.pop %v2579
    %v2584 = vrcp.pop %v2580
    %v2585 = vrcp.pop %v2581
    %v2586 = vmul.f32 %v2582, 1.442695
    %v2587 = vpow.pop %v2586
    %v2588 = vmul.f32 %v2583, 1.442695
    %v2589 = vpow.pop %v2588
    %v2590 = vmul.f32 %v2584, 1.442695
    %v2591 = vpow.pop %v2590
    %v2592 = vmul.f32 %v2585, 1.442695
    %v2593 = vpow.pop %v2592
    %v2594 = vld [vmem:[#allocation8] sm:$0x3]
    %2596 = vset.pattern.permute.xlu0 0
    %2597 = vperm.xlu0 %2596, %v2587
    %v2598 = vpop.permute.xlu0 %2597
    %2601 = vset.pattern.permute.xlu0 0
    %2602 = vperm.xlu0 %2601, %v2589
    %v2603 = vpop.permute.xlu0 %2602
    %2606 = vset.pattern.permute.xlu0 0
    %2607 = vperm.xlu0 %2606, %v2591
    %v2608 = vpop.permute.xlu0 %2607
    %2611 = vset.pattern.permute.xlu0 0
    %2612 = vperm.xlu0 %2611, %v2593
    %v2613 = vpop.permute.xlu0 %2612
    %v2615 = vmul.f32 %v2598, %v248
    %v2616 = vmul.f32 %v2603, %v249
    %v2617 = vmul.f32 %v2608, %v250
    %v2618 = vmul.f32 %v2613, %v251
    %v2619 = vpack.c.bf16 %v2616, %v2615
    %v2620 = vpack.c.bf16 %v2618, %v2617
    %vm2621 = vcmask 261120
    %v2623 = vsel %vm2621, %v2594, 0
    %2625 = vmatprep.subr.bf16.mxu0 0
    %2626 = vmatpush1.bf16.msra.mxu0 %v2619
    %2627 = vmatprep.subr.bf16.mxu0 0
    %2628 = vmatpush1.bf16.msra.mxu0 %v2620
    %2629 = vmatprep.subr.bf16.mxu0 0
    %2630 = vmatpush1.bf16.msra.mxu0 0
    %2631 = vmatprep.subr.bf16.mxu0 0
    %2632 = vmatpush1.bf16.msra.mxu0 0
    %2633 = vmatprep.subr.bf16.mxu0 0
    %2634 = vmatpush1.bf16.msra.mxu0 0
    %2635 = vmatprep.subr.bf16.mxu0 0
    %2636 = vmatpush1.bf16.msra.mxu0 0
    %2637 = vmatprep.subr.bf16.mxu0 0
    %2638 = vmatpush1.bf16.msra.mxu0 0
    %2639 = vmatprep.subr.bf16.mxu0 0
    %2640 = vmatpush1.bf16.msra.mxu0 0
    %2641 = vmatprep.subr.bf16.mxu0 0
    %2642 = vmatpush1.bf16.msra.mxu0 0
    %2643 = vmatprep.subr.bf16.mxu0 0
    %2644 = vmatpush1.bf16.msra.mxu0 0
    %2645 = vmatprep.subr.bf16.mxu0 0
    %2646 = vmatpush1.bf16.msra.mxu0 0
    %2647 = vmatprep.subr.bf16.mxu0 0
    %2648 = vmatpush1.bf16.msra.mxu0 0
    %2649 = vmatprep.subr.bf16.mxu0 0
    %2650 = vmatpush1.bf16.msra.mxu0 0
    %2651 = vmatprep.subr.bf16.mxu0 0
    %2652 = vmatpush1.bf16.msra.mxu0 0
    %2653 = vmatprep.subr.bf16.mxu0 0
    %2654 = vmatpush1.bf16.msra.mxu0 0
    %2655 = vmatprep.subr.bf16.mxu0 0
    %2656 = vmatpush1.bf16.msra.mxu0 0
    %2657 = vmatprep.mubr.bf16.mxu0 0
    %2658 = vmatmul.mubr.bf16.gmra.mrb[0].mxu0 %v2623
    %v2659 = vpop.f32.mrb[0].mxu0
    %v2660 = vadd.f32 0.0, %v2659
    %v2661 = vpop.f32.mrb[0].mxu0
    %v2662 = vpop.f32.mrb[0].mxu0
    %v2663 = vpop.f32.mrb[0].mxu0
    %2664 = vdwg.mxu0
    %v2665 = vpack.c.bf16 %v2589, %v2587
    %v2666 = vpack.c.bf16 %v2593, %v2591
    %2667 = vmatprep.subr.bf16.mxu0 0
    %2668 = vmatpush1.bf16.msra.mxu0 %v2665
    %2669 = vmatprep.subr.bf16.mxu0 0
    %2670 = vmatpush1.bf16.msra.mxu0 %v2666
    %2671 = vmatprep.subr.bf16.mxu0 0
    %2672 = vmatpush1.bf16.msra.mxu0 0
    %2673 = vmatprep.subr.bf16.mxu0 0
    %2674 = vmatpush1.bf16.msra.mxu0 0
    %2675 = vmatprep.subr.bf16.mxu0 0
    %2676 = vmatpush1.bf16.msra.mxu0 0
    %2677 = vmatprep.subr.bf16.mxu0 0
    %2678 = vmatpush1.bf16.msra.mxu0 0
    %2679 = vmatprep.subr.bf16.mxu0 0
    %2680 = vmatpush1.bf16.msra.mxu0 0
    %2681 = vmatprep.subr.bf16.mxu0 0
    %2682 = vmatpush1.bf16.msra.mxu0 0
    %2683 = vmatprep.subr.bf16.mxu0 0
    %2684 = vmatpush1.bf16.msra.mxu0 0
    %2685 = vmatprep.subr.bf16.mxu0 0
    %2686 = vmatpush1.bf16.msra.mxu0 0
    %2687 = vmatprep.subr.bf16.mxu0 0
    %2688 = vmatpush1.bf16.msra.mxu0 0
    %2689 = vmatprep.subr.bf16.mxu0 0
    %2690 = vmatpush1.bf16.msra.mxu0 0
    %2691 = vmatprep.subr.bf16.mxu0 0
    %2692 = vmatpush1.bf16.msra.mxu0 0
    %2693 = vmatprep.subr.bf16.mxu0 0
    %2694 = vmatpush1.bf16.msra.mxu0 0
    %2695 = vmatprep.subr.bf16.mxu0 0
    %2696 = vmatpush1.bf16.msra.mxu0 0
    %2697 = vmatprep.subr.bf16.mxu0 0
    %2698 = vmatpush1.bf16.msra.mxu0 0
    %2699 = vmatprep.mubr.bf16.mxu0 0
    %2700 = vmatmul.mubr.bf16.gmra.mrb[0].mxu0 %v2623
    %v2701 = vpop.f32.mrb[0].mxu0
    %v2702 = vadd.f32 0.0, %v2701
    %v2703 = vpop.f32.mrb[0].mxu0
    %v2704 = vpop.f32.mrb[0].mxu0
    %v2705 = vpop.f32.mrb[0].mxu0
    %2706 = vdwg.mxu0
    %v2707 = vmax.f32 %v2702, 1e-09
    %v2708 = vrcp.pop %v2707
    %2710 = vset.pattern.permute.xlu0 0
    %2711 = vperm.xlu0 %2710, %v2708
    %v2712 = vpop.permute.xlu0 %2711
    %v2714 = vmul.f32 %v2660, %v2712
    %v2715 = vld [vmem:[%s21] sm:$0xff]
    %v2716 = vld [vmem:[%s21 + $0x8] sm:$0xff]
    %v2717 = vld [vmem:[%s21 + $0x10] sm:$0xff]
    %v2718 = vld [vmem:[%s21 + $0x18] sm:$0xff]
    %v2719 = vld [vmem:[%s21 + $0x20] sm:$0xff]
    %v2720 = vld [vmem:[%s21 + $0x28] sm:$0xff]
    %v2721 = vld [vmem:[%s21 + $0x30] sm:$0xff]
    %v2722 = vld [vmem:[%s21 + $0x38] sm:$0xff]
    %v2723 = vld [vmem:[%s21 + $0x40] sm:$0xff]
    %v2724 = vld [vmem:[%s21 + $0x48] sm:$0xff]
    %v2725 = vld [vmem:[%s21 + $0x50] sm:$0xff]
    %v2726 = vld [vmem:[%s21 + $0x58] sm:$0xff]
    %v2727 = vld [vmem:[%s21 + $0x60] sm:$0xff]
    %v2728 = vld [vmem:[%s21 + $0x68] sm:$0xff]
    %v2729 = vld [vmem:[%s21 + $0x70] sm:$0xff]
    %v2730 = vld [vmem:[%s21 + $0x78] sm:$0xff]
    %v2731 = vpack.c.bf16 %v2714, %v2714
    %v2732 = vpack.c.bf16 %v2716, %v2715
    %v2733 = vpack.c.bf16 %v2718, %v2717
    %v2734 = vpack.c.bf16 %v2720, %v2719
    %v2735 = vpack.c.bf16 %v2722, %v2721
    %v2736 = vpack.c.bf16 %v2724, %v2723
    %v2737 = vpack.c.bf16 %v2726, %v2725
    %v2738 = vpack.c.bf16 %v2728, %v2727
    %v2739 = vpack.c.bf16 %v2730, %v2729
    %v2740 = vld [vmem:[%s22] sm:$0xff]
    %v2741 = vld [vmem:[%s22 + $0x8] sm:$0xff]
    %v2742 = vld [vmem:[%s22 + $0x10] sm:$0xff]
    %v2743 = vld [vmem:[%s22 + $0x18] sm:$0xff]
    %v2744 = vld [vmem:[%s22 + $0x20] sm:$0xff]
    %v2745 = vld [vmem:[%s22 + $0x28] sm:$0xff]
    %v2746 = vld [vmem:[%s22 + $0x30] sm:$0xff]
    %v2747 = vld [vmem:[%s22 + $0x38] sm:$0xff]
    %v2748 = vld [vmem:[%s22 + $0x40] sm:$0xff]
    %v2749 = vld [vmem:[%s22 + $0x48] sm:$0xff]
    %v2750 = vld [vmem:[%s22 + $0x50] sm:$0xff]
    %v2751 = vld [vmem:[%s22 + $0x58] sm:$0xff]
    %v2752 = vld [vmem:[%s22 + $0x60] sm:$0xff]
    %v2753 = vld [vmem:[%s22 + $0x68] sm:$0xff]
    %v2754 = vld [vmem:[%s22 + $0x70] sm:$0xff]
    %v2755 = vld [vmem:[%s22 + $0x78] sm:$0xff]
    %v2756 = vpack.c.bf16 %v2741, %v2740
    %v2757 = vpack.c.bf16 %v2743, %v2742
    %v2758 = vpack.c.bf16 %v2745, %v2744
    %v2759 = vpack.c.bf16 %v2747, %v2746
    %v2760 = vpack.c.bf16 %v2749, %v2748
    %v2761 = vpack.c.bf16 %v2751, %v2750
    %v2762 = vpack.c.bf16 %v2753, %v2752
    %v2763 = vpack.c.bf16 %v2755, %v2754
    %v2765 = vrot.slane %v2731, 1
    %2767 = vmatprep.subr.bf16.mxu0 0
    %2768 = vmatpush1.bf16.msra.mxu0 %v2756
    %2769 = vmatprep.subr.bf16.mxu0 0
    %2770 = vmatpush1.bf16.msra.mxu0 %v2757
    %2771 = vmatprep.subr.bf16.mxu0 0
    %2772 = vmatpush1.bf16.msra.mxu0 %v2758
    %2773 = vmatprep.subr.bf16.mxu0 0
    %2774 = vmatpush1.bf16.msra.mxu0 %v2759
    %2775 = vmatprep.subr.bf16.mxu0 0
    %2776 = vmatpush1.bf16.msra.mxu0 %v2760
    %2777 = vmatprep.subr.bf16.mxu0 0
    %2778 = vmatpush1.bf16.msra.mxu0 %v2761
    %2779 = vmatprep.subr.bf16.mxu0 0
    %2780 = vmatpush1.bf16.msra.mxu0 %v2762
    %2781 = vmatprep.subr.bf16.mxu0 0
    %2782 = vmatpush1.bf16.msra.mxu0 %v2763
    %2783 = vmatprep.subr.bf16.mxu0 0
    %2784 = vmatpush1.bf16.msra.mxu0 0
    %2785 = vmatprep.subr.bf16.mxu0 0
    %2786 = vmatpush1.bf16.msra.mxu0 0
    %2787 = vmatprep.subr.bf16.mxu0 0
    %2788 = vmatpush1.bf16.msra.mxu0 0
    %2789 = vmatprep.subr.bf16.mxu0 0
    %2790 = vmatpush1.bf16.msra.mxu0 0
    %2791 = vmatprep.subr.bf16.mxu0 0
    %2792 = vmatpush1.bf16.msra.mxu0 0
    %2793 = vmatprep.subr.bf16.mxu0 0
    %2794 = vmatpush1.bf16.msra.mxu0 0
    %2795 = vmatprep.subr.bf16.mxu0 0
    %2796 = vmatpush1.bf16.msra.mxu0 0
    %2797 = vmatprep.subr.bf16.mxu0 0
    %2798 = vmatpush1.bf16.msra.mxu0 0
    %2799 = vmatprep.mubr.bf16.mxu0 0
    %2800 = vmatmul.mubr.bf16.gmra.mrb[0].mxu0 %v2765
    %v2801 = vpop.f32.mrb[0].mxu0
    %v2802 = vadd.f32 0.0, %v2801
    %v2803 = vpop.f32.mrb[0].mxu0
    %v2804 = vpop.f32.mrb[0].mxu0
    %v2805 = vpop.f32.mrb[0].mxu0
    %2806 = vdwg.mxu0
    %2807 = vmatprep.subr.bf16.mxu0 0
    %2808 = vmatpush1.bf16.msra.mxu0 %v2732
    %2809 = vmatprep.subr.bf16.mxu0 0
    %2810 = vmatpush1.bf16.msra.mxu0 %v2733
    %2811 = vmatprep.subr.bf16.mxu0 0
    %2812 = vmatpush1.bf16.msra.mxu0 %v2734
    %2813 = vmatprep.subr.bf16.mxu0 0
    %2814 = vmatpush1.bf16.msra.mxu0 %v2735
    %2815 = vmatprep.subr.bf16.mxu0 0
    %2816 = vmatpush1.bf16.msra.mxu0 %v2736
    %2817 = vmatprep.subr.bf16.mxu0 0
    %2818 = vmatpush1.bf16.msra.mxu0 %v2737
    %2819 = vmatprep.subr.bf16.mxu0 0
    %2820 = vmatpush1.bf16.msra.mxu0 %v2738
    %2821 = vmatprep.subr.bf16.mxu0 0
    %2822 = vmatpush1.bf16.msra.mxu0 %v2739
    %2823 = vmatprep.subr.bf16.mxu0 0
    %2824 = vmatpush1.bf16.msra.mxu0 0
    %2825 = vmatprep.subr.bf16.mxu0 0
    %2826 = vmatpush1.bf16.msra.mxu0 0
    %2827 = vmatprep.subr.bf16.mxu0 0
    %2828 = vmatpush1.bf16.msra.mxu0 0
    %2829 = vmatprep.subr.bf16.mxu0 0
    %2830 = vmatpush1.bf16.msra.mxu0 0
    %2831 = vmatprep.subr.bf16.mxu0 0
    %2832 = vmatpush1.bf16.msra.mxu0 0
    %2833 = vmatprep.subr.bf16.mxu0 0
    %2834 = vmatpush1.bf16.msra.mxu0 0
    %2835 = vmatprep.subr.bf16.mxu0 0
    %2836 = vmatpush1.bf16.msra.mxu0 0
    %2837 = vmatprep.subr.bf16.mxu0 0
    %2838 = vmatpush1.bf16.msra.mxu0 0
    %2839 = vmatprep.mubr.bf16.mxu0 0
    %2840 = vmatmul.mubr.bf16.gmra.mrb[0].mxu0 %v2731
    %v2841 = vpop.f32.mrb[0].mxu0
    %v2842 = vadd.f32 %v2802, %v2841
    %v2843 = vpop.f32.mrb[0].mxu0
    %v2844 = vpop.f32.mrb[0].mxu0
    %v2845 = vpop.f32.mrb[0].mxu0
    %2846 = vdwg.mxu0
    %v2847 = vld [vmem:[%s23] sm:$0x1]
    %v2849 = vlaneseq
    %v2850 = vshrl.u32 %v2849, 7
    %v2851 = vsub.s32 0, %v2850
    %v2852 = vrot.slane %v2847, %v2851
    %v2854 = vadd.f32 %v2842, %v2852
    %vm2855 = vcmask 9216
    %v2856 = vsel %vm2855, %v2854, -inf
    %2857 = vmax.xlane.f32.xlu0 %v2856
    %v2858 = vpop.xlane.xlu0 %2857
    %v2859 = vsub.f32 %v2854, %v2858
    %v2860 = vmul.f32 %v2859, 1.442695
    %v2861 = vpow.pop %v2860
    %v2862 = vsel %vm2855, %v2861, 0.0
    %2863 = vadd.xlane.f32.xlu0 %v2862
    %v2864 = vpop.xlane.xlu0 %2863
    %v2865 = vrcp.pop %v2864
    %v2866 = vmul.f32 %v2861, %v2865
    %2867 = vst.msk [vmem:[#allocation23] sm:$0x3] %vm2855, %v2866
    // Predicated region
    $region153: #{tpu_custom_call.1} parent=1 // pred_check
      _
    $region154: #{tpu_custom_call.1} parent=1 // pred_check_branch
      %2869 = sbr.rel (0) target = $region156
    $region155: #{tpu_custom_call.1} parent=1 // pred_region
      %s2871 = ssub.s32 32, 32
      %2872 = vsyncadd [#allocation5], %s2871
      %s2874 = sshll.u32 [#allocation23], 4
      %s2875 = int_to_ptr.vmem [resolvable:$true] %s2874
      %2877 = dma.vmem_to_hbm [thread:$0]  %s2875, 32, %s24, [#allocation5]
    $region156: #{tpu_custom_call.1} parent=1 // pred_fallthru
      _
    // Predicated region
    $region157: #{tpu_custom_call.1} parent=1 // pred_check
      _
    $region158: #{tpu_custom_call.1} parent=1 // pred_check_branch
      %2879 = sbr.rel (0) target = $region160
    $region159: #{tpu_custom_call.1} parent=1 // pred_region
      %2880 = dma.done [#allocation5], 32
    $region160: #{tpu_custom_call.1} parent=1 // pred_fallthru
      _
    %2881 = vsyncpa [#allocation4], 1
    %2882 = vsyncpa [#allocation7], 1
    %2883 = vsyncpa [#allocation10], 1
    %2884 = vsyncpa [#allocation13], 1
    %2885 = vsyncpa [#allocation16], 1
    %2886 = vsyncpa [#allocation19], 1
    %2887 = vsyncpa [#allocation22], 1
    %2888 = vsyncpa [#allocation5], 1

</llo_original>
